<compile_context>
chip_gen: v6e
topology: v6e:2x2x1
jax: 0.10.0
libtpu: 0.0.40
codegen_flags: <defaults>
</compile_context>

<pallas_src>
import functools

import jax
import jax.numpy as jnp
from jax.experimental import pallas as pl
from jax.experimental.pallas import tpu as pltpu

INPUT_SIZE = 784
HIDDEN_SIZE = 2056
OUTPUT_SIZE = 10
OUT_PAD = 128  # lane-dense output width; real logits are the first 10 columns


def mlp_kernel(x_ref, w1_ref, b1_ref, w2_ref, b2_ref, o_ref):
    # fc1 on the MXU: bf16 operands, f32 accumulation.
    h = jnp.dot(x_ref[...], w1_ref[...], preferred_element_type=jnp.float32)
    h = jnp.maximum(h + b1_ref[...], 0.0)  # bias + ReLU in f32 on the VPU
    # fc2: cast hidden activations to bf16 for the MXU, accumulate in f32.
    o = jnp.dot(h.astype(jnp.bfloat16), w2_ref[...],
                preferred_element_type=jnp.float32)
    o_ref[...] = (o + b2_ref[...]).astype(o_ref.dtype)


def _round_up(x, m):
    return (x + m - 1) // m * m


@functools.partial(jax.jit, static_argnames=("block_b",))
def mlp_forward(x_nchw, w1, b1, w2, b2, *, block_b=256):
    # Flatten exactly like torch's x.reshape(-1, input_size)
    x2d = x_nchw.reshape(-1, INPUT_SIZE)
    B = x2d.shape[0]

    # Batch tile: multiple of 8 (sublane), capped at block_b.
    tb = min(block_b, _round_up(B, 8))
    b_pad = _round_up(B, tb)

    # bf16 activations/weights -> halve HBM traffic on the dominant W1 read and
    # double MXU throughput; biases stay f32 (tiny).
    x_p = jnp.zeros((b_pad, INPUT_SIZE), jnp.bfloat16).at[:B].set(
        x2d.astype(jnp.bfloat16))
    w1_bf = w1.astype(jnp.bfloat16)
    w2_bf = jnp.zeros((HIDDEN_SIZE, OUT_PAD), jnp.bfloat16).at[
        :, :OUTPUT_SIZE].set(w2.astype(jnp.bfloat16))
    b1_f = b1.reshape(1, HIDDEN_SIZE).astype(jnp.float32)
    b2_f = jnp.zeros((1, OUT_PAD), jnp.float32).at[:, :OUTPUT_SIZE].set(
        b2.reshape(1, OUTPUT_SIZE).astype(jnp.float32))

    out = pl.pallas_call(
        mlp_kernel,
        out_shape=jax.ShapeDtypeStruct((b_pad, OUT_PAD), jnp.float32),
        grid_spec=pltpu.PrefetchScalarGridSpec(
            num_scalar_prefetch=0,
            grid=(b_pad // tb,),
            in_specs=[
                pl.BlockSpec((tb, INPUT_SIZE), lambda i: (i, 0)),           # x tile (pipelined)
                pl.BlockSpec((INPUT_SIZE, HIDDEN_SIZE), lambda i: (0, 0)),  # W1 resident
                pl.BlockSpec((1, HIDDEN_SIZE), lambda i: (0, 0)),           # b1 resident
                pl.BlockSpec((HIDDEN_SIZE, OUT_PAD), lambda i: (0, 0)),     # W2 resident
                pl.BlockSpec((1, OUT_PAD), lambda i: (0, 0)),               # b2 resident
            ],
            out_specs=pl.BlockSpec((tb, OUT_PAD), lambda i: (i, 0)),
        ),
        compiler_params=pltpu.CompilerParams(
            # Batch tiles are independent -> shard across both TCs on v7x.
            dimension_semantics=("parallel",),
            # Actual need ~16 MiB; keep well under v7x's 64 MiB physical VMEM.
            vmem_limit_bytes=32 << 20,
        ),
    )(x_p, w1_bf, b1_f, w2_bf, b2_f)

    # Drop batch padding and the lane padding of the output dimension.
    return out[:B, :OUTPUT_SIZE]


def init_params(key):
    # Deterministic init matching nn.Linear's default U(-1/sqrt(fan_in), 1/sqrt(fan_in)).
    # Weights stored as (in, out): x @ W here == x @ W.T in torch (W: (out, in)).
    k1, k2, k3, k4 = jax.random.split(key, 4)
    bound1 = 1.0 / (INPUT_SIZE ** 0.5)
    bound2 = 1.0 / (HIDDEN_SIZE ** 0.5)
    w1 = jax.random.uniform(k1, (INPUT_SIZE, HIDDEN_SIZE), jnp.float32, -bound1, bound1)
    b1 = jax.random.uniform(k2, (HIDDEN_SIZE,), jnp.float32, -bound1, bound1)
    w2 = jax.random.uniform(k3, (HIDDEN_SIZE, OUTPUT_SIZE), jnp.float32, -bound2, bound2)
    b2 = jax.random.uniform(k4, (OUTPUT_SIZE,), jnp.float32, -bound2, bound2)
    return w1, b1, w2, b2


def reference_forward(x_nchw, w1, b1, w2, b2):
    # Same math as the kernel (bf16 operands, f32 accumulation), pure JAX.
    x2d = x_nchw.reshape(-1, INPUT_SIZE).astype(jnp.bfloat16)
    h = jnp.dot(x2d, w1.astype(jnp.bfloat16), preferred_element_type=jnp.float32)
    h = jnp.maximum(h + b1.reshape(1, -1), 0.0)
    o = jnp.dot(h.astype(jnp.bfloat16), w2.astype(jnp.bfloat16),
                preferred_element_type=jnp.float32)
    return o + b2.reshape(1, -1)


if __name__ == "__main__":
    key = jax.random.PRNGKey(0)
    kx, kp = jax.random.split(key)

    # Small, module-consistent input: batch=2, NCHW (2, 1, 28, 28) -> 784 features
    x = jax.random.normal(kx, (2, 1, 28, 28), dtype=jnp.float32)
    w1, b1, w2, b2 = init_params(kp)

    out = mlp_forward(x, w1, b1, w2, b2)
    out = jax.block_until_ready(out)

    ref = reference_forward(x, w1, b1, w2, b2)
    assert out.shape == (2, OUTPUT_SIZE)
    assert jnp.allclose(out, ref, atol=1e-2, rtol=1e-2)

    print("KERNEL_OK")
</pallas_src>

<mosaic_0001>
module attributes {stable_mosaic.version = 11 : i64} {
  func.func @mlp_kernel(%arg0: i32, %arg1: memref<8x784xbf16, #tpu.memory_space<vmem>>, %arg2: memref<784x2056xbf16, #tpu.memory_space<vmem>>, %arg3: memref<1x2056xf32, #tpu.memory_space<vmem>>, %arg4: memref<2056x128xbf16, #tpu.memory_space<vmem>>, %arg5: memref<1x128xf32, #tpu.memory_space<vmem>>, %arg6: memref<8x128xf32, #tpu.memory_space<vmem>>) attributes {dimension_semantics = [#tpu.dimension_semantics<parallel>], iteration_bounds = array<i64: 1>, scalar_prefetch = 0 : i64, scratch_operands = 0 : i64, tpu.core_type = #tpu.core_type<tc>, window_params = [{transform_indices = @transform_0, window_bounds = array<i64: 8, 784>}, {pipeline_mode = #tpu.pipeline_mode<synchronous>, transform_indices = @transform_1, window_bounds = array<i64: 784, 2056>}, {pipeline_mode = #tpu.pipeline_mode<synchronous>, transform_indices = @transform_2, window_bounds = array<i64: 1, 2056>}, {pipeline_mode = #tpu.pipeline_mode<synchronous>, transform_indices = @transform_3, window_bounds = array<i64: 2056, 128>}, {pipeline_mode = #tpu.pipeline_mode<synchronous>, transform_indices = @transform_4, window_bounds = array<i64: 1, 128>}, {transform_indices = @transform_5, window_bounds = array<i64: 8, 128>}]} {
    %c0 = arith.constant 0 : index
    %c0_0 = arith.constant 0 : index
    %0 = vector.load %arg1[%c0, %c0_0] : memref<8x784xbf16, #tpu.memory_space<vmem>>, vector<8x784xbf16>
    %c0_1 = arith.constant 0 : index
    %c0_2 = arith.constant 0 : index
    %1 = vector.load %arg2[%c0_1, %c0_2] : memref<784x2056xbf16, #tpu.memory_space<vmem>>, vector<784x2056xbf16>
    %cst = arith.constant dense<0.000000e+00> : vector<8x2056xf32>
    %2 = tpu.matmul %0, %1, %cst {dimension_numbers = #tpu.dot_dimension_numbers<[1], [0], [0], [1], [0, 0, 1, 1], [], []>} : vector<8x784xbf16>, vector<784x2056xbf16>, vector<8x2056xf32> -> vector<8x2056xf32>
    %c0_3 = arith.constant 0 : index
    %c0_4 = arith.constant 0 : index
    %3 = vector.load %arg3[%c0_3, %c0_4] : memref<1x2056xf32, #tpu.memory_space<vmem>>, vector<1x2056xf32>
    %4 = vector.broadcast %3 : vector<1x2056xf32> to vector<8x2056xf32>
    %5 = arith.addf %2, %4 : vector<8x2056xf32>
    %cst_5 = arith.constant 0.000000e+00 : f32
    %6 = vector.broadcast %cst_5 : f32 to vector<8x2056xf32>
    %7 = arith.maximumf %5, %6 : vector<8x2056xf32>
    %8 = arith.truncf %7 : vector<8x2056xf32> to vector<8x2056xbf16>
    %c0_6 = arith.constant 0 : index
    %c0_7 = arith.constant 0 : index
    %9 = vector.load %arg4[%c0_6, %c0_7] : memref<2056x128xbf16, #tpu.memory_space<vmem>>, vector<2056x128xbf16>
    %cst_8 = arith.constant dense<0.000000e+00> : vector<8x128xf32>
    %10 = tpu.matmul %8, %9, %cst_8 {dimension_numbers = #tpu.dot_dimension_numbers<[1], [0], [0], [1], [0, 0, 1, 1], [], []>} : vector<8x2056xbf16>, vector<2056x128xbf16>, vector<8x128xf32> -> vector<8x128xf32>
    %c0_9 = arith.constant 0 : index
    %c0_10 = arith.constant 0 : index
    %11 = vector.load %arg5[%c0_9, %c0_10] : memref<1x128xf32, #tpu.memory_space<vmem>>, vector<1x128xf32>
    %12 = vector.broadcast %11 : vector<1x128xf32> to vector<8x128xf32>
    %13 = arith.addf %10, %12 : vector<8x128xf32>
    %c0_11 = arith.constant 0 : index
    %c0_12 = arith.constant 0 : index
    %14 = vector.load %arg6[%c0_11, %c0_12] : memref<8x128xf32, #tpu.memory_space<vmem>>, vector<8x128xf32>
    tpu.vector_store %arg6[%c0_11, %c0_12], %13 {strides = array<i32>} : memref<8x128xf32, #tpu.memory_space<vmem>>, vector<8x128xf32>,
    return
  }
  func.func @transform_0(%arg0: i32) -> (i32, i32) {
    %c0_i32 = arith.constant 0 : i32
    %c0_i32_0 = arith.constant 0 : i32
    return %arg0, %c0_i32 : i32, i32
  }
  func.func @transform_1(%arg0: i32) -> (i32, i32) {
    %c0_i32 = arith.constant 0 : i32
    %c0_i32_0 = arith.constant 0 : i32
    %c0_i32_1 = arith.constant 0 : i32
    return %c0_i32, %c0_i32_0 : i32, i32
  }
  func.func @transform_2(%arg0: i32) -> (i32, i32) {
    %c0_i32 = arith.constant 0 : i32
    %c0_i32_0 = arith.constant 0 : i32
    %c0_i32_1 = arith.constant 0 : i32
    return %c0_i32, %c0_i32_0 : i32, i32
  }
  func.func @transform_3(%arg0: i32) -> (i32, i32) {
    %c0_i32 = arith.constant 0 : i32
    %c0_i32_0 = arith.constant 0 : i32
    %c0_i32_1 = arith.constant 0 : i32
    return %c0_i32, %c0_i32_0 : i32, i32
  }
  func.func @transform_4(%arg0: i32) -> (i32, i32) {
    %c0_i32 = arith.constant 0 : i32
    %c0_i32_0 = arith.constant 0 : i32
    %c0_i32_1 = arith.constant 0 : i32
    return %c0_i32, %c0_i32_0 : i32, i32
  }
  func.func @transform_5(%arg0: i32) -> (i32, i32) {
    %c0_i32 = arith.constant 0 : i32
    %c0_i32_0 = arith.constant 0 : i32
    return %arg0, %c0_i32 : i32, i32
  }
}

</mosaic_0001>

<llo_original>
// kernel: mlp_forward.1
$region0: #{mlp_forward.1}
  #allocation0 [shape = 'u32[]', space=smem, size = 0x4, offset = 0x4, fixed_abs, tag = 'smem constant byte address 0x4 - core index']
  #allocation1 [shape = 'u32[144,128]{1,0:T(1,128)}', space=vmem, size = 0x12000, scoped, tag = 'internal scratch']
  %s0 = inlined_call_operand.vmem [shape: bf16[8,784], index: 0, kind: input, shape index: {}]
  %s1 = inlined_call_operand.vmem [shape: bf16[784,2056], index: 1, kind: input, shape index: {}]
  %s2 = inlined_call_operand.vmem [shape: f32[1,2056], index: 2, kind: input, shape index: {}]
  %s3 = inlined_call_operand.vmem [shape: bf16[2056,128], index: 3, kind: input, shape index: {}]
  %s4 = inlined_call_operand.vmem [shape: f32[1,128], index: 4, kind: input, shape index: {}]
  %s5 = inlined_call_operand.vmem [shape: f32[8,128], index: 5, kind: output, shape index: {}]
  %s6 = sld [smem:[#allocation0]]
  $region30: #{mlp_forward.1} parent=0
    _
  %s8 = ssub.s32 1, %s6
  %s9 = scalar_select 0, %s8, %s6
  // Predicated region
  $region2: #{mlp_forward.1} parent=0 // pred_check
    _
  $region3: #{mlp_forward.1} parent=0 // pred_check_branch
    %11 = sbr.rel (0) target = $region5
  $region4: #{mlp_forward.1} parent=0 // pred_region
    _
  $region5: #{mlp_forward.1} parent=0 // pred_fallthru
    _
  // Predicated region
  $region6: #{mlp_forward.1} parent=0 // pred_check
    _
  $region7: #{mlp_forward.1} parent=0 // pred_check_branch
    %13 = sbr.rel (0) target = $region9
  $region8: #{mlp_forward.1} parent=0 // pred_region
    _
  $region9: #{mlp_forward.1} parent=0 // pred_fallthru
    _
  // Predicated region
  $region10: #{mlp_forward.1} parent=0 // pred_check
    _
  $region11: #{mlp_forward.1} parent=0 // pred_check_branch
    %15 = sbr.rel (0) target = $region13
  $region12: #{mlp_forward.1} parent=0 // pred_region
    _
  $region13: #{mlp_forward.1} parent=0 // pred_fallthru
    _
  // Predicated region
  $region14: #{mlp_forward.1} parent=0 // pred_check
    _
  $region15: #{mlp_forward.1} parent=0 // pred_check_branch
    %17 = sbr.rel (0) target = $region17
  $region16: #{mlp_forward.1} parent=0 // pred_region
    _
  $region17: #{mlp_forward.1} parent=0 // pred_fallthru
    _
  // Predicated region
  $region18: #{mlp_forward.1} parent=0 // pred_check
    _
  $region19: #{mlp_forward.1} parent=0 // pred_check_branch
    %19 = sbr.rel (0) target = $region21
  $region20: #{mlp_forward.1} parent=0 // pred_region
    _
  $region21: #{mlp_forward.1} parent=0 // pred_fallthru
    _
  %v21 = vld [vmem:[%s0] sm:$0xff]
  %v22 = vld [vmem:[%s0 + $0x8] sm:$0xff]
  %v23 = vld [vmem:[%s0 + $0x10] sm:$0xff]
  %v24 = vld [vmem:[%s0 + $0x18] sm:$0xf]
  %v25 = vld [vmem:[%s1] sm:$0xff]
  %v26 = vld [vmem:[%s1 + $0x8] sm:$0xff]
  %v27 = vld [vmem:[%s1 + $0x10] sm:$0xff]
  %v28 = vld [vmem:[%s1 + $0x18] sm:$0xff]
  %v29 = vld [vmem:[%s1 + $0x20] sm:$0xff]
  %v30 = vld [vmem:[%s1 + $0x28] sm:$0xff]
  %v31 = vld [vmem:[%s1 + $0x30] sm:$0xff]
  %v32 = vld [vmem:[%s1 + $0x38] sm:$0xff]
  %v33 = vld [vmem:[%s1 + $0x40] sm:$0xf]
  %v34 = vld [vmem:[%s1 + $0x44] sm:$0xff]
  %v35 = vld [vmem:[%s1 + $0x4c] sm:$0xff]
  %v36 = vld [vmem:[%s1 + $0x54] sm:$0xff]
  %v37 = vld [vmem:[%s1 + $0x5c] sm:$0xff]
  %v38 = vld [vmem:[%s1 + $0x64] sm:$0xff]
  %v39 = vld [vmem:[%s1 + $0x6c] sm:$0xff]
  %v40 = vld [vmem:[%s1 + $0x74] sm:$0xff]
  %v41 = vld [vmem:[%s1 + $0x7c] sm:$0xff]
  %v42 = vld [vmem:[%s1 + $0x84] sm:$0xf]
  %v43 = vld [vmem:[%s1 + $0x88] sm:$0xff]
  %v44 = vld [vmem:[%s1 + $0x90] sm:$0xff]
  %v45 = vld [vmem:[%s1 + $0x98] sm:$0xff]
  %v46 = vld [vmem:[%s1 + $0xa0] sm:$0xff]
  %v47 = vld [vmem:[%s1 + $0xa8] sm:$0xff]
  %v48 = vld [vmem:[%s1 + $0xb0] sm:$0xff]
  %v49 = vld [vmem:[%s1 + $0xb8] sm:$0xff]
  %v50 = vld [vmem:[%s1 + $0xc0] sm:$0xff]
  %v51 = vld [vmem:[%s1 + $0xc8] sm:$0xf]
  %v52 = vld [vmem:[%s1 + $0xcc] sm:$0xff]
  %v53 = vld [vmem:[%s1 + $0xd4] sm:$0xff]
  %v54 = vld [vmem:[%s1 + $0xdc] sm:$0xff]
  %v55 = vld [vmem:[%s1 + $0xe4] sm:$0xff]
  %v56 = vld [vmem:[%s1 + $0xec] sm:$0xff]
  %v57 = vld [vmem:[%s1 + $0xf4] sm:$0xff]
  %v58 = vld [vmem:[%s1 + $0xfc] sm:$0xff]
  %v59 = vld [vmem:[%s1 + $0x104] sm:$0xff]
  %v60 = vld [vmem:[%s1 + $0x10c] sm:$0xf]
  %v61 = vld [vmem:[%s1 + $0x110] sm:$0xff]
  %v62 = vld [vmem:[%s1 + $0x118] sm:$0xff]
  %v63 = vld [vmem:[%s1 + $0x120] sm:$0xff]
  %v64 = vld [vmem:[%s1 + $0x128] sm:$0xff]
  %v65 = vld [vmem:[%s1 + $0x130] sm:$0xff]
  %v66 = vld [vmem:[%s1 + $0x138] sm:$0xff]
  %v67 = vld [vmem:[%s1 + $0x140] sm:$0xff]
  %v68 = vld [vmem:[%s1 + $0x148] sm:$0xff]
  %v69 = vld [vmem:[%s1 + $0x150] sm:$0xf]
  %v70 = vld [vmem:[%s1 + $0x154] sm:$0xff]
  %v71 = vld [vmem:[%s1 + $0x15c] sm:$0xff]
  %v72 = vld [vmem:[%s1 + $0x164] sm:$0xff]
  %v73 = vld [vmem:[%s1 + $0x16c] sm:$0xff]
  %v74 = vld [vmem:[%s1 + $0x174] sm:$0xff]
  %v75 = vld [vmem:[%s1 + $0x17c] sm:$0xff]
  %v76 = vld [vmem:[%s1 + $0x184] sm:$0xff]
  %v77 = vld [vmem:[%s1 + $0x18c] sm:$0xff]
  %v78 = vld [vmem:[%s1 + $0x194] sm:$0xf]
  %v79 = vld [vmem:[%s1 + $0x198] sm:$0xff]
  %v80 = vld [vmem:[%s1 + $0x1a0] sm:$0xff]
  %v81 = vld [vmem:[%s1 + $0x1a8] sm:$0xff]
  %v82 = vld [vmem:[%s1 + $0x1b0] sm:$0xff]
  %v83 = vld [vmem:[%s1 + $0x1b8] sm:$0xff]
  %v84 = vld [vmem:[%s1 + $0x1c0] sm:$0xff]
  %v85 = vld [vmem:[%s1 + $0x1c8] sm:$0xff]
  %v86 = vld [vmem:[%s1 + $0x1d0] sm:$0xff]
  %v87 = vld [vmem:[%s1 + $0x1d8] sm:$0xf]
  %v88 = vld [vmem:[%s1 + $0x1dc] sm:$0xff]
  %v89 = vld [vmem:[%s1 + $0x1e4] sm:$0xff]
  %v90 = vld [vmem:[%s1 + $0x1ec] sm:$0xff]
  %v91 = vld [vmem:[%s1 + $0x1f4] sm:$0xff]
  %v92 = vld [vmem:[%s1 + $0x1fc] sm:$0xff]
  %v93 = vld [vmem:[%s1 + $0x204] sm:$0xff]
  %v94 = vld [vmem:[%s1 + $0x20c] sm:$0xff]
  %v95 = vld [vmem:[%s1 + $0x214] sm:$0xff]
  %v96 = vld [vmem:[%s1 + $0x21c] sm:$0xf]
  %v97 = vld [vmem:[%s1 + $0x220] sm:$0xff]
  %v98 = vld [vmem:[%s1 + $0x228] sm:$0xff]
  %v99 = vld [vmem:[%s1 + $0x230] sm:$0xff]
  %v100 = vld [vmem:[%s1 + $0x238] sm:$0xff]
  %v101 = vld [vmem:[%s1 + $0x240] sm:$0xff]
  %v102 = vld [vmem:[%s1 + $0x248] sm:$0xff]
  %v103 = vld [vmem:[%s1 + $0x250] sm:$0xff]
  %v104 = vld [vmem:[%s1 + $0x258] sm:$0xff]
  %v105 = vld [vmem:[%s1 + $0x260] sm:$0xf]
  %v106 = vld [vmem:[%s1 + $0x264] sm:$0xff]
  %v107 = vld [vmem:[%s1 + $0x26c] sm:$0xff]
  %v108 = vld [vmem:[%s1 + $0x274] sm:$0xff]
  %v109 = vld [vmem:[%s1 + $0x27c] sm:$0xff]
  %v110 = vld [vmem:[%s1 + $0x284] sm:$0xff]
  %v111 = vld [vmem:[%s1 + $0x28c] sm:$0xff]
  %v112 = vld [vmem:[%s1 + $0x294] sm:$0xff]
  %v113 = vld [vmem:[%s1 + $0x29c] sm:$0xff]
  %v114 = vld [vmem:[%s1 + $0x2a4] sm:$0xf]
  %v115 = vld [vmem:[%s1 + $0x2a8] sm:$0xff]
  %v116 = vld [vmem:[%s1 + $0x2b0] sm:$0xff]
  %v117 = vld [vmem:[%s1 + $0x2b8] sm:$0xff]
  %v118 = vld [vmem:[%s1 + $0x2c0] sm:$0xff]
  %v119 = vld [vmem:[%s1 + $0x2c8] sm:$0xff]
  %v120 = vld [vmem:[%s1 + $0x2d0] sm:$0xff]
  %v121 = vld [vmem:[%s1 + $0x2d8] sm:$0xff]
  %v122 = vld [vmem:[%s1 + $0x2e0] sm:$0xff]
  %v123 = vld [vmem:[%s1 + $0x2e8] sm:$0xf]
  %v124 = vld [vmem:[%s1 + $0x2ec] sm:$0xff]
  %v125 = vld [vmem:[%s1 + $0x2f4] sm:$0xff]
  %v126 = vld [vmem:[%s1 + $0x2fc] sm:$0xff]
  %v127 = vld [vmem:[%s1 + $0x304] sm:$0xff]
  %v128 = vld [vmem:[%s1 + $0x30c] sm:$0xff]
  %v129 = vld [vmem:[%s1 + $0x314] sm:$0xff]
  %v130 = vld [vmem:[%s1 + $0x31c] sm:$0xff]
  %v131 = vld [vmem:[%s1 + $0x324] sm:$0xff]
  %v132 = vld [vmem:[%s1 + $0x32c] sm:$0xf]
  %v133 = vld [vmem:[%s1 + $0x330] sm:$0xff]
  %v134 = vld [vmem:[%s1 + $0x338] sm:$0xff]
  %v135 = vld [vmem:[%s1 + $0x340] sm:$0xff]
  %v136 = vld [vmem:[%s1 + $0x348] sm:$0xff]
  %v137 = vld [vmem:[%s1 + $0x350] sm:$0xff]
  %v138 = vld [vmem:[%s1 + $0x358] sm:$0xff]
  %v139 = vld [vmem:[%s1 + $0x360] sm:$0xff]
  %v140 = vld [vmem:[%s1 + $0x368] sm:$0xff]
  %v141 = vld [vmem:[%s1 + $0x370] sm:$0xf]
  %v142 = vld [vmem:[%s1 + $0x374] sm:$0xff]
  %v143 = vld [vmem:[%s1 + $0x37c] sm:$0xff]
  %v144 = vld [vmem:[%s1 + $0x384] sm:$0xff]
  %v145 = vld [vmem:[%s1 + $0x38c] sm:$0xff]
  %v146 = vld [vmem:[%s1 + $0x394] sm:$0xff]
  %v147 = vld [vmem:[%s1 + $0x39c] sm:$0xff]
  %v148 = vld [vmem:[%s1 + $0x3a4] sm:$0xff]
  %v149 = vld [vmem:[%s1 + $0x3ac] sm:$0xff]
  %v150 = vld [vmem:[%s1 + $0x3b4] sm:$0xf]
  %v151 = vld [vmem:[%s1 + $0x3b8] sm:$0xff]
  %v152 = vld [vmem:[%s1 + $0x3c0] sm:$0xff]
  %v153 = vld [vmem:[%s1 + $0x3c8] sm:$0xff]
  %v154 = vld [vmem:[%s1 + $0x3d0] sm:$0xff]
  %v155 = vld [vmem:[%s1 + $0x3d8] sm:$0xff]
  %v156 = vld [vmem:[%s1 + $0x3e0] sm:$0xff]
  %v157 = vld [vmem:[%s1 + $0x3e8] sm:$0xff]
  %v158 = vld [vmem:[%s1 + $0x3f0] sm:$0xff]
  %v159 = vld [vmem:[%s1 + $0x3f8] sm:$0xf]
  %v160 = vld [vmem:[%s1 + $0x3fc] sm:$0xff]
  %v161 = vld [vmem:[%s1 + $0x404] sm:$0xff]
  %v162 = vld [vmem:[%s1 + $0x40c] sm:$0xff]
  %v163 = vld [vmem:[%s1 + $0x414] sm:$0xff]
  %v164 = vld [vmem:[%s1 + $0x41c] sm:$0xff]
  %v165 = vld [vmem:[%s1 + $0x424] sm:$0xff]
  %v166 = vld [vmem:[%s1 + $0x42c] sm:$0xff]
  %v167 = vld [vmem:[%s1 + $0x434] sm:$0xff]
  %v168 = vld [vmem:[%s1 + $0x43c] sm:$0xf]
  %v169 = vld [vmem:[%s1 + $0x440] sm:$0xff]
  %v170 = vld [vmem:[%s1 + $0x448] sm:$0xff]
  %v171 = vld [vmem:[%s1 + $0x450] sm:$0xff]
  %v172 = vld [vmem:[%s1 + $0x458] sm:$0xff]
  %v173 = vld [vmem:[%s1 + $0x460] sm:$0xff]
  %v174 = vld [vmem:[%s1 + $0x468] sm:$0xff]
  %v175 = vld [vmem:[%s1 + $0x470] sm:$0xff]
  %v176 = vld [vmem:[%s1 + $0x478] sm:$0xff]
  %v177 = vld [vmem:[%s1 + $0x480] sm:$0xf]
  %v178 = vld [vmem:[%s1 + $0x484] sm:$0xff]
  %v179 = vld [vmem:[%s1 + $0x48c] sm:$0xff]
  %v180 = vld [vmem:[%s1 + $0x494] sm:$0xff]
  %v181 = vld [vmem:[%s1 + $0x49c] sm:$0xff]
  %v182 = vld [vmem:[%s1 + $0x4a4] sm:$0xff]
  %v183 = vld [vmem:[%s1 + $0x4ac] sm:$0xff]
  %v184 = vld [vmem:[%s1 + $0x4b4] sm:$0xff]
  %v185 = vld [vmem:[%s1 + $0x4bc] sm:$0xff]
  %v186 = vld [vmem:[%s1 + $0x4c4] sm:$0xf]
  %v187 = vld [vmem:[%s1 + $0x4c8] sm:$0xff]
  %v188 = vld [vmem:[%s1 + $0x4d0] sm:$0xff]
  %v189 = vld [vmem:[%s1 + $0x4d8] sm:$0xff]
  %v190 = vld [vmem:[%s1 + $0x4e0] sm:$0xff]
  %v191 = vld [vmem:[%s1 + $0x4e8] sm:$0xff]
  %v192 = vld [vmem:[%s1 + $0x4f0] sm:$0xff]
  %v193 = vld [vmem:[%s1 + $0x4f8] sm:$0xff]
  %v194 = vld [vmem:[%s1 + $0x500] sm:$0xff]
  %v195 = vld [vmem:[%s1 + $0x508] sm:$0xf]
  %v196 = vld [vmem:[%s1 + $0x50c] sm:$0xff]
  %v197 = vld [vmem:[%s1 + $0x514] sm:$0xff]
  %v198 = vld [vmem:[%s1 + $0x51c] sm:$0xff]
  %v199 = vld [vmem:[%s1 + $0x524] sm:$0xff]
  %v200 = vld [vmem:[%s1 + $0x52c] sm:$0xff]
  %v201 = vld [vmem:[%s1 + $0x534] sm:$0xff]
  %v202 = vld [vmem:[%s1 + $0x53c] sm:$0xff]
  %v203 = vld [vmem:[%s1 + $0x544] sm:$0xff]
  %v204 = vld [vmem:[%s1 + $0x54c] sm:$0xf]
  %v205 = vld [vmem:[%s1 + $0x550] sm:$0xff]
  %v206 = vld [vmem:[%s1 + $0x558] sm:$0xff]
  %v207 = vld [vmem:[%s1 + $0x560] sm:$0xff]
  %v208 = vld [vmem:[%s1 + $0x568] sm:$0xff]
  %v209 = vld [vmem:[%s1 + $0x570] sm:$0xff]
  %v210 = vld [vmem:[%s1 + $0x578] sm:$0xff]
  %v211 = vld [vmem:[%s1 + $0x580] sm:$0xff]
  %v212 = vld [vmem:[%s1 + $0x588] sm:$0xff]
  %v213 = vld [vmem:[%s1 + $0x590] sm:$0xf]
  %v214 = vld [vmem:[%s1 + $0x594] sm:$0xff]
  %v215 = vld [vmem:[%s1 + $0x59c] sm:$0xff]
  %v216 = vld [vmem:[%s1 + $0x5a4] sm:$0xff]
  %v217 = vld [vmem:[%s1 + $0x5ac] sm:$0xff]
  %v218 = vld [vmem:[%s1 + $0x5b4] sm:$0xff]
  %v219 = vld [vmem:[%s1 + $0x5bc] sm:$0xff]
  %v220 = vld [vmem:[%s1 + $0x5c4] sm:$0xff]
  %v221 = vld [vmem:[%s1 + $0x5cc] sm:$0xff]
  %v222 = vld [vmem:[%s1 + $0x5d4] sm:$0xf]
  %v223 = vld [vmem:[%s1 + $0x5d8] sm:$0xff]
  %v224 = vld [vmem:[%s1 + $0x5e0] sm:$0xff]
  %v225 = vld [vmem:[%s1 + $0x5e8] sm:$0xff]
  %v226 = vld [vmem:[%s1 + $0x5f0] sm:$0xff]
  %v227 = vld [vmem:[%s1 + $0x5f8] sm:$0xff]
  %v228 = vld [vmem:[%s1 + $0x600] sm:$0xff]
  %v229 = vld [vmem:[%s1 + $0x608] sm:$0xff]
  %v230 = vld [vmem:[%s1 + $0x610] sm:$0xff]
  %v231 = vld [vmem:[%s1 + $0x618] sm:$0xf]
  %v232 = vld [vmem:[%s1 + $0x61c] sm:$0xff]
  %v233 = vld [vmem:[%s1 + $0x624] sm:$0xff]
  %v234 = vld [vmem:[%s1 + $0x62c] sm:$0xff]
  %v235 = vld [vmem:[%s1 + $0x634] sm:$0xff]
  %v236 = vld [vmem:[%s1 + $0x63c] sm:$0xff]
  %v237 = vld [vmem:[%s1 + $0x644] sm:$0xff]
  %v238 = vld [vmem:[%s1 + $0x64c] sm:$0xff]
  %v239 = vld [vmem:[%s1 + $0x654] sm:$0xff]
  %v240 = vld [vmem:[%s1 + $0x65c] sm:$0xf]
  %v241 = vld [vmem:[%s1 + $0x660] sm:$0xff]
  %v242 = vld [vmem:[%s1 + $0x668] sm:$0xff]
  %v243 = vld [vmem:[%s1 + $0x670] sm:$0xff]
  %v244 = vld [vmem:[%s1 + $0x678] sm:$0xff]
  %v245 = vld [vmem:[%s1 + $0x680] sm:$0xff]
  %v246 = vld [vmem:[%s1 + $0x688] sm:$0xff]
  %v247 = vld [vmem:[%s1 + $0x690] sm:$0xff]
  %v248 = vld [vmem:[%s1 + $0x698] sm:$0xff]
  %v249 = vld [vmem:[%s1 + $0x6a0] sm:$0xf]
  %v250 = vld [vmem:[%s1 + $0x6a4] sm:$0xff]
  %v251 = vld [vmem:[%s1 + $0x6ac] sm:$0xff]
  %v252 = vld [vmem:[%s1 + $0x6b4] sm:$0xff]
  %v253 = vld [vmem:[%s1 + $0x6bc] sm:$0xff]
  %v254 = vld [vmem:[%s1 + $0x6c4] sm:$0xff]
  %v255 = vld [vmem:[%s1 + $0x6cc] sm:$0xff]
  %v256 = vld [vmem:[%s1 + $0x6d4] sm:$0xff]
  %v257 = vld [vmem:[%s1 + $0x6dc] sm:$0xff]
  %v258 = vld [vmem:[%s1 + $0x6e4] sm:$0xf]
  %v259 = vld [vmem:[%s1 + $0x6e8] sm:$0xff]
  %v260 = vld [vmem:[%s1 + $0x6f0] sm:$0xff]
  %v261 = vld [vmem:[%s1 + $0x6f8] sm:$0xff]
  %v262 = vld [vmem:[%s1 + $0x700] sm:$0xff]
  %v263 = vld [vmem:[%s1 + $0x708] sm:$0xff]
  %v264 = vld [vmem:[%s1 + $0x710] sm:$0xff]
  %v265 = vld [vmem:[%s1 + $0x718] sm:$0xff]
  %v266 = vld [vmem:[%s1 + $0x720] sm:$0xff]
  %v267 = vld [vmem:[%s1 + $0x728] sm:$0xf]
  %v268 = vld [vmem:[%s1 + $0x72c] sm:$0xff]
  %v269 = vld [vmem:[%s1 + $0x734] sm:$0xff]
  %v270 = vld [vmem:[%s1 + $0x73c] sm:$0xff]
  %v271 = vld [vmem:[%s1 + $0x744] sm:$0xff]
  %v272 = vld [vmem:[%s1 + $0x74c] sm:$0xff]
  %v273 = vld [vmem:[%s1 + $0x754] sm:$0xff]
  %v274 = vld [vmem:[%s1 + $0x75c] sm:$0xff]
  %v275 = vld [vmem:[%s1 + $0x764] sm:$0xff]
  %v276 = vld [vmem:[%s1 + $0x76c] sm:$0xf]
  %v277 = vld [vmem:[%s1 + $0x770] sm:$0xff]
  %v278 = vld [vmem:[%s1 + $0x778] sm:$0xff]
  %v279 = vld [vmem:[%s1 + $0x780] sm:$0xff]
  %v280 = vld [vmem:[%s1 + $0x788] sm:$0xff]
  %v281 = vld [vmem:[%s1 + $0x790] sm:$0xff]
  %v282 = vld [vmem:[%s1 + $0x798] sm:$0xff]
  %v283 = vld [vmem:[%s1 + $0x7a0] sm:$0xff]
  %v284 = vld [vmem:[%s1 + $0x7a8] sm:$0xff]
  %v285 = vld [vmem:[%s1 + $0x7b0] sm:$0xf]
  %v286 = vld [vmem:[%s1 + $0x7b4] sm:$0xff]
  %v287 = vld [vmem:[%s1 + $0x7bc] sm:$0xff]
  %v288 = vld [vmem:[%s1 + $0x7c4] sm:$0xff]
  %v289 = vld [vmem:[%s1 + $0x7cc] sm:$0xff]
  %v290 = vld [vmem:[%s1 + $0x7d4] sm:$0xff]
  %v291 = vld [vmem:[%s1 + $0x7dc] sm:$0xff]
  %v292 = vld [vmem:[%s1 + $0x7e4] sm:$0xff]
  %v293 = vld [vmem:[%s1 + $0x7ec] sm:$0xff]
  %v294 = vld [vmem:[%s1 + $0x7f4] sm:$0xf]
  %v295 = vld [vmem:[%s1 + $0x7f8] sm:$0xff]
  %v296 = vld [vmem:[%s1 + $0x800] sm:$0xff]
  %v297 = vld [vmem:[%s1 + $0x808] sm:$0xff]
  %v298 = vld [vmem:[%s1 + $0x810] sm:$0xff]
  %v299 = vld [vmem:[%s1 + $0x818] sm:$0xff]
  %v300 = vld [vmem:[%s1 + $0x820] sm:$0xff]
  %v301 = vld [vmem:[%s1 + $0x828] sm:$0xff]
  %v302 = vld [vmem:[%s1 + $0x830] sm:$0xff]
  %v303 = vld [vmem:[%s1 + $0x838] sm:$0xf]
  %v304 = vld [vmem:[%s1 + $0x83c] sm:$0xff]
  %v305 = vld [vmem:[%s1 + $0x844] sm:$0xff]
  %v306 = vld [vmem:[%s1 + $0x84c] sm:$0xff]
  %v307 = vld [vmem:[%s1 + $0x854] sm:$0xff]
  %v308 = vld [vmem:[%s1 + $0x85c] sm:$0xff]
  %v309 = vld [vmem:[%s1 + $0x864] sm:$0xff]
  %v310 = vld [vmem:[%s1 + $0x86c] sm:$0xff]
  %v311 = vld [vmem:[%s1 + $0x874] sm:$0xff]
  %v312 = vld [vmem:[%s1 + $0x87c] sm:$0xf]
  %v313 = vld [vmem:[%s1 + $0x880] sm:$0xff]
  %v314 = vld [vmem:[%s1 + $0x888] sm:$0xff]
  %v315 = vld [vmem:[%s1 + $0x890] sm:$0xff]
  %v316 = vld [vmem:[%s1 + $0x898] sm:$0xff]
  %v317 = vld [vmem:[%s1 + $0x8a0] sm:$0xff]
  %v318 = vld [vmem:[%s1 + $0x8a8] sm:$0xff]
  %v319 = vld [vmem:[%s1 + $0x8b0] sm:$0xff]
  %v320 = vld [vmem:[%s1 + $0x8b8] sm:$0xff]
  %v321 = vld [vmem:[%s1 + $0x8c0] sm:$0xf]
  %v322 = vld [vmem:[%s1 + $0x8c4] sm:$0xff]
  %v323 = vld [vmem:[%s1 + $0x8cc] sm:$0xff]
  %v324 = vld [vmem:[%s1 + $0x8d4] sm:$0xff]
  %v325 = vld [vmem:[%s1 + $0x8dc] sm:$0xff]
  %v326 = vld [vmem:[%s1 + $0x8e4] sm:$0xff]
  %v327 = vld [vmem:[%s1 + $0x8ec] sm:$0xff]
  %v328 = vld [vmem:[%s1 + $0x8f4] sm:$0xff]
  %v329 = vld [vmem:[%s1 + $0x8fc] sm:$0xff]
  %v330 = vld [vmem:[%s1 + $0x904] sm:$0xf]
  %v331 = vld [vmem:[%s1 + $0x908] sm:$0xff]
  %v332 = vld [vmem:[%s1 + $0x910] sm:$0xff]
  %v333 = vld [vmem:[%s1 + $0x918] sm:$0xff]
  %v334 = vld [vmem:[%s1 + $0x920] sm:$0xff]
  %v335 = vld [vmem:[%s1 + $0x928] sm:$0xff]
  %v336 = vld [vmem:[%s1 + $0x930] sm:$0xff]
  %v337 = vld [vmem:[%s1 + $0x938] sm:$0xff]
  %v338 = vld [vmem:[%s1 + $0x940] sm:$0xff]
  %v339 = vld [vmem:[%s1 + $0x948] sm:$0xf]
  %v340 = vld [vmem:[%s1 + $0x94c] sm:$0xff]
  %v341 = vld [vmem:[%s1 + $0x954] sm:$0xff]
  %v342 = vld [vmem:[%s1 + $0x95c] sm:$0xff]
  %v343 = vld [vmem:[%s1 + $0x964] sm:$0xff]
  %v344 = vld [vmem:[%s1 + $0x96c] sm:$0xff]
  %v345 = vld [vmem:[%s1 + $0x974] sm:$0xff]
  %v346 = vld [vmem:[%s1 + $0x97c] sm:$0xff]
  %v347 = vld [vmem:[%s1 + $0x984] sm:$0xff]
  %v348 = vld [vmem:[%s1 + $0x98c] sm:$0xf]
  %v349 = vld [vmem:[%s1 + $0x990] sm:$0xff]
  %v350 = vld [vmem:[%s1 + $0x998] sm:$0xff]
  %v351 = vld [vmem:[%s1 + $0x9a0] sm:$0xff]
  %v352 = vld [vmem:[%s1 + $0x9a8] sm:$0xff]
  %v353 = vld [vmem:[%s1 + $0x9b0] sm:$0xff]
  %v354 = vld [vmem:[%s1 + $0x9b8] sm:$0xff]
  %v355 = vld [vmem:[%s1 + $0x9c0] sm:$0xff]
  %v356 = vld [vmem:[%s1 + $0x9c8] sm:$0xff]
  %v357 = vld [vmem:[%s1 + $0x9d0] sm:$0xf]
  %v358 = vld [vmem:[%s1 + $0x9d4] sm:$0xff]
  %v359 = vld [vmem:[%s1 + $0x9dc] sm:$0xff]
  %v360 = vld [vmem:[%s1 + $0x9e4] sm:$0xff]
  %v361 = vld [vmem:[%s1 + $0x9ec] sm:$0xff]
  %v362 = vld [vmem:[%s1 + $0x9f4] sm:$0xff]
  %v363 = vld [vmem:[%s1 + $0x9fc] sm:$0xff]
  %v364 = vld [vmem:[%s1 + $0xa04] sm:$0xff]
  %v365 = vld [vmem:[%s1 + $0xa0c] sm:$0xff]
  %v366 = vld [vmem:[%s1 + $0xa14] sm:$0xf]
  %v367 = vld [vmem:[%s1 + $0xa18] sm:$0xff]
  %v368 = vld [vmem:[%s1 + $0xa20] sm:$0xff]
  %v369 = vld [vmem:[%s1 + $0xa28] sm:$0xff]
  %v370 = vld [vmem:[%s1 + $0xa30] sm:$0xff]
  %v371 = vld [vmem:[%s1 + $0xa38] sm:$0xff]
  %v372 = vld [vmem:[%s1 + $0xa40] sm:$0xff]
  %v373 = vld [vmem:[%s1 + $0xa48] sm:$0xff]
  %v374 = vld [vmem:[%s1 + $0xa50] sm:$0xff]
  %v375 = vld [vmem:[%s1 + $0xa58] sm:$0xf]
  %v376 = vld [vmem:[%s1 + $0xa5c] sm:$0xff]
  %v377 = vld [vmem:[%s1 + $0xa64] sm:$0xff]
  %v378 = vld [vmem:[%s1 + $0xa6c] sm:$0xff]
  %v379 = vld [vmem:[%s1 + $0xa74] sm:$0xff]
  %v380 = vld [vmem:[%s1 + $0xa7c] sm:$0xff]
  %v381 = vld [vmem:[%s1 + $0xa84] sm:$0xff]
  %v382 = vld [vmem:[%s1 + $0xa8c] sm:$0xff]
  %v383 = vld [vmem:[%s1 + $0xa94] sm:$0xff]
  %v384 = vld [vmem:[%s1 + $0xa9c] sm:$0xf]
  %v385 = vld [vmem:[%s1 + $0xaa0] sm:$0xff]
  %v386 = vld [vmem:[%s1 + $0xaa8] sm:$0xff]
  %v387 = vld [vmem:[%s1 + $0xab0] sm:$0xff]
  %v388 = vld [vmem:[%s1 + $0xab8] sm:$0xff]
  %v389 = vld [vmem:[%s1 + $0xac0] sm:$0xff]
  %v390 = vld [vmem:[%s1 + $0xac8] sm:$0xff]
  %v391 = vld [vmem:[%s1 + $0xad0] sm:$0xff]
  %v392 = vld [vmem:[%s1 + $0xad8] sm:$0xff]
  %v393 = vld [vmem:[%s1 + $0xae0] sm:$0xf]
  %v394 = vld [vmem:[%s1 + $0xae4] sm:$0xff]
  %v395 = vld [vmem:[%s1 + $0xaec] sm:$0xff]
  %v396 = vld [vmem:[%s1 + $0xaf4] sm:$0xff]
  %v397 = vld [vmem:[%s1 + $0xafc] sm:$0xff]
  %v398 = vld [vmem:[%s1 + $0xb04] sm:$0xff]
  %v399 = vld [vmem:[%s1 + $0xb0c] sm:$0xff]
  %v400 = vld [vmem:[%s1 + $0xb14] sm:$0xff]
  %v401 = vld [vmem:[%s1 + $0xb1c] sm:$0xff]
  %v402 = vld [vmem:[%s1 + $0xb24] sm:$0xf]
  %v403 = vld [vmem:[%s1 + $0xb28] sm:$0xff]
  %v404 = vld [vmem:[%s1 + $0xb30] sm:$0xff]
  %v405 = vld [vmem:[%s1 + $0xb38] sm:$0xff]
  %v406 = vld [vmem:[%s1 + $0xb40] sm:$0xff]
  %v407 = vld [vmem:[%s1 + $0xb48] sm:$0xff]
  %v408 = vld [vmem:[%s1 + $0xb50] sm:$0xff]
  %v409 = vld [vmem:[%s1 + $0xb58] sm:$0xff]
  %v410 = vld [vmem:[%s1 + $0xb60] sm:$0xff]
  %v411 = vld [vmem:[%s1 + $0xb68] sm:$0xf]
  %v412 = vld [vmem:[%s1 + $0xb6c] sm:$0xff]
  %v413 = vld [vmem:[%s1 + $0xb74] sm:$0xff]
  %v414 = vld [vmem:[%s1 + $0xb7c] sm:$0xff]
  %v415 = vld [vmem:[%s1 + $0xb84] sm:$0xff]
  %v416 = vld [vmem:[%s1 + $0xb8c] sm:$0xff]
  %v417 = vld [vmem:[%s1 + $0xb94] sm:$0xff]
  %v418 = vld [vmem:[%s1 + $0xb9c] sm:$0xff]
  %v419 = vld [vmem:[%s1 + $0xba4] sm:$0xff]
  %v420 = vld [vmem:[%s1 + $0xbac] sm:$0xf]
  %v421 = vld [vmem:[%s1 + $0xbb0] sm:$0xff]
  %v422 = vld [vmem:[%s1 + $0xbb8] sm:$0xff]
  %v423 = vld [vmem:[%s1 + $0xbc0] sm:$0xff]
  %v424 = vld [vmem:[%s1 + $0xbc8] sm:$0xff]
  %v425 = vld [vmem:[%s1 + $0xbd0] sm:$0xff]
  %v426 = vld [vmem:[%s1 + $0xbd8] sm:$0xff]
  %v427 = vld [vmem:[%s1 + $0xbe0] sm:$0xff]
  %v428 = vld [vmem:[%s1 + $0xbe8] sm:$0xff]
  %v429 = vld [vmem:[%s1 + $0xbf0] sm:$0xf]
  %v430 = vld [vmem:[%s1 + $0xbf4] sm:$0xff]
  %v431 = vld [vmem:[%s1 + $0xbfc] sm:$0xff]
  %v432 = vld [vmem:[%s1 + $0xc04] sm:$0xff]
  %v433 = vld [vmem:[%s1 + $0xc0c] sm:$0xff]
  %v434 = vld [vmem:[%s1 + $0xc14] sm:$0xff]
  %v435 = vld [vmem:[%s1 + $0xc1c] sm:$0xff]
  %v436 = vld [vmem:[%s1 + $0xc24] sm:$0xff]
  %v437 = vld [vmem:[%s1 + $0xc2c] sm:$0xff]
  %v438 = vld [vmem:[%s1 + $0xc34] sm:$0xf]
  %v439 = vld [vmem:[%s1 + $0xc38] sm:$0xff]
  %v440 = vld [vmem:[%s1 + $0xc40] sm:$0xff]
  %v441 = vld [vmem:[%s1 + $0xc48] sm:$0xff]
  %v442 = vld [vmem:[%s1 + $0xc50] sm:$0xff]
  %v443 = vld [vmem:[%s1 + $0xc58] sm:$0xff]
  %v444 = vld [vmem:[%s1 + $0xc60] sm:$0xff]
  %v445 = vld [vmem:[%s1 + $0xc68] sm:$0xff]
  %v446 = vld [vmem:[%s1 + $0xc70] sm:$0xff]
  %v447 = vld [vmem:[%s1 + $0xc78] sm:$0xf]
  %v448 = vld [vmem:[%s1 + $0xc7c] sm:$0xff]
  %v449 = vld [vmem:[%s1 + $0xc84] sm:$0xff]
  %v450 = vld [vmem:[%s1 + $0xc8c] sm:$0xff]
  %v451 = vld [vmem:[%s1 + $0xc94] sm:$0xff]
  %v452 = vld [vmem:[%s1 + $0xc9c] sm:$0xff]
  %v453 = vld [vmem:[%s1 + $0xca4] sm:$0xff]
  %v454 = vld [vmem:[%s1 + $0xcac] sm:$0xff]
  %v455 = vld [vmem:[%s1 + $0xcb4] sm:$0xff]
  %v456 = vld [vmem:[%s1 + $0xcbc] sm:$0xf]
  %v457 = vld [vmem:[%s1 + $0xcc0] sm:$0xff]
  %v458 = vld [vmem:[%s1 + $0xcc8] sm:$0xff]
  %v459 = vld [vmem:[%s1 + $0xcd0] sm:$0xff]
  %v460 = vld [vmem:[%s1 + $0xcd8] sm:$0xff]
  %v461 = vld [vmem:[%s1 + $0xce0] sm:$0xff]
  %v462 = vld [vmem:[%s1 + $0xce8] sm:$0xff]
  %v463 = vld [vmem:[%s1 + $0xcf0] sm:$0xff]
  %v464 = vld [vmem:[%s1 + $0xcf8] sm:$0xff]
  %v465 = vld [vmem:[%s1 + $0xd00] sm:$0xf]
  %v466 = vld [vmem:[%s1 + $0xd04] sm:$0xff]
  %v467 = vld [vmem:[%s1 + $0xd0c] sm:$0xff]
  %v468 = vld [vmem:[%s1 + $0xd14] sm:$0xff]
  %v469 = vld [vmem:[%s1 + $0xd1c] sm:$0xff]
  %v470 = vld [vmem:[%s1 + $0xd24] sm:$0xff]
  %v471 = vld [vmem:[%s1 + $0xd2c] sm:$0xff]
  %v472 = vld [vmem:[%s1 + $0xd34] sm:$0xff]
  %v473 = vld [vmem:[%s1 + $0xd3c] sm:$0xff]
  %v474 = vld [vmem:[%s1 + $0xd44] sm:$0xf]
  %v475 = vld [vmem:[%s1 + $0xd48] sm:$0xff]
  %v476 = vld [vmem:[%s1 + $0xd50] sm:$0xff]
  %v477 = vld [vmem:[%s1 + $0xd58] sm:$0xff]
  %v478 = vld [vmem:[%s1 + $0xd60] sm:$0xff]
  %v479 = vld [vmem:[%s1 + $0xd68] sm:$0xff]
  %v480 = vld [vmem:[%s1 + $0xd70] sm:$0xff]
  %v481 = vld [vmem:[%s1 + $0xd78] sm:$0xff]
  %v482 = vld [vmem:[%s1 + $0xd80] sm:$0xff]
  %v483 = vld [vmem:[%s1 + $0xd88] sm:$0xf]
  %v484 = vld [vmem:[%s1 + $0xd8c] sm:$0xff]
  %v485 = vld [vmem:[%s1 + $0xd94] sm:$0xff]
  %v486 = vld [vmem:[%s1 + $0xd9c] sm:$0xff]
  %v487 = vld [vmem:[%s1 + $0xda4] sm:$0xff]
  %v488 = vld [vmem:[%s1 + $0xdac] sm:$0xff]
  %v489 = vld [vmem:[%s1 + $0xdb4] sm:$0xff]
  %v490 = vld [vmem:[%s1 + $0xdbc] sm:$0xff]
  %v491 = vld [vmem:[%s1 + $0xdc4] sm:$0xff]
  %v492 = vld [vmem:[%s1 + $0xdcc] sm:$0xf]
  %v493 = vld [vmem:[%s1 + $0xdd0] sm:$0xff]
  %v494 = vld [vmem:[%s1 + $0xdd8] sm:$0xff]
  %v495 = vld [vmem:[%s1 + $0xde0] sm:$0xff]
  %v496 = vld [vmem:[%s1 + $0xde8] sm:$0xff]
  %v497 = vld [vmem:[%s1 + $0xdf0] sm:$0xff]
  %v498 = vld [vmem:[%s1 + $0xdf8] sm:$0xff]
  %v499 = vld [vmem:[%s1 + $0xe00] sm:$0xff]
  %v500 = vld [vmem:[%s1 + $0xe08] sm:$0xff]
  %v501 = vld [vmem:[%s1 + $0xe10] sm:$0xf]
  %v502 = vld [vmem:[%s1 + $0xe14] sm:$0xff]
  %v503 = vld [vmem:[%s1 + $0xe1c] sm:$0xff]
  %v504 = vld [vmem:[%s1 + $0xe24] sm:$0xff]
  %v505 = vld [vmem:[%s1 + $0xe2c] sm:$0xff]
  %v506 = vld [vmem:[%s1 + $0xe34] sm:$0xff]
  %v507 = vld [vmem:[%s1 + $0xe3c] sm:$0xff]
  %v508 = vld [vmem:[%s1 + $0xe44] sm:$0xff]
  %v509 = vld [vmem:[%s1 + $0xe4c] sm:$0xff]
  %v510 = vld [vmem:[%s1 + $0xe54] sm:$0xf]
  %v511 = vld [vmem:[%s1 + $0xe58] sm:$0xff]
  %v512 = vld [vmem:[%s1 + $0xe60] sm:$0xff]
  %v513 = vld [vmem:[%s1 + $0xe68] sm:$0xff]
  %v514 = vld [vmem:[%s1 + $0xe70] sm:$0xff]
  %v515 = vld [vmem:[%s1 + $0xe78] sm:$0xff]
  %v516 = vld [vmem:[%s1 + $0xe80] sm:$0xff]
  %v517 = vld [vmem:[%s1 + $0xe88] sm:$0xff]
  %v518 = vld [vmem:[%s1 + $0xe90] sm:$0xff]
  %v519 = vld [vmem:[%s1 + $0xe98] sm:$0xf]
  %v520 = vld [vmem:[%s1 + $0xe9c] sm:$0xff]
  %v521 = vld [vmem:[%s1 + $0xea4] sm:$0xff]
  %v522 = vld [vmem:[%s1 + $0xeac] sm:$0xff]
  %v523 = vld [vmem:[%s1 + $0xeb4] sm:$0xff]
  %v524 = vld [vmem:[%s1 + $0xebc] sm:$0xff]
  %v525 = vld [vmem:[%s1 + $0xec4] sm:$0xff]
  %v526 = vld [vmem:[%s1 + $0xecc] sm:$0xff]
  %v527 = vld [vmem:[%s1 + $0xed4] sm:$0xff]
  %v528 = vld [vmem:[%s1 + $0xedc] sm:$0xf]
  %v529 = vld [vmem:[%s1 + $0xee0] sm:$0xff]
  %v530 = vld [vmem:[%s1 + $0xee8] sm:$0xff]
  %v531 = vld [vmem:[%s1 + $0xef0] sm:$0xff]
  %v532 = vld [vmem:[%s1 + $0xef8] sm:$0xff]
  %v533 = vld [vmem:[%s1 + $0xf00] sm:$0xff]
  %v534 = vld [vmem:[%s1 + $0xf08] sm:$0xff]
  %v535 = vld [vmem:[%s1 + $0xf10] sm:$0xff]
  %v536 = vld [vmem:[%s1 + $0xf18] sm:$0xff]
  %v537 = vld [vmem:[%s1 + $0xf20] sm:$0xf]
  %v538 = vld [vmem:[%s1 + $0xf24] sm:$0xff]
  %v539 = vld [vmem:[%s1 + $0xf2c] sm:$0xff]
  %v540 = vld [vmem:[%s1 + $0xf34] sm:$0xff]
  %v541 = vld [vmem:[%s1 + $0xf3c] sm:$0xff]
  %v542 = vld [vmem:[%s1 + $0xf44] sm:$0xff]
  %v543 = vld [vmem:[%s1 + $0xf4c] sm:$0xff]
  %v544 = vld [vmem:[%s1 + $0xf54] sm:$0xff]
  %v545 = vld [vmem:[%s1 + $0xf5c] sm:$0xff]
  %v546 = vld [vmem:[%s1 + $0xf64] sm:$0xf]
  %v547 = vld [vmem:[%s1 + $0xf68] sm:$0xff]
  %v548 = vld [vmem:[%s1 + $0xf70] sm:$0xff]
  %v549 = vld [vmem:[%s1 + $0xf78] sm:$0xff]
  %v550 = vld [vmem:[%s1 + $0xf80] sm:$0xff]
  %v551 = vld [vmem:[%s1 + $0xf88] sm:$0xff]
  %v552 = vld [vmem:[%s1 + $0xf90] sm:$0xff]
  %v553 = vld [vmem:[%s1 + $0xf98] sm:$0xff]
  %v554 = vld [vmem:[%s1 + $0xfa0] sm:$0xff]
  %v555 = vld [vmem:[%s1 + $0xfa8] sm:$0xf]
  %v556 = vld [vmem:[%s1 + $0xfac] sm:$0xff]
  %v557 = vld [vmem:[%s1 + $0xfb4] sm:$0xff]
  %v558 = vld [vmem:[%s1 + $0xfbc] sm:$0xff]
  %v559 = vld [vmem:[%s1 + $0xfc4] sm:$0xff]
  %v560 = vld [vmem:[%s1 + $0xfcc] sm:$0xff]
  %v561 = vld [vmem:[%s1 + $0xfd4] sm:$0xff]
  %v562 = vld [vmem:[%s1 + $0xfdc] sm:$0xff]
  %v563 = vld [vmem:[%s1 + $0xfe4] sm:$0xff]
  %v564 = vld [vmem:[%s1 + $0xfec] sm:$0xf]
  %v565 = vld [vmem:[%s1 + $0xff0] sm:$0xff]
  %v566 = vld [vmem:[%s1 + $0xff8] sm:$0xff]
  %v567 = vld [vmem:[%s1 + $0x1000] sm:$0xff]
  %v568 = vld [vmem:[%s1 + $0x1008] sm:$0xff]
  %v569 = vld [vmem:[%s1 + $0x1010] sm:$0xff]
  %v570 = vld [vmem:[%s1 + $0x1018] sm:$0xff]
  %v571 = vld [vmem:[%s1 + $0x1020] sm:$0xff]
  %v572 = vld [vmem:[%s1 + $0x1028] sm:$0xff]
  %v573 = vld [vmem:[%s1 + $0x1030] sm:$0xf]
  %v574 = vld [vmem:[%s1 + $0x1034] sm:$0xff]
  %v575 = vld [vmem:[%s1 + $0x103c] sm:$0xff]
  %v576 = vld [vmem:[%s1 + $0x1044] sm:$0xff]
  %v577 = vld [vmem:[%s1 + $0x104c] sm:$0xff]
  %v578 = vld [vmem:[%s1 + $0x1054] sm:$0xff]
  %v579 = vld [vmem:[%s1 + $0x105c] sm:$0xff]
  %v580 = vld [vmem:[%s1 + $0x1064] sm:$0xff]
  %v581 = vld [vmem:[%s1 + $0x106c] sm:$0xff]
  %v582 = vld [vmem:[%s1 + $0x1074] sm:$0xf]
  %v583 = vld [vmem:[%s1 + $0x1078] sm:$0xff]
  %v584 = vld [vmem:[%s1 + $0x1080] sm:$0xff]
  %v585 = vld [vmem:[%s1 + $0x1088] sm:$0xff]
  %v586 = vld [vmem:[%s1 + $0x1090] sm:$0xff]
  %v587 = vld [vmem:[%s1 + $0x1098] sm:$0xff]
  %v588 = vld [vmem:[%s1 + $0x10a0] sm:$0xff]
  %v589 = vld [vmem:[%s1 + $0x10a8] sm:$0xff]
  %v590 = vld [vmem:[%s1 + $0x10b0] sm:$0xff]
  %v591 = vld [vmem:[%s1 + $0x10b8] sm:$0xf]
  %v592 = vld [vmem:[%s1 + $0x10bc] sm:$0xff]
  %v593 = vld [vmem:[%s1 + $0x10c4] sm:$0xff]
  %v594 = vld [vmem:[%s1 + $0x10cc] sm:$0xff]
  %v595 = vld [vmem:[%s1 + $0x10d4] sm:$0xff]
  %v596 = vld [vmem:[%s1 + $0x10dc] sm:$0xff]
  %v597 = vld [vmem:[%s1 + $0x10e4] sm:$0xff]
  %v598 = vld [vmem:[%s1 + $0x10ec] sm:$0xff]
  %v599 = vld [vmem:[%s1 + $0x10f4] sm:$0xff]
  %v600 = vld [vmem:[%s1 + $0x10fc] sm:$0xf]
  %v601 = vld [vmem:[%s1 + $0x1100] sm:$0xff]
  %v602 = vld [vmem:[%s1 + $0x1108] sm:$0xff]
  %v603 = vld [vmem:[%s1 + $0x1110] sm:$0xff]
  %v604 = vld [vmem:[%s1 + $0x1118] sm:$0xff]
  %v605 = vld [vmem:[%s1 + $0x1120] sm:$0xff]
  %v606 = vld [vmem:[%s1 + $0x1128] sm:$0xff]
  %v607 = vld [vmem:[%s1 + $0x1130] sm:$0xff]
  %v608 = vld [vmem:[%s1 + $0x1138] sm:$0xff]
  %v609 = vld [vmem:[%s1 + $0x1140] sm:$0xf]
  %v610 = vld [vmem:[%s1 + $0x1144] sm:$0xff]
  %v611 = vld [vmem:[%s1 + $0x114c] sm:$0xff]
  %v612 = vld [vmem:[%s1 + $0x1154] sm:$0xff]
  %v613 = vld [vmem:[%s1 + $0x115c] sm:$0xff]
  %v614 = vld [vmem:[%s1 + $0x1164] sm:$0xff]
  %v615 = vld [vmem:[%s1 + $0x116c] sm:$0xff]
  %v616 = vld [vmem:[%s1 + $0x1174] sm:$0xff]
  %v617 = vld [vmem:[%s1 + $0x117c] sm:$0xff]
  %v618 = vld [vmem:[%s1 + $0x1184] sm:$0xf]
  %v619 = vld [vmem:[%s1 + $0x1188] sm:$0xff]
  %v620 = vld [vmem:[%s1 + $0x1190] sm:$0xff]
  %v621 = vld [vmem:[%s1 + $0x1198] sm:$0xff]
  %v622 = vld [vmem:[%s1 + $0x11a0] sm:$0xff]
  %v623 = vld [vmem:[%s1 + $0x11a8] sm:$0xff]
  %v624 = vld [vmem:[%s1 + $0x11b0] sm:$0xff]
  %v625 = vld [vmem:[%s1 + $0x11b8] sm:$0xff]
  %v626 = vld [vmem:[%s1 + $0x11c0] sm:$0xff]
  %v627 = vld [vmem:[%s1 + $0x11c8] sm:$0xf]
  %v628 = vld [vmem:[%s1 + $0x11cc] sm:$0xff]
  %v629 = vld [vmem:[%s1 + $0x11d4] sm:$0xff]
  %v630 = vld [vmem:[%s1 + $0x11dc] sm:$0xff]
  %v631 = vld [vmem:[%s1 + $0x11e4] sm:$0xff]
  %v632 = vld [vmem:[%s1 + $0x11ec] sm:$0xff]
  %v633 = vld [vmem:[%s1 + $0x11f4] sm:$0xff]
  %v634 = vld [vmem:[%s1 + $0x11fc] sm:$0xff]
  %v635 = vld [vmem:[%s1 + $0x1204] sm:$0xff]
  %v636 = vld [vmem:[%s1 + $0x120c] sm:$0xf]
  %v637 = vld [vmem:[%s1 + $0x1210] sm:$0xff]
  %v638 = vld [vmem:[%s1 + $0x1218] sm:$0xff]
  %v639 = vld [vmem:[%s1 + $0x1220] sm:$0xff]
  %v640 = vld [vmem:[%s1 + $0x1228] sm:$0xff]
  %v641 = vld [vmem:[%s1 + $0x1230] sm:$0xff]
  %v642 = vld [vmem:[%s1 + $0x1238] sm:$0xff]
  %v643 = vld [vmem:[%s1 + $0x1240] sm:$0xff]
  %v644 = vld [vmem:[%s1 + $0x1248] sm:$0xff]
  %v645 = vld [vmem:[%s1 + $0x1250] sm:$0xf]
  %v646 = vld [vmem:[%s1 + $0x1254] sm:$0xff]
  %v647 = vld [vmem:[%s1 + $0x125c] sm:$0xff]
  %v648 = vld [vmem:[%s1 + $0x1264] sm:$0xff]
  %v649 = vld [vmem:[%s1 + $0x126c] sm:$0xff]
  %v650 = vld [vmem:[%s1 + $0x1274] sm:$0xff]
  %v651 = vld [vmem:[%s1 + $0x127c] sm:$0xff]
  %v652 = vld [vmem:[%s1 + $0x1284] sm:$0xff]
  %v653 = vld [vmem:[%s1 + $0x128c] sm:$0xff]
  %v654 = vld [vmem:[%s1 + $0x1294] sm:$0xf]
  %v655 = vld [vmem:[%s1 + $0x1298] sm:$0xff]
  %v656 = vld [vmem:[%s1 + $0x12a0] sm:$0xff]
  %v657 = vld [vmem:[%s1 + $0x12a8] sm:$0xff]
  %v658 = vld [vmem:[%s1 + $0x12b0] sm:$0xff]
  %v659 = vld [vmem:[%s1 + $0x12b8] sm:$0xff]
  %v660 = vld [vmem:[%s1 + $0x12c0] sm:$0xff]
  %v661 = vld [vmem:[%s1 + $0x12c8] sm:$0xff]
  %v662 = vld [vmem:[%s1 + $0x12d0] sm:$0xff]
  %v663 = vld [vmem:[%s1 + $0x12d8] sm:$0xf]
  %v664 = vld [vmem:[%s1 + $0x12dc] sm:$0xff]
  %v665 = vld [vmem:[%s1 + $0x12e4] sm:$0xff]
  %v666 = vld [vmem:[%s1 + $0x12ec] sm:$0xff]
  %v667 = vld [vmem:[%s1 + $0x12f4] sm:$0xff]
  %v668 = vld [vmem:[%s1 + $0x12fc] sm:$0xff]
  %v669 = vld [vmem:[%s1 + $0x1304] sm:$0xff]
  %v670 = vld [vmem:[%s1 + $0x130c] sm:$0xff]
  %v671 = vld [vmem:[%s1 + $0x1314] sm:$0xff]
  %v672 = vld [vmem:[%s1 + $0x131c] sm:$0xf]
  %v673 = vld [vmem:[%s1 + $0x1320] sm:$0xff]
  %v674 = vld [vmem:[%s1 + $0x1328] sm:$0xff]
  %v675 = vld [vmem:[%s1 + $0x1330] sm:$0xff]
  %v676 = vld [vmem:[%s1 + $0x1338] sm:$0xff]
  %v677 = vld [vmem:[%s1 + $0x1340] sm:$0xff]
  %v678 = vld [vmem:[%s1 + $0x1348] sm:$0xff]
  %v679 = vld [vmem:[%s1 + $0x1350] sm:$0xff]
  %v680 = vld [vmem:[%s1 + $0x1358] sm:$0xff]
  %v681 = vld [vmem:[%s1 + $0x1360] sm:$0xf]
  %v682 = vld [vmem:[%s1 + $0x1364] sm:$0xff]
  %v683 = vld [vmem:[%s1 + $0x136c] sm:$0xff]
  %v684 = vld [vmem:[%s1 + $0x1374] sm:$0xff]
  %v685 = vld [vmem:[%s1 + $0x137c] sm:$0xff]
  %v686 = vld [vmem:[%s1 + $0x1384] sm:$0xff]
  %v687 = vld [vmem:[%s1 + $0x138c] sm:$0xff]
  %v688 = vld [vmem:[%s1 + $0x1394] sm:$0xff]
  %v689 = vld [vmem:[%s1 + $0x139c] sm:$0xff]
  %v690 = vld [vmem:[%s1 + $0x13a4] sm:$0xf]
  %v691 = vld [vmem:[%s1 + $0x13a8] sm:$0xff]
  %v692 = vld [vmem:[%s1 + $0x13b0] sm:$0xff]
  %v693 = vld [vmem:[%s1 + $0x13b8] sm:$0xff]
  %v694 = vld [vmem:[%s1 + $0x13c0] sm:$0xff]
  %v695 = vld [vmem:[%s1 + $0x13c8] sm:$0xff]
  %v696 = vld [vmem:[%s1 + $0x13d0] sm:$0xff]
  %v697 = vld [vmem:[%s1 + $0x13d8] sm:$0xff]
  %v698 = vld [vmem:[%s1 + $0x13e0] sm:$0xff]
  %v699 = vld [vmem:[%s1 + $0x13e8] sm:$0xf]
  %v700 = vld [vmem:[%s1 + $0x13ec] sm:$0xff]
  %v701 = vld [vmem:[%s1 + $0x13f4] sm:$0xff]
  %v702 = vld [vmem:[%s1 + $0x13fc] sm:$0xff]
  %v703 = vld [vmem:[%s1 + $0x1404] sm:$0xff]
  %v704 = vld [vmem:[%s1 + $0x140c] sm:$0xff]
  %v705 = vld [vmem:[%s1 + $0x1414] sm:$0xff]
  %v706 = vld [vmem:[%s1 + $0x141c] sm:$0xff]
  %v707 = vld [vmem:[%s1 + $0x1424] sm:$0xff]
  %v708 = vld [vmem:[%s1 + $0x142c] sm:$0xf]
  %v709 = vld [vmem:[%s1 + $0x1430] sm:$0xff]
  %v710 = vld [vmem:[%s1 + $0x1438] sm:$0xff]
  %v711 = vld [vmem:[%s1 + $0x1440] sm:$0xff]
  %v712 = vld [vmem:[%s1 + $0x1448] sm:$0xff]
  %v713 = vld [vmem:[%s1 + $0x1450] sm:$0xff]
  %v714 = vld [vmem:[%s1 + $0x1458] sm:$0xff]
  %v715 = vld [vmem:[%s1 + $0x1460] sm:$0xff]
  %v716 = vld [vmem:[%s1 + $0x1468] sm:$0xff]
  %v717 = vld [vmem:[%s1 + $0x1470] sm:$0xf]
  %v718 = vld [vmem:[%s1 + $0x1474] sm:$0xff]
  %v719 = vld [vmem:[%s1 + $0x147c] sm:$0xff]
  %v720 = vld [vmem:[%s1 + $0x1484] sm:$0xff]
  %v721 = vld [vmem:[%s1 + $0x148c] sm:$0xff]
  %v722 = vld [vmem:[%s1 + $0x1494] sm:$0xff]
  %v723 = vld [vmem:[%s1 + $0x149c] sm:$0xff]
  %v724 = vld [vmem:[%s1 + $0x14a4] sm:$0xff]
  %v725 = vld [vmem:[%s1 + $0x14ac] sm:$0xff]
  %v726 = vld [vmem:[%s1 + $0x14b4] sm:$0xf]
  %v727 = vld [vmem:[%s1 + $0x14b8] sm:$0xff]
  %v728 = vld [vmem:[%s1 + $0x14c0] sm:$0xff]
  %v729 = vld [vmem:[%s1 + $0x14c8] sm:$0xff]
  %v730 = vld [vmem:[%s1 + $0x14d0] sm:$0xff]
  %v731 = vld [vmem:[%s1 + $0x14d8] sm:$0xff]
  %v732 = vld [vmem:[%s1 + $0x14e0] sm:$0xff]
  %v733 = vld [vmem:[%s1 + $0x14e8] sm:$0xff]
  %v734 = vld [vmem:[%s1 + $0x14f0] sm:$0xff]
  %v735 = vld [vmem:[%s1 + $0x14f8] sm:$0xf]
  %v736 = vld [vmem:[%s1 + $0x14fc] sm:$0xff]
  %v737 = vld [vmem:[%s1 + $0x1504] sm:$0xff]
  %v738 = vld [vmem:[%s1 + $0x150c] sm:$0xff]
  %v739 = vld [vmem:[%s1 + $0x1514] sm:$0xff]
  %v740 = vld [vmem:[%s1 + $0x151c] sm:$0xff]
  %v741 = vld [vmem:[%s1 + $0x1524] sm:$0xff]
  %v742 = vld [vmem:[%s1 + $0x152c] sm:$0xff]
  %v743 = vld [vmem:[%s1 + $0x1534] sm:$0xff]
  %v744 = vld [vmem:[%s1 + $0x153c] sm:$0xf]
  %v745 = vld [vmem:[%s1 + $0x1540] sm:$0xff]
  %v746 = vld [vmem:[%s1 + $0x1548] sm:$0xff]
  %v747 = vld [vmem:[%s1 + $0x1550] sm:$0xff]
  %v748 = vld [vmem:[%s1 + $0x1558] sm:$0xff]
  %v749 = vld [vmem:[%s1 + $0x1560] sm:$0xff]
  %v750 = vld [vmem:[%s1 + $0x1568] sm:$0xff]
  %v751 = vld [vmem:[%s1 + $0x1570] sm:$0xff]
  %v752 = vld [vmem:[%s1 + $0x1578] sm:$0xff]
  %v753 = vld [vmem:[%s1 + $0x1580] sm:$0xf]
  %v754 = vld [vmem:[%s1 + $0x1584] sm:$0xff]
  %v755 = vld [vmem:[%s1 + $0x158c] sm:$0xff]
  %v756 = vld [vmem:[%s1 + $0x1594] sm:$0xff]
  %v757 = vld [vmem:[%s1 + $0x159c] sm:$0xff]
  %v758 = vld [vmem:[%s1 + $0x15a4] sm:$0xff]
  %v759 = vld [vmem:[%s1 + $0x15ac] sm:$0xff]
  %v760 = vld [vmem:[%s1 + $0x15b4] sm:$0xff]
  %v761 = vld [vmem:[%s1 + $0x15bc] sm:$0xff]
  %v762 = vld [vmem:[%s1 + $0x15c4] sm:$0xf]
  %v763 = vld [vmem:[%s1 + $0x15c8] sm:$0xff]
  %v764 = vld [vmem:[%s1 + $0x15d0] sm:$0xff]
  %v765 = vld [vmem:[%s1 + $0x15d8] sm:$0xff]
  %v766 = vld [vmem:[%s1 + $0x15e0] sm:$0xff]
  %v767 = vld [vmem:[%s1 + $0x15e8] sm:$0xff]
  %v768 = vld [vmem:[%s1 + $0x15f0] sm:$0xff]
  %v769 = vld [vmem:[%s1 + $0x15f8] sm:$0xff]
  %v770 = vld [vmem:[%s1 + $0x1600] sm:$0xff]
  %v771 = vld [vmem:[%s1 + $0x1608] sm:$0xf]
  %v772 = vld [vmem:[%s1 + $0x160c] sm:$0xff]
  %v773 = vld [vmem:[%s1 + $0x1614] sm:$0xff]
  %v774 = vld [vmem:[%s1 + $0x161c] sm:$0xff]
  %v775 = vld [vmem:[%s1 + $0x1624] sm:$0xff]
  %v776 = vld [vmem:[%s1 + $0x162c] sm:$0xff]
  %v777 = vld [vmem:[%s1 + $0x1634] sm:$0xff]
  %v778 = vld [vmem:[%s1 + $0x163c] sm:$0xff]
  %v779 = vld [vmem:[%s1 + $0x1644] sm:$0xff]
  %v780 = vld [vmem:[%s1 + $0x164c] sm:$0xf]
  %v781 = vld [vmem:[%s1 + $0x1650] sm:$0xff]
  %v782 = vld [vmem:[%s1 + $0x1658] sm:$0xff]
  %v783 = vld [vmem:[%s1 + $0x1660] sm:$0xff]
  %v784 = vld [vmem:[%s1 + $0x1668] sm:$0xff]
  %v785 = vld [vmem:[%s1 + $0x1670] sm:$0xff]
  %v786 = vld [vmem:[%s1 + $0x1678] sm:$0xff]
  %v787 = vld [vmem:[%s1 + $0x1680] sm:$0xff]
  %v788 = vld [vmem:[%s1 + $0x1688] sm:$0xff]
  %v789 = vld [vmem:[%s1 + $0x1690] sm:$0xf]
  %v790 = vld [vmem:[%s1 + $0x1694] sm:$0xff]
  %v791 = vld [vmem:[%s1 + $0x169c] sm:$0xff]
  %v792 = vld [vmem:[%s1 + $0x16a4] sm:$0xff]
  %v793 = vld [vmem:[%s1 + $0x16ac] sm:$0xff]
  %v794 = vld [vmem:[%s1 + $0x16b4] sm:$0xff]
  %v795 = vld [vmem:[%s1 + $0x16bc] sm:$0xff]
  %v796 = vld [vmem:[%s1 + $0x16c4] sm:$0xff]
  %v797 = vld [vmem:[%s1 + $0x16cc] sm:$0xff]
  %v798 = vld [vmem:[%s1 + $0x16d4] sm:$0xf]
  %v799 = vld [vmem:[%s1 + $0x16d8] sm:$0xff]
  %v800 = vld [vmem:[%s1 + $0x16e0] sm:$0xff]
  %v801 = vld [vmem:[%s1 + $0x16e8] sm:$0xff]
  %v802 = vld [vmem:[%s1 + $0x16f0] sm:$0xff]
  %v803 = vld [vmem:[%s1 + $0x16f8] sm:$0xff]
  %v804 = vld [vmem:[%s1 + $0x1700] sm:$0xff]
  %v805 = vld [vmem:[%s1 + $0x1708] sm:$0xff]
  %v806 = vld [vmem:[%s1 + $0x1710] sm:$0xff]
  %v807 = vld [vmem:[%s1 + $0x1718] sm:$0xf]
  %v808 = vld [vmem:[%s1 + $0x171c] sm:$0xff]
  %v809 = vld [vmem:[%s1 + $0x1724] sm:$0xff]
  %v810 = vld [vmem:[%s1 + $0x172c] sm:$0xff]
  %v811 = vld [vmem:[%s1 + $0x1734] sm:$0xff]
  %v812 = vld [vmem:[%s1 + $0x173c] sm:$0xff]
  %v813 = vld [vmem:[%s1 + $0x1744] sm:$0xff]
  %v814 = vld [vmem:[%s1 + $0x174c] sm:$0xff]
  %v815 = vld [vmem:[%s1 + $0x1754] sm:$0xff]
  %v816 = vld [vmem:[%s1 + $0x175c] sm:$0xf]
  %v817 = vld [vmem:[%s1 + $0x1760] sm:$0xff]
  %v818 = vld [vmem:[%s1 + $0x1768] sm:$0xff]
  %v819 = vld [vmem:[%s1 + $0x1770] sm:$0xff]
  %v820 = vld [vmem:[%s1 + $0x1778] sm:$0xff]
  %v821 = vld [vmem:[%s1 + $0x1780] sm:$0xff]
  %v822 = vld [vmem:[%s1 + $0x1788] sm:$0xff]
  %v823 = vld [vmem:[%s1 + $0x1790] sm:$0xff]
  %v824 = vld [vmem:[%s1 + $0x1798] sm:$0xff]
  %v825 = vld [vmem:[%s1 + $0x17a0] sm:$0xf]
  %v826 = vld [vmem:[%s1 + $0x17a4] sm:$0xff]
  %v827 = vld [vmem:[%s1 + $0x17ac] sm:$0xff]
  %v828 = vld [vmem:[%s1 + $0x17b4] sm:$0xff]
  %v829 = vld [vmem:[%s1 + $0x17bc] sm:$0xff]
  %v830 = vld [vmem:[%s1 + $0x17c4] sm:$0xff]
  %v831 = vld [vmem:[%s1 + $0x17cc] sm:$0xff]
  %v832 = vld [vmem:[%s1 + $0x17d4] sm:$0xff]
  %v833 = vld [vmem:[%s1 + $0x17dc] sm:$0xff]
  %v834 = vld [vmem:[%s1 + $0x17e4] sm:$0xf]
  %v835 = vld [vmem:[%s1 + $0x17e8] sm:$0xff]
  %v836 = vld [vmem:[%s1 + $0x17f0] sm:$0xff]
  %v837 = vld [vmem:[%s1 + $0x17f8] sm:$0xff]
  %v838 = vld [vmem:[%s1 + $0x1800] sm:$0xff]
  %v839 = vld [vmem:[%s1 + $0x1808] sm:$0xff]
  %v840 = vld [vmem:[%s1 + $0x1810] sm:$0xff]
  %v841 = vld [vmem:[%s1 + $0x1818] sm:$0xff]
  %v842 = vld [vmem:[%s1 + $0x1820] sm:$0xff]
  %v843 = vld [vmem:[%s1 + $0x1828] sm:$0xf]
  %v844 = vld [vmem:[%s1 + $0x182c] sm:$0xff]
  %v845 = vld [vmem:[%s1 + $0x1834] sm:$0xff]
  %v846 = vld [vmem:[%s1 + $0x183c] sm:$0xff]
  %v847 = vld [vmem:[%s1 + $0x1844] sm:$0xff]
  %v848 = vld [vmem:[%s1 + $0x184c] sm:$0xff]
  %v849 = vld [vmem:[%s1 + $0x1854] sm:$0xff]
  %v850 = vld [vmem:[%s1 + $0x185c] sm:$0xff]
  %v851 = vld [vmem:[%s1 + $0x1864] sm:$0xff]
  %v852 = vld [vmem:[%s1 + $0x186c] sm:$0xf]
  %v853 = vld [vmem:[%s1 + $0x1870] sm:$0xff]
  %v854 = vld [vmem:[%s1 + $0x1878] sm:$0xff]
  %v855 = vld [vmem:[%s1 + $0x1880] sm:$0xff]
  %v856 = vld [vmem:[%s1 + $0x1888] sm:$0xff]
  %v857 = vld [vmem:[%s1 + $0x1890] sm:$0xff]
  %v858 = vld [vmem:[%s1 + $0x1898] sm:$0xff]
  %v859 = vld [vmem:[%s1 + $0x18a0] sm:$0xff]
  %v860 = vld [vmem:[%s1 + $0x18a8] sm:$0xff]
  %v861 = vld [vmem:[%s1 + $0x18b0] sm:$0xf]
  %v862 = vld [vmem:[%s1 + $0x18b4] sm:$0xff]
  %v863 = vld [vmem:[%s1 + $0x18bc] sm:$0xff]
  %v864 = vld [vmem:[%s1 + $0x18c4] sm:$0xff]
  %v865 = vld [vmem:[%s1 + $0x18cc] sm:$0xff]
  %v866 = vld [vmem:[%s1 + $0x18d4] sm:$0xff]
  %v867 = vld [vmem:[%s1 + $0x18dc] sm:$0xff]
  %v868 = vld [vmem:[%s1 + $0x18e4] sm:$0xff]
  %v869 = vld [vmem:[%s1 + $0x18ec] sm:$0xff]
  %v870 = vld [vmem:[%s1 + $0x18f4] sm:$0xf]
  %v871 = vld [vmem:[%s1 + $0x18f8] sm:$0xff]
  %v872 = vld [vmem:[%s1 + $0x1900] sm:$0xff]
  %v873 = vld [vmem:[%s1 + $0x1908] sm:$0xff]
  %v874 = vld [vmem:[%s1 + $0x1910] sm:$0xff]
  %v875 = vld [vmem:[%s1 + $0x1918] sm:$0xff]
  %v876 = vld [vmem:[%s1 + $0x1920] sm:$0xff]
  %v877 = vld [vmem:[%s1 + $0x1928] sm:$0xff]
  %v878 = vld [vmem:[%s1 + $0x1930] sm:$0xff]
  %v879 = vld [vmem:[%s1 + $0x1938] sm:$0xf]
  %v880 = vld [vmem:[%s1 + $0x193c] sm:$0xff]
  %v881 = vld [vmem:[%s1 + $0x1944] sm:$0xff]
  %v882 = vld [vmem:[%s1 + $0x194c] sm:$0xff]
  %v883 = vld [vmem:[%s1 + $0x1954] sm:$0xff]
  %v884 = vld [vmem:[%s1 + $0x195c] sm:$0xff]
  %v885 = vld [vmem:[%s1 + $0x1964] sm:$0xff]
  %v886 = vld [vmem:[%s1 + $0x196c] sm:$0xff]
  %v887 = vld [vmem:[%s1 + $0x1974] sm:$0xff]
  %v888 = vld [vmem:[%s1 + $0x197c] sm:$0xf]
  %v889 = vld [vmem:[%s1 + $0x1980] sm:$0xff]
  %v890 = vld [vmem:[%s1 + $0x1988] sm:$0xff]
  %v891 = vld [vmem:[%s1 + $0x1990] sm:$0xff]
  %v892 = vld [vmem:[%s1 + $0x1998] sm:$0xff]
  %v893 = vld [vmem:[%s1 + $0x19a0] sm:$0xff]
  %v894 = vld [vmem:[%s1 + $0x19a8] sm:$0xff]
  %v895 = vld [vmem:[%s1 + $0x19b0] sm:$0xff]
  %v896 = vld [vmem:[%s1 + $0x19b8] sm:$0xff]
  %v897 = vld [vmem:[%s1 + $0x19c0] sm:$0xf]
  %v898 = vld [vmem:[%s1 + $0x19c4] sm:$0xff]
  %v899 = vld [vmem:[%s1 + $0x19cc] sm:$0xff]
  %v900 = vld [vmem:[%s1 + $0x19d4] sm:$0xff]
  %v901 = vld [vmem:[%s1 + $0x19dc] sm:$0xff]
  %v902 = vld [vmem:[%s1 + $0x19e4] sm:$0xff]
  %v903 = vld [vmem:[%s1 + $0x19ec] sm:$0xff]
  %v904 = vld [vmem:[%s1 + $0x19f4] sm:$0xff]
  %v905 = vld [vmem:[%s1 + $0x19fc] sm:$0xff]
  %v906 = vld [vmem:[%s1 + $0x1a04] sm:$0xf]
  %v907 = vld [vmem:[%s2] sm:$0xff]
  %v908 = vld [vmem:[%s2 + $0x8] sm:$0xff]
  %v909 = vld [vmem:[%s2 + $0x10] sm:$0x1]
  %v913 = vlaneseq
  %v914 = vshrl.u32 %v913, 7
  %v915 = vsub.s32 0, %v914
  %v916 = vrot.slane %v907, %v915
  %v917 = vlaneseq
  %v918 = vshrl.u32 %v917, 7
  %v919 = vsub.s32 1, %v918
  %v920 = vrot.slane %v907, %v919
  %v921 = vlaneseq
  %v922 = vshrl.u32 %v921, 7
  %v923 = vsub.s32 2, %v922
  %v924 = vrot.slane %v907, %v923
  %v925 = vlaneseq
  %v926 = vshrl.u32 %v925, 7
  %v927 = vsub.s32 3, %v926
  %v928 = vrot.slane %v907, %v927
  %v929 = vlaneseq
  %v930 = vshrl.u32 %v929, 7
  %v931 = vsub.s32 4, %v930
  %v932 = vrot.slane %v907, %v931
  %v933 = vlaneseq
  %v934 = vshrl.u32 %v933, 7
  %v935 = vsub.s32 5, %v934
  %v936 = vrot.slane %v907, %v935
  %v937 = vlaneseq
  %v938 = vshrl.u32 %v937, 7
  %v939 = vsub.s32 6, %v938
  %v940 = vrot.slane %v907, %v939
  %v941 = vlaneseq
  %v942 = vshrl.u32 %v941, 7
  %v943 = vsub.s32 7, %v942
  %v944 = vrot.slane %v907, %v943
  %v945 = vlaneseq
  %v946 = vshrl.u32 %v945, 7
  %v947 = vsub.s32 0, %v946
  %v948 = vrot.slane %v908, %v947
  %v949 = vlaneseq
  %v950 = vshrl.u32 %v949, 7
  %v951 = vsub.s32 1, %v950
  %v952 = vrot.slane %v908, %v951
  %v953 = vlaneseq
  %v954 = vshrl.u32 %v953, 7
  %v955 = vsub.s32 2, %v954
  %v956 = vrot.slane %v908, %v955
  %v957 = vlaneseq
  %v958 = vshrl.u32 %v957, 7
  %v959 = vsub.s32 3, %v958
  %v960 = vrot.slane %v908, %v959
  %v961 = vlaneseq
  %v962 = vshrl.u32 %v961, 7
  %v963 = vsub.s32 4, %v962
  %v964 = vrot.slane %v908, %v963
  %v965 = vlaneseq
  %v966 = vshrl.u32 %v965, 7
  %v967 = vsub.s32 5, %v966
  %v968 = vrot.slane %v908, %v967
  %v969 = vlaneseq
  %v970 = vshrl.u32 %v969, 7
  %v971 = vsub.s32 6, %v970
  %v972 = vrot.slane %v908, %v971
  %v973 = vlaneseq
  %v974 = vshrl.u32 %v973, 7
  %v975 = vsub.s32 7, %v974
  %v976 = vrot.slane %v908, %v975
  %v977 = vlaneseq
  %v978 = vshrl.u32 %v977, 7
  %v979 = vsub.s32 0, %v978
  %v980 = vrot.slane %v909, %v979
  %v1002 = vunpack.c.l.b16 %v21
  %v1003 = vunpack.c.h.b16 %v21
  %v1004 = vunpack.c.l.b16 %v22
  %v1005 = vunpack.c.h.b16 %v22
  %v1006 = vunpack.c.l.b16 %v23
  %v1007 = vunpack.c.h.b16 %v23
  %v1008 = vunpack.c.l.b16 %v24
  %v1009 = vpack.c.b16 %v1002, %v1002
  %v1010 = vpack.c.b16 %v1003, %v1003
  %v1011 = vpack.c.b16 %v1004, %v1004
  %v1012 = vpack.c.b16 %v1005, %v1005
  %v1013 = vpack.c.b16 %v1006, %v1006
  %v1014 = vpack.c.b16 %v1007, %v1007
  %v1015 = vpack.c.b16 %v1008, %v1008
  %v1904 = vunpack.c.l.b16 %v25
  %v1905 = vunpack.c.h.b16 %v25
  %v1906 = vunpack.c.l.b16 %v26
  %v1907 = vunpack.c.h.b16 %v26
  %v1908 = vunpack.c.l.b16 %v27
  %v1909 = vunpack.c.h.b16 %v27
  %v1910 = vunpack.c.l.b16 %v28
  %v1911 = vunpack.c.h.b16 %v28
  %v1912 = vunpack.c.l.b16 %v29
  %v1913 = vunpack.c.h.b16 %v29
  %v1914 = vunpack.c.l.b16 %v30
  %v1915 = vunpack.c.h.b16 %v30
  %v1916 = vunpack.c.l.b16 %v31
  %v1917 = vunpack.c.h.b16 %v31
  %v1918 = vunpack.c.l.b16 %v32
  %v1919 = vunpack.c.h.b16 %v32
  %v1920 = vunpack.c.l.b16 %v33
  %v1921 = vunpack.c.l.b16 %v34
  %v1922 = vunpack.c.h.b16 %v34
  %v1923 = vunpack.c.l.b16 %v35
  %v1924 = vunpack.c.h.b16 %v35
  %v1925 = vunpack.c.l.b16 %v36
  %v1926 = vunpack.c.h.b16 %v36
  %v1927 = vunpack.c.l.b16 %v37
  %v1928 = vunpack.c.h.b16 %v37
  %v1929 = vunpack.c.l.b16 %v38
  %v1930 = vunpack.c.h.b16 %v38
  %v1931 = vunpack.c.l.b16 %v39
  %v1932 = vunpack.c.h.b16 %v39
  %v1933 = vunpack.c.l.b16 %v40
  %v1934 = vunpack.c.h.b16 %v40
  %v1935 = vunpack.c.l.b16 %v41
  %v1936 = vunpack.c.h.b16 %v41
  %v1937 = vunpack.c.l.b16 %v42
  %v1938 = vunpack.c.l.b16 %v43
  %v1939 = vunpack.c.h.b16 %v43
  %v1940 = vunpack.c.l.b16 %v44
  %v1941 = vunpack.c.h.b16 %v44
  %v1942 = vunpack.c.l.b16 %v45
  %v1943 = vunpack.c.h.b16 %v45
  %v1944 = vunpack.c.l.b16 %v46
  %v1945 = vunpack.c.h.b16 %v46
  %v1946 = vunpack.c.l.b16 %v47
  %v1947 = vunpack.c.h.b16 %v47
  %v1948 = vunpack.c.l.b16 %v48
  %v1949 = vunpack.c.h.b16 %v48
  %v1950 = vunpack.c.l.b16 %v49
  %v1951 = vunpack.c.h.b16 %v49
  %v1952 = vunpack.c.l.b16 %v50
  %v1953 = vunpack.c.h.b16 %v50
  %v1954 = vunpack.c.l.b16 %v51
  %v1955 = vunpack.c.l.b16 %v52
  %v1956 = vunpack.c.h.b16 %v52
  %v1957 = vunpack.c.l.b16 %v53
  %v1958 = vunpack.c.h.b16 %v53
  %v1959 = vunpack.c.l.b16 %v54
  %v1960 = vunpack.c.h.b16 %v54
  %v1961 = vunpack.c.l.b16 %v55
  %v1962 = vunpack.c.h.b16 %v55
  %v1963 = vunpack.c.l.b16 %v56
  %v1964 = vunpack.c.h.b16 %v56
  %v1965 = vunpack.c.l.b16 %v57
  %v1966 = vunpack.c.h.b16 %v57
  %v1967 = vunpack.c.l.b16 %v58
  %v1968 = vunpack.c.h.b16 %v58
  %v1969 = vunpack.c.l.b16 %v59
  %v1970 = vunpack.c.h.b16 %v59
  %v1971 = vunpack.c.l.b16 %v60
  %v1972 = vunpack.c.l.b16 %v61
  %v1973 = vunpack.c.h.b16 %v61
  %v1974 = vunpack.c.l.b16 %v62
  %v1975 = vunpack.c.h.b16 %v62
  %v1976 = vunpack.c.l.b16 %v63
  %v1977 = vunpack.c.h.b16 %v63
  %v1978 = vunpack.c.l.b16 %v64
  %v1979 = vunpack.c.h.b16 %v64
  %v1980 = vunpack.c.l.b16 %v65
  %v1981 = vunpack.c.h.b16 %v65
  %v1982 = vunpack.c.l.b16 %v66
  %v1983 = vunpack.c.h.b16 %v66
  %v1984 = vunpack.c.l.b16 %v67
  %v1985 = vunpack.c.h.b16 %v67
  %v1986 = vunpack.c.l.b16 %v68
  %v1987 = vunpack.c.h.b16 %v68
  %v1988 = vunpack.c.l.b16 %v69
  %v1989 = vunpack.c.l.b16 %v70
  %v1990 = vunpack.c.h.b16 %v70
  %v1991 = vunpack.c.l.b16 %v71
  %v1992 = vunpack.c.h.b16 %v71
  %v1993 = vunpack.c.l.b16 %v72
  %v1994 = vunpack.c.h.b16 %v72
  %v1995 = vunpack.c.l.b16 %v73
  %v1996 = vunpack.c.h.b16 %v73
  %v1997 = vunpack.c.l.b16 %v74
  %v1998 = vunpack.c.h.b16 %v74
  %v1999 = vunpack.c.l.b16 %v75
  %v2000 = vunpack.c.h.b16 %v75
  %v2001 = vunpack.c.l.b16 %v76
  %v2002 = vunpack.c.h.b16 %v76
  %v2003 = vunpack.c.l.b16 %v77
  %v2004 = vunpack.c.h.b16 %v77
  %v2005 = vunpack.c.l.b16 %v78
  %v2006 = vunpack.c.l.b16 %v79
  %v2007 = vunpack.c.h.b16 %v79
  %v2008 = vunpack.c.l.b16 %v80
  %v2009 = vunpack.c.h.b16 %v80
  %v2010 = vunpack.c.l.b16 %v81
  %v2011 = vunpack.c.h.b16 %v81
  %v2012 = vunpack.c.l.b16 %v82
  %v2013 = vunpack.c.h.b16 %v82
  %v2014 = vunpack.c.l.b16 %v83
  %v2015 = vunpack.c.h.b16 %v83
  %v2016 = vunpack.c.l.b16 %v84
  %v2017 = vunpack.c.h.b16 %v84
  %v2018 = vunpack.c.l.b16 %v85
  %v2019 = vunpack.c.h.b16 %v85
  %v2020 = vunpack.c.l.b16 %v86
  %v2021 = vunpack.c.h.b16 %v86
  %v2022 = vunpack.c.l.b16 %v87
  %v2023 = vunpack.c.l.b16 %v88
  %v2024 = vunpack.c.h.b16 %v88
  %v2025 = vunpack.c.l.b16 %v89
  %v2026 = vunpack.c.h.b16 %v89
  %v2027 = vunpack.c.l.b16 %v90
  %v2028 = vunpack.c.h.b16 %v90
  %v2029 = vunpack.c.l.b16 %v91
  %v2030 = vunpack.c.h.b16 %v91
  %v2031 = vunpack.c.l.b16 %v92
  %v2032 = vunpack.c.h.b16 %v92
  %v2033 = vunpack.c.l.b16 %v93
  %v2034 = vunpack.c.h.b16 %v93
  %v2035 = vunpack.c.l.b16 %v94
  %v2036 = vunpack.c.h.b16 %v94
  %v2037 = vunpack.c.l.b16 %v95
  %v2038 = vunpack.c.h.b16 %v95
  %v2039 = vunpack.c.l.b16 %v96
  %v2040 = vunpack.c.l.b16 %v97
  %v2041 = vunpack.c.h.b16 %v97
  %v2042 = vunpack.c.l.b16 %v98
  %v2043 = vunpack.c.h.b16 %v98
  %v2044 = vunpack.c.l.b16 %v99
  %v2045 = vunpack.c.h.b16 %v99
  %v2046 = vunpack.c.l.b16 %v100
  %v2047 = vunpack.c.h.b16 %v100
  %v2048 = vunpack.c.l.b16 %v101
  %v2049 = vunpack.c.h.b16 %v101
  %v2050 = vunpack.c.l.b16 %v102
  %v2051 = vunpack.c.h.b16 %v102
  %v2052 = vunpack.c.l.b16 %v103
  %v2053 = vunpack.c.h.b16 %v103
  %v2054 = vunpack.c.l.b16 %v104
  %v2055 = vunpack.c.h.b16 %v104
  %v2056 = vunpack.c.l.b16 %v105
  %v2057 = vunpack.c.l.b16 %v106
  %v2058 = vunpack.c.h.b16 %v106
  %v2059 = vunpack.c.l.b16 %v107
  %v2060 = vunpack.c.h.b16 %v107
  %v2061 = vunpack.c.l.b16 %v108
  %v2062 = vunpack.c.h.b16 %v108
  %v2063 = vunpack.c.l.b16 %v109
  %v2064 = vunpack.c.h.b16 %v109
  %v2065 = vunpack.c.l.b16 %v110
  %v2066 = vunpack.c.h.b16 %v110
  %v2067 = vunpack.c.l.b16 %v111
  %v2068 = vunpack.c.h.b16 %v111
  %v2069 = vunpack.c.l.b16 %v112
  %v2070 = vunpack.c.h.b16 %v112
  %v2071 = vunpack.c.l.b16 %v113
  %v2072 = vunpack.c.h.b16 %v113
  %v2073 = vunpack.c.l.b16 %v114
  %v2074 = vunpack.c.l.b16 %v115
  %v2075 = vunpack.c.h.b16 %v115
  %v2076 = vunpack.c.l.b16 %v116
  %v2077 = vunpack.c.h.b16 %v116
  %v2078 = vunpack.c.l.b16 %v117
  %v2079 = vunpack.c.h.b16 %v117
  %v2080 = vunpack.c.l.b16 %v118
  %v2081 = vunpack.c.h.b16 %v118
  %v2082 = vunpack.c.l.b16 %v119
  %v2083 = vunpack.c.h.b16 %v119
  %v2084 = vunpack.c.l.b16 %v120
  %v2085 = vunpack.c.h.b16 %v120
  %v2086 = vunpack.c.l.b16 %v121
  %v2087 = vunpack.c.h.b16 %v121
  %v2088 = vunpack.c.l.b16 %v122
  %v2089 = vunpack.c.h.b16 %v122
  %v2090 = vunpack.c.l.b16 %v123
  %v2091 = vunpack.c.l.b16 %v124
  %v2092 = vunpack.c.h.b16 %v124
  %v2093 = vunpack.c.l.b16 %v125
  %v2094 = vunpack.c.h.b16 %v125
  %v2095 = vunpack.c.l.b16 %v126
  %v2096 = vunpack.c.h.b16 %v126
  %v2097 = vunpack.c.l.b16 %v127
  %v2098 = vunpack.c.h.b16 %v127
  %v2099 = vunpack.c.l.b16 %v128
  %v2100 = vunpack.c.h.b16 %v128
  %v2101 = vunpack.c.l.b16 %v129
  %v2102 = vunpack.c.h.b16 %v129
  %v2103 = vunpack.c.l.b16 %v130
  %v2104 = vunpack.c.h.b16 %v130
  %v2105 = vunpack.c.l.b16 %v131
  %v2106 = vunpack.c.h.b16 %v131
  %v2107 = vunpack.c.l.b16 %v132
  %v2108 = vunpack.c.l.b16 %v133
  %v2109 = vunpack.c.h.b16 %v133
  %v2110 = vunpack.c.l.b16 %v134
  %v2111 = vunpack.c.h.b16 %v134
  %v2112 = vunpack.c.l.b16 %v135
  %v2113 = vunpack.c.h.b16 %v135
  %v2114 = vunpack.c.l.b16 %v136
  %v2115 = vunpack.c.h.b16 %v136
  %v2116 = vunpack.c.l.b16 %v137
  %v2117 = vunpack.c.h.b16 %v137
  %v2118 = vunpack.c.l.b16 %v138
  %v2119 = vunpack.c.h.b16 %v138
  %v2120 = vunpack.c.l.b16 %v139
  %v2121 = vunpack.c.h.b16 %v139
  %v2122 = vunpack.c.l.b16 %v140
  %v2123 = vunpack.c.h.b16 %v140
  %v2124 = vunpack.c.l.b16 %v141
  %v2125 = vunpack.c.l.b16 %v142
  %v2126 = vunpack.c.h.b16 %v142
  %v2127 = vunpack.c.l.b16 %v143
  %v2128 = vunpack.c.h.b16 %v143
  %v2129 = vunpack.c.l.b16 %v144
  %v2130 = vunpack.c.h.b16 %v144
  %v2131 = vunpack.c.l.b16 %v145
  %v2132 = vunpack.c.h.b16 %v145
  %v2133 = vunpack.c.l.b16 %v146
  %v2134 = vunpack.c.h.b16 %v146
  %v2135 = vunpack.c.l.b16 %v147
  %v2136 = vunpack.c.h.b16 %v147
  %v2137 = vunpack.c.l.b16 %v148
  %v2138 = vunpack.c.h.b16 %v148
  %v2139 = vunpack.c.l.b16 %v149
  %v2140 = vunpack.c.h.b16 %v149
  %v2141 = vunpack.c.l.b16 %v150
  %v2142 = vunpack.c.l.b16 %v151
  %v2143 = vunpack.c.h.b16 %v151
  %v2144 = vunpack.c.l.b16 %v152
  %v2145 = vunpack.c.h.b16 %v152
  %v2146 = vunpack.c.l.b16 %v153
  %v2147 = vunpack.c.h.b16 %v153
  %v2148 = vunpack.c.l.b16 %v154
  %v2149 = vunpack.c.h.b16 %v154
  %v2150 = vunpack.c.l.b16 %v155
  %v2151 = vunpack.c.h.b16 %v155
  %v2152 = vunpack.c.l.b16 %v156
  %v2153 = vunpack.c.h.b16 %v156
  %v2154 = vunpack.c.l.b16 %v157
  %v2155 = vunpack.c.h.b16 %v157
  %v2156 = vunpack.c.l.b16 %v158
  %v2157 = vunpack.c.h.b16 %v158
  %v2158 = vunpack.c.l.b16 %v159
  %v2159 = vunpack.c.l.b16 %v160
  %v2160 = vunpack.c.h.b16 %v160
  %v2161 = vunpack.c.l.b16 %v161
  %v2162 = vunpack.c.h.b16 %v161
  %v2163 = vunpack.c.l.b16 %v162
  %v2164 = vunpack.c.h.b16 %v162
  %v2165 = vunpack.c.l.b16 %v163
  %v2166 = vunpack.c.h.b16 %v163
  %v2167 = vunpack.c.l.b16 %v164
  %v2168 = vunpack.c.h.b16 %v164
  %v2169 = vunpack.c.l.b16 %v165
  %v2170 = vunpack.c.h.b16 %v165
  %v2171 = vunpack.c.l.b16 %v166
  %v2172 = vunpack.c.h.b16 %v166
  %v2173 = vunpack.c.l.b16 %v167
  %v2174 = vunpack.c.h.b16 %v167
  %v2175 = vunpack.c.l.b16 %v168
  %v2176 = vunpack.c.l.b16 %v169
  %v2177 = vunpack.c.h.b16 %v169
  %v2178 = vunpack.c.l.b16 %v170
  %v2179 = vunpack.c.h.b16 %v170
  %v2180 = vunpack.c.l.b16 %v171
  %v2181 = vunpack.c.h.b16 %v171
  %v2182 = vunpack.c.l.b16 %v172
  %v2183 = vunpack.c.h.b16 %v172
  %v2184 = vunpack.c.l.b16 %v173
  %v2185 = vunpack.c.h.b16 %v173
  %v2186 = vunpack.c.l.b16 %v174
  %v2187 = vunpack.c.h.b16 %v174
  %v2188 = vunpack.c.l.b16 %v175
  %v2189 = vunpack.c.h.b16 %v175
  %v2190 = vunpack.c.l.b16 %v176
  %v2191 = vunpack.c.h.b16 %v176
  %v2192 = vunpack.c.l.b16 %v177
  %v2193 = vunpack.c.l.b16 %v178
  %v2194 = vunpack.c.h.b16 %v178
  %v2195 = vunpack.c.l.b16 %v179
  %v2196 = vunpack.c.h.b16 %v179
  %v2197 = vunpack.c.l.b16 %v180
  %v2198 = vunpack.c.h.b16 %v180
  %v2199 = vunpack.c.l.b16 %v181
  %v2200 = vunpack.c.h.b16 %v181
  %v2201 = vunpack.c.l.b16 %v182
  %v2202 = vunpack.c.h.b16 %v182
  %v2203 = vunpack.c.l.b16 %v183
  %v2204 = vunpack.c.h.b16 %v183
  %v2205 = vunpack.c.l.b16 %v184
  %v2206 = vunpack.c.h.b16 %v184
  %v2207 = vunpack.c.l.b16 %v185
  %v2208 = vunpack.c.h.b16 %v185
  %v2209 = vunpack.c.l.b16 %v186
  %v2210 = vunpack.c.l.b16 %v187
  %v2211 = vunpack.c.h.b16 %v187
  %v2212 = vunpack.c.l.b16 %v188
  %v2213 = vunpack.c.h.b16 %v188
  %v2214 = vunpack.c.l.b16 %v189
  %v2215 = vunpack.c.h.b16 %v189
  %v2216 = vunpack.c.l.b16 %v190
  %v2217 = vunpack.c.h.b16 %v190
  %v2218 = vunpack.c.l.b16 %v191
  %v2219 = vunpack.c.h.b16 %v191
  %v2220 = vunpack.c.l.b16 %v192
  %v2221 = vunpack.c.h.b16 %v192
  %v2222 = vunpack.c.l.b16 %v193
  %v2223 = vunpack.c.h.b16 %v193
  %v2224 = vunpack.c.l.b16 %v194
  %v2225 = vunpack.c.h.b16 %v194
  %v2226 = vunpack.c.l.b16 %v195
  %v2227 = vunpack.c.l.b16 %v196
  %v2228 = vunpack.c.h.b16 %v196
  %v2229 = vunpack.c.l.b16 %v197
  %v2230 = vunpack.c.h.b16 %v197
  %v2231 = vunpack.c.l.b16 %v198
  %v2232 = vunpack.c.h.b16 %v198
  %v2233 = vunpack.c.l.b16 %v199
  %v2234 = vunpack.c.h.b16 %v199
  %v2235 = vunpack.c.l.b16 %v200
  %v2236 = vunpack.c.h.b16 %v200
  %v2237 = vunpack.c.l.b16 %v201
  %v2238 = vunpack.c.h.b16 %v201
  %v2239 = vunpack.c.l.b16 %v202
  %v2240 = vunpack.c.h.b16 %v202
  %v2241 = vunpack.c.l.b16 %v203
  %v2242 = vunpack.c.h.b16 %v203
  %v2243 = vunpack.c.l.b16 %v204
  %v2244 = vunpack.c.l.b16 %v205
  %v2245 = vunpack.c.h.b16 %v205
  %v2246 = vunpack.c.l.b16 %v206
  %v2247 = vunpack.c.h.b16 %v206
  %v2248 = vunpack.c.l.b16 %v207
  %v2249 = vunpack.c.h.b16 %v207
  %v2250 = vunpack.c.l.b16 %v208
  %v2251 = vunpack.c.h.b16 %v208
  %v2252 = vunpack.c.l.b16 %v209
  %v2253 = vunpack.c.h.b16 %v209
  %v2254 = vunpack.c.l.b16 %v210
  %v2255 = vunpack.c.h.b16 %v210
  %v2256 = vunpack.c.l.b16 %v211
  %v2257 = vunpack.c.h.b16 %v211
  %v2258 = vunpack.c.l.b16 %v212
  %v2259 = vunpack.c.h.b16 %v212
  %v2260 = vunpack.c.l.b16 %v213
  %v2261 = vunpack.c.l.b16 %v214
  %v2262 = vunpack.c.h.b16 %v214
  %v2263 = vunpack.c.l.b16 %v215
  %v2264 = vunpack.c.h.b16 %v215
  %v2265 = vunpack.c.l.b16 %v216
  %v2266 = vunpack.c.h.b16 %v216
  %v2267 = vunpack.c.l.b16 %v217
  %v2268 = vunpack.c.h.b16 %v217
  %v2269 = vunpack.c.l.b16 %v218
  %v2270 = vunpack.c.h.b16 %v218
  %v2271 = vunpack.c.l.b16 %v219
  %v2272 = vunpack.c.h.b16 %v219
  %v2273 = vunpack.c.l.b16 %v220
  %v2274 = vunpack.c.h.b16 %v220
  %v2275 = vunpack.c.l.b16 %v221
  %v2276 = vunpack.c.h.b16 %v221
  %v2277 = vunpack.c.l.b16 %v222
  %v2278 = vunpack.c.l.b16 %v223
  %v2279 = vunpack.c.h.b16 %v223
  %v2280 = vunpack.c.l.b16 %v224
  %v2281 = vunpack.c.h.b16 %v224
  %v2282 = vunpack.c.l.b16 %v225
  %v2283 = vunpack.c.h.b16 %v225
  %v2284 = vunpack.c.l.b16 %v226
  %v2285 = vunpack.c.h.b16 %v226
  %v2286 = vunpack.c.l.b16 %v227
  %v2287 = vunpack.c.h.b16 %v227
  %v2288 = vunpack.c.l.b16 %v228
  %v2289 = vunpack.c.h.b16 %v228
  %v2290 = vunpack.c.l.b16 %v229
  %v2291 = vunpack.c.h.b16 %v229
  %v2292 = vunpack.c.l.b16 %v230
  %v2293 = vunpack.c.h.b16 %v230
  %v2294 = vunpack.c.l.b16 %v231
  %v2295 = vunpack.c.l.b16 %v232
  %v2296 = vunpack.c.h.b16 %v232
  %v2297 = vunpack.c.l.b16 %v233
  %v2298 = vunpack.c.h.b16 %v233
  %v2299 = vunpack.c.l.b16 %v234
  %v2300 = vunpack.c.h.b16 %v234
  %v2301 = vunpack.c.l.b16 %v235
  %v2302 = vunpack.c.h.b16 %v235
  %v2303 = vunpack.c.l.b16 %v236
  %v2304 = vunpack.c.h.b16 %v236
  %v2305 = vunpack.c.l.b16 %v237
  %v2306 = vunpack.c.h.b16 %v237
  %v2307 = vunpack.c.l.b16 %v238
  %v2308 = vunpack.c.h.b16 %v238
  %v2309 = vunpack.c.l.b16 %v239
  %v2310 = vunpack.c.h.b16 %v239
  %v2311 = vunpack.c.l.b16 %v240
  %v2312 = vunpack.c.l.b16 %v241
  %v2313 = vunpack.c.h.b16 %v241
  %v2314 = vunpack.c.l.b16 %v242
  %v2315 = vunpack.c.h.b16 %v242
  %v2316 = vunpack.c.l.b16 %v243
  %v2317 = vunpack.c.h.b16 %v243
  %v2318 = vunpack.c.l.b16 %v244
  %v2319 = vunpack.c.h.b16 %v244
  %v2320 = vunpack.c.l.b16 %v245
  %v2321 = vunpack.c.h.b16 %v245
  %v2322 = vunpack.c.l.b16 %v246
  %v2323 = vunpack.c.h.b16 %v246
  %v2324 = vunpack.c.l.b16 %v247
  %v2325 = vunpack.c.h.b16 %v247
  %v2326 = vunpack.c.l.b16 %v248
  %v2327 = vunpack.c.h.b16 %v248
  %v2328 = vunpack.c.l.b16 %v249
  %v2329 = vunpack.c.l.b16 %v250
  %v2330 = vunpack.c.h.b16 %v250
  %v2331 = vunpack.c.l.b16 %v251
  %v2332 = vunpack.c.h.b16 %v251
  %v2333 = vunpack.c.l.b16 %v252
  %v2334 = vunpack.c.h.b16 %v252
  %v2335 = vunpack.c.l.b16 %v253
  %v2336 = vunpack.c.h.b16 %v253
  %v2337 = vunpack.c.l.b16 %v254
  %v2338 = vunpack.c.h.b16 %v254
  %v2339 = vunpack.c.l.b16 %v255
  %v2340 = vunpack.c.h.b16 %v255
  %v2341 = vunpack.c.l.b16 %v256
  %v2342 = vunpack.c.h.b16 %v256
  %v2343 = vunpack.c.l.b16 %v257
  %v2344 = vunpack.c.h.b16 %v257
  %v2345 = vunpack.c.l.b16 %v258
  %v2346 = vunpack.c.l.b16 %v259
  %v2347 = vunpack.c.h.b16 %v259
  %v2348 = vunpack.c.l.b16 %v260
  %v2349 = vunpack.c.h.b16 %v260
  %v2350 = vunpack.c.l.b16 %v261
  %v2351 = vunpack.c.h.b16 %v261
  %v2352 = vunpack.c.l.b16 %v262
  %v2353 = vunpack.c.h.b16 %v262
  %v2354 = vunpack.c.l.b16 %v263
  %v2355 = vunpack.c.h.b16 %v263
  %v2356 = vunpack.c.l.b16 %v264
  %v2357 = vunpack.c.h.b16 %v264
  %v2358 = vunpack.c.l.b16 %v265
  %v2359 = vunpack.c.h.b16 %v265
  %v2360 = vunpack.c.l.b16 %v266
  %v2361 = vunpack.c.h.b16 %v266
  %v2362 = vunpack.c.l.b16 %v267
  %v2363 = vunpack.c.l.b16 %v268
  %v2364 = vunpack.c.h.b16 %v268
  %v2365 = vunpack.c.l.b16 %v269
  %v2366 = vunpack.c.h.b16 %v269
  %v2367 = vunpack.c.l.b16 %v270
  %v2368 = vunpack.c.h.b16 %v270
  %v2369 = vunpack.c.l.b16 %v271
  %v2370 = vunpack.c.h.b16 %v271
  %v2371 = vunpack.c.l.b16 %v272
  %v2372 = vunpack.c.h.b16 %v272
  %v2373 = vunpack.c.l.b16 %v273
  %v2374 = vunpack.c.h.b16 %v273
  %v2375 = vunpack.c.l.b16 %v274
  %v2376 = vunpack.c.h.b16 %v274
  %v2377 = vunpack.c.l.b16 %v275
  %v2378 = vunpack.c.h.b16 %v275
  %v2379 = vunpack.c.l.b16 %v276
  %v2380 = vunpack.c.l.b16 %v277
  %v2381 = vunpack.c.h.b16 %v277
  %v2382 = vunpack.c.l.b16 %v278
  %v2383 = vunpack.c.h.b16 %v278
  %v2384 = vunpack.c.l.b16 %v279
  %v2385 = vunpack.c.h.b16 %v279
  %v2386 = vunpack.c.l.b16 %v280
  %v2387 = vunpack.c.h.b16 %v280
  %v2388 = vunpack.c.l.b16 %v281
  %v2389 = vunpack.c.h.b16 %v281
  %v2390 = vunpack.c.l.b16 %v282
  %v2391 = vunpack.c.h.b16 %v282
  %v2392 = vunpack.c.l.b16 %v283
  %v2393 = vunpack.c.h.b16 %v283
  %v2394 = vunpack.c.l.b16 %v284
  %v2395 = vunpack.c.h.b16 %v284
  %v2396 = vunpack.c.l.b16 %v285
  %v2397 = vunpack.c.l.b16 %v286
  %v2398 = vunpack.c.h.b16 %v286
  %v2399 = vunpack.c.l.b16 %v287
  %v2400 = vunpack.c.h.b16 %v287
  %v2401 = vunpack.c.l.b16 %v288
  %v2402 = vunpack.c.h.b16 %v288
  %v2403 = vunpack.c.l.b16 %v289
  %v2404 = vunpack.c.h.b16 %v289
  %v2405 = vunpack.c.l.b16 %v290
  %v2406 = vunpack.c.h.b16 %v290
  %v2407 = vunpack.c.l.b16 %v291
  %v2408 = vunpack.c.h.b16 %v291
  %v2409 = vunpack.c.l.b16 %v292
  %v2410 = vunpack.c.h.b16 %v292
  %v2411 = vunpack.c.l.b16 %v293
  %v2412 = vunpack.c.h.b16 %v293
  %v2413 = vunpack.c.l.b16 %v294
  %v2414 = vunpack.c.l.b16 %v295
  %v2415 = vunpack.c.h.b16 %v295
  %v2416 = vunpack.c.l.b16 %v296
  %v2417 = vunpack.c.h.b16 %v296
  %v2418 = vunpack.c.l.b16 %v297
  %v2419 = vunpack.c.h.b16 %v297
  %v2420 = vunpack.c.l.b16 %v298
  %v2421 = vunpack.c.h.b16 %v298
  %v2422 = vunpack.c.l.b16 %v299
  %v2423 = vunpack.c.h.b16 %v299
  %v2424 = vunpack.c.l.b16 %v300
  %v2425 = vunpack.c.h.b16 %v300
  %v2426 = vunpack.c.l.b16 %v301
  %v2427 = vunpack.c.h.b16 %v301
  %v2428 = vunpack.c.l.b16 %v302
  %v2429 = vunpack.c.h.b16 %v302
  %v2430 = vunpack.c.l.b16 %v303
  %v2431 = vunpack.c.l.b16 %v304
  %v2432 = vunpack.c.h.b16 %v304
  %v2433 = vunpack.c.l.b16 %v305
  %v2434 = vunpack.c.h.b16 %v305
  %v2435 = vunpack.c.l.b16 %v306
  %v2436 = vunpack.c.h.b16 %v306
  %v2437 = vunpack.c.l.b16 %v307
  %v2438 = vunpack.c.h.b16 %v307
  %v2439 = vunpack.c.l.b16 %v308
  %v2440 = vunpack.c.h.b16 %v308
  %v2441 = vunpack.c.l.b16 %v309
  %v2442 = vunpack.c.h.b16 %v309
  %v2443 = vunpack.c.l.b16 %v310
  %v2444 = vunpack.c.h.b16 %v310
  %v2445 = vunpack.c.l.b16 %v311
  %v2446 = vunpack.c.h.b16 %v311
  %v2447 = vunpack.c.l.b16 %v312
  %v2448 = vunpack.c.l.b16 %v313
  %v2449 = vunpack.c.h.b16 %v313
  %v2450 = vunpack.c.l.b16 %v314
  %v2451 = vunpack.c.h.b16 %v314
  %v2452 = vunpack.c.l.b16 %v315
  %v2453 = vunpack.c.h.b16 %v315
  %v2454 = vunpack.c.l.b16 %v316
  %v2455 = vunpack.c.h.b16 %v316
  %v2456 = vunpack.c.l.b16 %v317
  %v2457 = vunpack.c.h.b16 %v317
  %v2458 = vunpack.c.l.b16 %v318
  %v2459 = vunpack.c.h.b16 %v318
  %v2460 = vunpack.c.l.b16 %v319
  %v2461 = vunpack.c.h.b16 %v319
  %v2462 = vunpack.c.l.b16 %v320
  %v2463 = vunpack.c.h.b16 %v320
  %v2464 = vunpack.c.l.b16 %v321
  %v2465 = vunpack.c.l.b16 %v322
  %v2466 = vunpack.c.h.b16 %v322
  %v2467 = vunpack.c.l.b16 %v323
  %v2468 = vunpack.c.h.b16 %v323
  %v2469 = vunpack.c.l.b16 %v324
  %v2470 = vunpack.c.h.b16 %v324
  %v2471 = vunpack.c.l.b16 %v325
  %v2472 = vunpack.c.h.b16 %v325
  %v2473 = vunpack.c.l.b16 %v326
  %v2474 = vunpack.c.h.b16 %v326
  %v2475 = vunpack.c.l.b16 %v327
  %v2476 = vunpack.c.h.b16 %v327
  %v2477 = vunpack.c.l.b16 %v328
  %v2478 = vunpack.c.h.b16 %v328
  %v2479 = vunpack.c.l.b16 %v329
  %v2480 = vunpack.c.h.b16 %v329
  %v2481 = vunpack.c.l.b16 %v330
  %v2482 = vunpack.c.l.b16 %v331
  %v2483 = vunpack.c.h.b16 %v331
  %v2484 = vunpack.c.l.b16 %v332
  %v2485 = vunpack.c.h.b16 %v332
  %v2486 = vunpack.c.l.b16 %v333
  %v2487 = vunpack.c.h.b16 %v333
  %v2488 = vunpack.c.l.b16 %v334
  %v2489 = vunpack.c.h.b16 %v334
  %v2490 = vunpack.c.l.b16 %v335
  %v2491 = vunpack.c.h.b16 %v335
  %v2492 = vunpack.c.l.b16 %v336
  %v2493 = vunpack.c.h.b16 %v336
  %v2494 = vunpack.c.l.b16 %v337
  %v2495 = vunpack.c.h.b16 %v337
  %v2496 = vunpack.c.l.b16 %v338
  %v2497 = vunpack.c.h.b16 %v338
  %v2498 = vunpack.c.l.b16 %v339
  %v2499 = vunpack.c.l.b16 %v340
  %v2500 = vunpack.c.h.b16 %v340
  %v2501 = vunpack.c.l.b16 %v341
  %v2502 = vunpack.c.h.b16 %v341
  %v2503 = vunpack.c.l.b16 %v342
  %v2504 = vunpack.c.h.b16 %v342
  %v2505 = vunpack.c.l.b16 %v343
  %v2506 = vunpack.c.h.b16 %v343
  %v2507 = vunpack.c.l.b16 %v344
  %v2508 = vunpack.c.h.b16 %v344
  %v2509 = vunpack.c.l.b16 %v345
  %v2510 = vunpack.c.h.b16 %v345
  %v2511 = vunpack.c.l.b16 %v346
  %v2512 = vunpack.c.h.b16 %v346
  %v2513 = vunpack.c.l.b16 %v347
  %v2514 = vunpack.c.h.b16 %v347
  %v2515 = vunpack.c.l.b16 %v348
  %v2516 = vunpack.c.l.b16 %v349
  %v2517 = vunpack.c.h.b16 %v349
  %v2518 = vunpack.c.l.b16 %v350
  %v2519 = vunpack.c.h.b16 %v350
  %v2520 = vunpack.c.l.b16 %v351
  %v2521 = vunpack.c.h.b16 %v351
  %v2522 = vunpack.c.l.b16 %v352
  %v2523 = vunpack.c.h.b16 %v352
  %v2524 = vunpack.c.l.b16 %v353
  %v2525 = vunpack.c.h.b16 %v353
  %v2526 = vunpack.c.l.b16 %v354
  %v2527 = vunpack.c.h.b16 %v354
  %v2528 = vunpack.c.l.b16 %v355
  %v2529 = vunpack.c.h.b16 %v355
  %v2530 = vunpack.c.l.b16 %v356
  %v2531 = vunpack.c.h.b16 %v356
  %v2532 = vunpack.c.l.b16 %v357
  %v2533 = vunpack.c.l.b16 %v358
  %v2534 = vunpack.c.h.b16 %v358
  %v2535 = vunpack.c.l.b16 %v359
  %v2536 = vunpack.c.h.b16 %v359
  %v2537 = vunpack.c.l.b16 %v360
  %v2538 = vunpack.c.h.b16 %v360
  %v2539 = vunpack.c.l.b16 %v361
  %v2540 = vunpack.c.h.b16 %v361
  %v2541 = vunpack.c.l.b16 %v362
  %v2542 = vunpack.c.h.b16 %v362
  %v2543 = vunpack.c.l.b16 %v363
  %v2544 = vunpack.c.h.b16 %v363
  %v2545 = vunpack.c.l.b16 %v364
  %v2546 = vunpack.c.h.b16 %v364
  %v2547 = vunpack.c.l.b16 %v365
  %v2548 = vunpack.c.h.b16 %v365
  %v2549 = vunpack.c.l.b16 %v366
  %v2550 = vunpack.c.l.b16 %v367
  %v2551 = vunpack.c.h.b16 %v367
  %v2552 = vunpack.c.l.b16 %v368
  %v2553 = vunpack.c.h.b16 %v368
  %v2554 = vunpack.c.l.b16 %v369
  %v2555 = vunpack.c.h.b16 %v369
  %v2556 = vunpack.c.l.b16 %v370
  %v2557 = vunpack.c.h.b16 %v370
  %v2558 = vunpack.c.l.b16 %v371
  %v2559 = vunpack.c.h.b16 %v371
  %v2560 = vunpack.c.l.b16 %v372
  %v2561 = vunpack.c.h.b16 %v372
  %v2562 = vunpack.c.l.b16 %v373
  %v2563 = vunpack.c.h.b16 %v373
  %v2564 = vunpack.c.l.b16 %v374
  %v2565 = vunpack.c.h.b16 %v374
  %v2566 = vunpack.c.l.b16 %v375
  %v2567 = vunpack.c.l.b16 %v376
  %v2568 = vunpack.c.h.b16 %v376
  %v2569 = vunpack.c.l.b16 %v377
  %v2570 = vunpack.c.h.b16 %v377
  %v2571 = vunpack.c.l.b16 %v378
  %v2572 = vunpack.c.h.b16 %v378
  %v2573 = vunpack.c.l.b16 %v379
  %v2574 = vunpack.c.h.b16 %v379
  %v2575 = vunpack.c.l.b16 %v380
  %v2576 = vunpack.c.h.b16 %v380
  %v2577 = vunpack.c.l.b16 %v381
  %v2578 = vunpack.c.h.b16 %v381
  %v2579 = vunpack.c.l.b16 %v382
  %v2580 = vunpack.c.h.b16 %v382
  %v2581 = vunpack.c.l.b16 %v383
  %v2582 = vunpack.c.h.b16 %v383
  %v2583 = vunpack.c.l.b16 %v384
  %v2584 = vunpack.c.l.b16 %v385
  %v2585 = vunpack.c.h.b16 %v385
  %v2586 = vunpack.c.l.b16 %v386
  %v2587 = vunpack.c.h.b16 %v386
  %v2588 = vunpack.c.l.b16 %v387
  %v2589 = vunpack.c.h.b16 %v387
  %v2590 = vunpack.c.l.b16 %v388
  %v2591 = vunpack.c.h.b16 %v388
  %v2592 = vunpack.c.l.b16 %v389
  %v2593 = vunpack.c.h.b16 %v389
  %v2594 = vunpack.c.l.b16 %v390
  %v2595 = vunpack.c.h.b16 %v390
  %v2596 = vunpack.c.l.b16 %v391
  %v2597 = vunpack.c.h.b16 %v391
  %v2598 = vunpack.c.l.b16 %v392
  %v2599 = vunpack.c.h.b16 %v392
  %v2600 = vunpack.c.l.b16 %v393
  %v2601 = vunpack.c.l.b16 %v394
  %v2602 = vunpack.c.h.b16 %v394
  %v2603 = vunpack.c.l.b16 %v395
  %v2604 = vunpack.c.h.b16 %v395
  %v2605 = vunpack.c.l.b16 %v396
  %v2606 = vunpack.c.h.b16 %v396
  %v2607 = vunpack.c.l.b16 %v397
  %v2608 = vunpack.c.h.b16 %v397
  %v2609 = vunpack.c.l.b16 %v398
  %v2610 = vunpack.c.h.b16 %v398
  %v2611 = vunpack.c.l.b16 %v399
  %v2612 = vunpack.c.h.b16 %v399
  %v2613 = vunpack.c.l.b16 %v400
  %v2614 = vunpack.c.h.b16 %v400
  %v2615 = vunpack.c.l.b16 %v401
  %v2616 = vunpack.c.h.b16 %v401
  %v2617 = vunpack.c.l.b16 %v402
  %v2618 = vunpack.c.l.b16 %v403
  %v2619 = vunpack.c.h.b16 %v403
  %v2620 = vunpack.c.l.b16 %v404
  %v2621 = vunpack.c.h.b16 %v404
  %v2622 = vunpack.c.l.b16 %v405
  %v2623 = vunpack.c.h.b16 %v405
  %v2624 = vunpack.c.l.b16 %v406
  %v2625 = vunpack.c.h.b16 %v406
  %v2626 = vunpack.c.l.b16 %v407
  %v2627 = vunpack.c.h.b16 %v407
  %v2628 = vunpack.c.l.b16 %v408
  %v2629 = vunpack.c.h.b16 %v408
  %v2630 = vunpack.c.l.b16 %v409
  %v2631 = vunpack.c.h.b16 %v409
  %v2632 = vunpack.c.l.b16 %v410
  %v2633 = vunpack.c.h.b16 %v410
  %v2634 = vunpack.c.l.b16 %v411
  %v2635 = vunpack.c.l.b16 %v412
  %v2636 = vunpack.c.h.b16 %v412
  %v2637 = vunpack.c.l.b16 %v413
  %v2638 = vunpack.c.h.b16 %v413
  %v2639 = vunpack.c.l.b16 %v414
  %v2640 = vunpack.c.h.b16 %v414
  %v2641 = vunpack.c.l.b16 %v415
  %v2642 = vunpack.c.h.b16 %v415
  %v2643 = vunpack.c.l.b16 %v416
  %v2644 = vunpack.c.h.b16 %v416
  %v2645 = vunpack.c.l.b16 %v417
  %v2646 = vunpack.c.h.b16 %v417
  %v2647 = vunpack.c.l.b16 %v418
  %v2648 = vunpack.c.h.b16 %v418
  %v2649 = vunpack.c.l.b16 %v419
  %v2650 = vunpack.c.h.b16 %v419
  %v2651 = vunpack.c.l.b16 %v420
  %v2652 = vunpack.c.l.b16 %v421
  %v2653 = vunpack.c.h.b16 %v421
  %v2654 = vunpack.c.l.b16 %v422
  %v2655 = vunpack.c.h.b16 %v422
  %v2656 = vunpack.c.l.b16 %v423
  %v2657 = vunpack.c.h.b16 %v423
  %v2658 = vunpack.c.l.b16 %v424
  %v2659 = vunpack.c.h.b16 %v424
  %v2660 = vunpack.c.l.b16 %v425
  %v2661 = vunpack.c.h.b16 %v425
  %v2662 = vunpack.c.l.b16 %v426
  %v2663 = vunpack.c.h.b16 %v426
  %v2664 = vunpack.c.l.b16 %v427
  %v2665 = vunpack.c.h.b16 %v427
  %v2666 = vunpack.c.l.b16 %v428
  %v2667 = vunpack.c.h.b16 %v428
  %v2668 = vunpack.c.l.b16 %v429
  %v2669 = vunpack.c.l.b16 %v430
  %v2670 = vunpack.c.h.b16 %v430
  %v2671 = vunpack.c.l.b16 %v431
  %v2672 = vunpack.c.h.b16 %v431
  %v2673 = vunpack.c.l.b16 %v432
  %v2674 = vunpack.c.h.b16 %v432
  %v2675 = vunpack.c.l.b16 %v433
  %v2676 = vunpack.c.h.b16 %v433
  %v2677 = vunpack.c.l.b16 %v434
  %v2678 = vunpack.c.h.b16 %v434
  %v2679 = vunpack.c.l.b16 %v435
  %v2680 = vunpack.c.h.b16 %v435
  %v2681 = vunpack.c.l.b16 %v436
  %v2682 = vunpack.c.h.b16 %v436
  %v2683 = vunpack.c.l.b16 %v437
  %v2684 = vunpack.c.h.b16 %v437
  %v2685 = vunpack.c.l.b16 %v438
  %v2686 = vunpack.c.l.b16 %v439
  %v2687 = vunpack.c.h.b16 %v439
  %v2688 = vunpack.c.l.b16 %v440
  %v2689 = vunpack.c.h.b16 %v440
  %v2690 = vunpack.c.l.b16 %v441
  %v2691 = vunpack.c.h.b16 %v441
  %v2692 = vunpack.c.l.b16 %v442
  %v2693 = vunpack.c.h.b16 %v442
  %v2694 = vunpack.c.l.b16 %v443
  %v2695 = vunpack.c.h.b16 %v443
  %v2696 = vunpack.c.l.b16 %v444
  %v2697 = vunpack.c.h.b16 %v444
  %v2698 = vunpack.c.l.b16 %v445
  %v2699 = vunpack.c.h.b16 %v445
  %v2700 = vunpack.c.l.b16 %v446
  %v2701 = vunpack.c.h.b16 %v446
  %v2702 = vunpack.c.l.b16 %v447
  %v2703 = vunpack.c.l.b16 %v448
  %v2704 = vunpack.c.h.b16 %v448
  %v2705 = vunpack.c.l.b16 %v449
  %v2706 = vunpack.c.h.b16 %v449
  %v2707 = vunpack.c.l.b16 %v450
  %v2708 = vunpack.c.h.b16 %v450
  %v2709 = vunpack.c.l.b16 %v451
  %v2710 = vunpack.c.h.b16 %v451
  %v2711 = vunpack.c.l.b16 %v452
  %v2712 = vunpack.c.h.b16 %v452
  %v2713 = vunpack.c.l.b16 %v453
  %v2714 = vunpack.c.h.b16 %v453
  %v2715 = vunpack.c.l.b16 %v454
  %v2716 = vunpack.c.h.b16 %v454
  %v2717 = vunpack.c.l.b16 %v455
  %v2718 = vunpack.c.h.b16 %v455
  %v2719 = vunpack.c.l.b16 %v456
  %v2720 = vunpack.c.l.b16 %v457
  %v2721 = vunpack.c.h.b16 %v457
  %v2722 = vunpack.c.l.b16 %v458
  %v2723 = vunpack.c.h.b16 %v458
  %v2724 = vunpack.c.l.b16 %v459
  %v2725 = vunpack.c.h.b16 %v459
  %v2726 = vunpack.c.l.b16 %v460
  %v2727 = vunpack.c.h.b16 %v460
  %v2728 = vunpack.c.l.b16 %v461
  %v2729 = vunpack.c.h.b16 %v461
  %v2730 = vunpack.c.l.b16 %v462
  %v2731 = vunpack.c.h.b16 %v462
  %v2732 = vunpack.c.l.b16 %v463
  %v2733 = vunpack.c.h.b16 %v463
  %v2734 = vunpack.c.l.b16 %v464
  %v2735 = vunpack.c.h.b16 %v464
  %v2736 = vunpack.c.l.b16 %v465
  %v2737 = vunpack.c.l.b16 %v466
  %v2738 = vunpack.c.h.b16 %v466
  %v2739 = vunpack.c.l.b16 %v467
  %v2740 = vunpack.c.h.b16 %v467
  %v2741 = vunpack.c.l.b16 %v468
  %v2742 = vunpack.c.h.b16 %v468
  %v2743 = vunpack.c.l.b16 %v469
  %v2744 = vunpack.c.h.b16 %v469
  %v2745 = vunpack.c.l.b16 %v470
  %v2746 = vunpack.c.h.b16 %v470
  %v2747 = vunpack.c.l.b16 %v471
  %v2748 = vunpack.c.h.b16 %v471
  %v2749 = vunpack.c.l.b16 %v472
  %v2750 = vunpack.c.h.b16 %v472
  %v2751 = vunpack.c.l.b16 %v473
  %v2752 = vunpack.c.h.b16 %v473
  %v2753 = vunpack.c.l.b16 %v474
  %v2754 = vunpack.c.l.b16 %v475
  %v2755 = vunpack.c.h.b16 %v475
  %v2756 = vunpack.c.l.b16 %v476
  %v2757 = vunpack.c.h.b16 %v476
  %v2758 = vunpack.c.l.b16 %v477
  %v2759 = vunpack.c.h.b16 %v477
  %v2760 = vunpack.c.l.b16 %v478
  %v2761 = vunpack.c.h.b16 %v478
  %v2762 = vunpack.c.l.b16 %v479
  %v2763 = vunpack.c.h.b16 %v479
  %v2764 = vunpack.c.l.b16 %v480
  %v2765 = vunpack.c.h.b16 %v480
  %v2766 = vunpack.c.l.b16 %v481
  %v2767 = vunpack.c.h.b16 %v481
  %v2768 = vunpack.c.l.b16 %v482
  %v2769 = vunpack.c.h.b16 %v482
  %v2770 = vunpack.c.l.b16 %v483
  %v2771 = vunpack.c.l.b16 %v484
  %v2772 = vunpack.c.h.b16 %v484
  %v2773 = vunpack.c.l.b16 %v485
  %v2774 = vunpack.c.h.b16 %v485
  %v2775 = vunpack.c.l.b16 %v486
  %v2776 = vunpack.c.h.b16 %v486
  %v2777 = vunpack.c.l.b16 %v487
  %v2778 = vunpack.c.h.b16 %v487
  %v2779 = vunpack.c.l.b16 %v488
  %v2780 = vunpack.c.h.b16 %v488
  %v2781 = vunpack.c.l.b16 %v489
  %v2782 = vunpack.c.h.b16 %v489
  %v2783 = vunpack.c.l.b16 %v490
  %v2784 = vunpack.c.h.b16 %v490
  %v2785 = vunpack.c.l.b16 %v491
  %v2786 = vunpack.c.h.b16 %v491
  %v2787 = vunpack.c.l.b16 %v492
  %v2788 = vunpack.c.l.b16 %v493
  %v2789 = vunpack.c.h.b16 %v493
  %v2790 = vunpack.c.l.b16 %v494
  %v2791 = vunpack.c.h.b16 %v494
  %v2792 = vunpack.c.l.b16 %v495
  %v2793 = vunpack.c.h.b16 %v495
  %v2794 = vunpack.c.l.b16 %v496
  %v2795 = vunpack.c.h.b16 %v496
  %v2796 = vunpack.c.l.b16 %v497
  %v2797 = vunpack.c.h.b16 %v497
  %v2798 = vunpack.c.l.b16 %v498
  %v2799 = vunpack.c.h.b16 %v498
  %v2800 = vunpack.c.l.b16 %v499
  %v2801 = vunpack.c.h.b16 %v499
  %v2802 = vunpack.c.l.b16 %v500
  %v2803 = vunpack.c.h.b16 %v500
  %v2804 = vunpack.c.l.b16 %v501
  %v2805 = vunpack.c.l.b16 %v502
  %v2806 = vunpack.c.h.b16 %v502
  %v2807 = vunpack.c.l.b16 %v503
  %v2808 = vunpack.c.h.b16 %v503
  %v2809 = vunpack.c.l.b16 %v504
  %v2810 = vunpack.c.h.b16 %v504
  %v2811 = vunpack.c.l.b16 %v505
  %v2812 = vunpack.c.h.b16 %v505
  %v2813 = vunpack.c.l.b16 %v506
  %v2814 = vunpack.c.h.b16 %v506
  %v2815 = vunpack.c.l.b16 %v507
  %v2816 = vunpack.c.h.b16 %v507
  %v2817 = vunpack.c.l.b16 %v508
  %v2818 = vunpack.c.h.b16 %v508
  %v2819 = vunpack.c.l.b16 %v509
  %v2820 = vunpack.c.h.b16 %v509
  %v2821 = vunpack.c.l.b16 %v510
  %v2822 = vunpack.c.l.b16 %v511
  %v2823 = vunpack.c.h.b16 %v511
  %v2824 = vunpack.c.l.b16 %v512
  %v2825 = vunpack.c.h.b16 %v512
  %v2826 = vunpack.c.l.b16 %v513
  %v2827 = vunpack.c.h.b16 %v513
  %v2828 = vunpack.c.l.b16 %v514
  %v2829 = vunpack.c.h.b16 %v514
  %v2830 = vunpack.c.l.b16 %v515
  %v2831 = vunpack.c.h.b16 %v515
  %v2832 = vunpack.c.l.b16 %v516
  %v2833 = vunpack.c.h.b16 %v516
  %v2834 = vunpack.c.l.b16 %v517
  %v2835 = vunpack.c.h.b16 %v517
  %v2836 = vunpack.c.l.b16 %v518
  %v2837 = vunpack.c.h.b16 %v518
  %v2838 = vunpack.c.l.b16 %v519
  %v2839 = vunpack.c.l.b16 %v520
  %v2840 = vunpack.c.h.b16 %v520
  %v2841 = vunpack.c.l.b16 %v521
  %v2842 = vunpack.c.h.b16 %v521
  %v2843 = vunpack.c.l.b16 %v522
  %v2844 = vunpack.c.h.b16 %v522
  %v2845 = vunpack.c.l.b16 %v523
  %v2846 = vunpack.c.h.b16 %v523
  %v2847 = vunpack.c.l.b16 %v524
  %v2848 = vunpack.c.h.b16 %v524
  %v2849 = vunpack.c.l.b16 %v525
  %v2850 = vunpack.c.h.b16 %v525
  %v2851 = vunpack.c.l.b16 %v526
  %v2852 = vunpack.c.h.b16 %v526
  %v2853 = vunpack.c.l.b16 %v527
  %v2854 = vunpack.c.h.b16 %v527
  %v2855 = vunpack.c.l.b16 %v528
  %v2856 = vunpack.c.l.b16 %v529
  %v2857 = vunpack.c.h.b16 %v529
  %v2858 = vunpack.c.l.b16 %v530
  %v2859 = vunpack.c.h.b16 %v530
  %v2860 = vunpack.c.l.b16 %v531
  %v2861 = vunpack.c.h.b16 %v531
  %v2862 = vunpack.c.l.b16 %v532
  %v2863 = vunpack.c.h.b16 %v532
  %v2864 = vunpack.c.l.b16 %v533
  %v2865 = vunpack.c.h.b16 %v533
  %v2866 = vunpack.c.l.b16 %v534
  %v2867 = vunpack.c.h.b16 %v534
  %v2868 = vunpack.c.l.b16 %v535
  %v2869 = vunpack.c.h.b16 %v535
  %v2870 = vunpack.c.l.b16 %v536
  %v2871 = vunpack.c.h.b16 %v536
  %v2872 = vunpack.c.l.b16 %v537
  %v2873 = vunpack.c.l.b16 %v538
  %v2874 = vunpack.c.h.b16 %v538
  %v2875 = vunpack.c.l.b16 %v539
  %v2876 = vunpack.c.h.b16 %v539
  %v2877 = vunpack.c.l.b16 %v540
  %v2878 = vunpack.c.h.b16 %v540
  %v2879 = vunpack.c.l.b16 %v541
  %v2880 = vunpack.c.h.b16 %v541
  %v2881 = vunpack.c.l.b16 %v542
  %v2882 = vunpack.c.h.b16 %v542
  %v2883 = vunpack.c.l.b16 %v543
  %v2884 = vunpack.c.h.b16 %v543
  %v2885 = vunpack.c.l.b16 %v544
  %v2886 = vunpack.c.h.b16 %v544
  %v2887 = vunpack.c.l.b16 %v545
  %v2888 = vunpack.c.h.b16 %v545
  %v2889 = vunpack.c.l.b16 %v546
  %v2890 = vunpack.c.l.b16 %v547
  %v2891 = vunpack.c.h.b16 %v547
  %v2892 = vunpack.c.l.b16 %v548
  %v2893 = vunpack.c.h.b16 %v548
  %v2894 = vunpack.c.l.b16 %v549
  %v2895 = vunpack.c.h.b16 %v549
  %v2896 = vunpack.c.l.b16 %v550
  %v2897 = vunpack.c.h.b16 %v550
  %v2898 = vunpack.c.l.b16 %v551
  %v2899 = vunpack.c.h.b16 %v551
  %v2900 = vunpack.c.l.b16 %v552
  %v2901 = vunpack.c.h.b16 %v552
  %v2902 = vunpack.c.l.b16 %v553
  %v2903 = vunpack.c.h.b16 %v553
  %v2904 = vunpack.c.l.b16 %v554
  %v2905 = vunpack.c.h.b16 %v554
  %v2906 = vunpack.c.l.b16 %v555
  %v2907 = vunpack.c.l.b16 %v556
  %v2908 = vunpack.c.h.b16 %v556
  %v2909 = vunpack.c.l.b16 %v557
  %v2910 = vunpack.c.h.b16 %v557
  %v2911 = vunpack.c.l.b16 %v558
  %v2912 = vunpack.c.h.b16 %v558
  %v2913 = vunpack.c.l.b16 %v559
  %v2914 = vunpack.c.h.b16 %v559
  %v2915 = vunpack.c.l.b16 %v560
  %v2916 = vunpack.c.h.b16 %v560
  %v2917 = vunpack.c.l.b16 %v561
  %v2918 = vunpack.c.h.b16 %v561
  %v2919 = vunpack.c.l.b16 %v562
  %v2920 = vunpack.c.h.b16 %v562
  %v2921 = vunpack.c.l.b16 %v563
  %v2922 = vunpack.c.h.b16 %v563
  %v2923 = vunpack.c.l.b16 %v564
  %v2924 = vunpack.c.l.b16 %v565
  %v2925 = vunpack.c.h.b16 %v565
  %v2926 = vunpack.c.l.b16 %v566
  %v2927 = vunpack.c.h.b16 %v566
  %v2928 = vunpack.c.l.b16 %v567
  %v2929 = vunpack.c.h.b16 %v567
  %v2930 = vunpack.c.l.b16 %v568
  %v2931 = vunpack.c.h.b16 %v568
  %v2932 = vunpack.c.l.b16 %v569
  %v2933 = vunpack.c.h.b16 %v569
  %v2934 = vunpack.c.l.b16 %v570
  %v2935 = vunpack.c.h.b16 %v570
  %v2936 = vunpack.c.l.b16 %v571
  %v2937 = vunpack.c.h.b16 %v571
  %v2938 = vunpack.c.l.b16 %v572
  %v2939 = vunpack.c.h.b16 %v572
  %v2940 = vunpack.c.l.b16 %v573
  %v2941 = vunpack.c.l.b16 %v574
  %v2942 = vunpack.c.h.b16 %v574
  %v2943 = vunpack.c.l.b16 %v575
  %v2944 = vunpack.c.h.b16 %v575
  %v2945 = vunpack.c.l.b16 %v576
  %v2946 = vunpack.c.h.b16 %v576
  %v2947 = vunpack.c.l.b16 %v577
  %v2948 = vunpack.c.h.b16 %v577
  %v2949 = vunpack.c.l.b16 %v578
  %v2950 = vunpack.c.h.b16 %v578
  %v2951 = vunpack.c.l.b16 %v579
  %v2952 = vunpack.c.h.b16 %v579
  %v2953 = vunpack.c.l.b16 %v580
  %v2954 = vunpack.c.h.b16 %v580
  %v2955 = vunpack.c.l.b16 %v581
  %v2956 = vunpack.c.h.b16 %v581
  %v2957 = vunpack.c.l.b16 %v582
  %v2958 = vunpack.c.l.b16 %v583
  %v2959 = vunpack.c.h.b16 %v583
  %v2960 = vunpack.c.l.b16 %v584
  %v2961 = vunpack.c.h.b16 %v584
  %v2962 = vunpack.c.l.b16 %v585
  %v2963 = vunpack.c.h.b16 %v585
  %v2964 = vunpack.c.l.b16 %v586
  %v2965 = vunpack.c.h.b16 %v586
  %v2966 = vunpack.c.l.b16 %v587
  %v2967 = vunpack.c.h.b16 %v587
  %v2968 = vunpack.c.l.b16 %v588
  %v2969 = vunpack.c.h.b16 %v588
  %v2970 = vunpack.c.l.b16 %v589
  %v2971 = vunpack.c.h.b16 %v589
  %v2972 = vunpack.c.l.b16 %v590
  %v2973 = vunpack.c.h.b16 %v590
  %v2974 = vunpack.c.l.b16 %v591
  %v2975 = vunpack.c.l.b16 %v592
  %v2976 = vunpack.c.h.b16 %v592
  %v2977 = vunpack.c.l.b16 %v593
  %v2978 = vunpack.c.h.b16 %v593
  %v2979 = vunpack.c.l.b16 %v594
  %v2980 = vunpack.c.h.b16 %v594
  %v2981 = vunpack.c.l.b16 %v595
  %v2982 = vunpack.c.h.b16 %v595
  %v2983 = vunpack.c.l.b16 %v596
  %v2984 = vunpack.c.h.b16 %v596
  %v2985 = vunpack.c.l.b16 %v597
  %v2986 = vunpack.c.h.b16 %v597
  %v2987 = vunpack.c.l.b16 %v598
  %v2988 = vunpack.c.h.b16 %v598
  %v2989 = vunpack.c.l.b16 %v599
  %v2990 = vunpack.c.h.b16 %v599
  %v2991 = vunpack.c.l.b16 %v600
  %v2992 = vunpack.c.l.b16 %v601
  %v2993 = vunpack.c.h.b16 %v601
  %v2994 = vunpack.c.l.b16 %v602
  %v2995 = vunpack.c.h.b16 %v602
  %v2996 = vunpack.c.l.b16 %v603
  %v2997 = vunpack.c.h.b16 %v603
  %v2998 = vunpack.c.l.b16 %v604
  %v2999 = vunpack.c.h.b16 %v604
  %v3000 = vunpack.c.l.b16 %v605
  %v3001 = vunpack.c.h.b16 %v605
  %v3002 = vunpack.c.l.b16 %v606
  %v3003 = vunpack.c.h.b16 %v606
  %v3004 = vunpack.c.l.b16 %v607
  %v3005 = vunpack.c.h.b16 %v607
  %v3006 = vunpack.c.l.b16 %v608
  %v3007 = vunpack.c.h.b16 %v608
  %v3008 = vunpack.c.l.b16 %v609
  %v3009 = vunpack.c.l.b16 %v610
  %v3010 = vunpack.c.h.b16 %v610
  %v3011 = vunpack.c.l.b16 %v611
  %v3012 = vunpack.c.h.b16 %v611
  %v3013 = vunpack.c.l.b16 %v612
  %v3014 = vunpack.c.h.b16 %v612
  %v3015 = vunpack.c.l.b16 %v613
  %v3016 = vunpack.c.h.b16 %v613
  %v3017 = vunpack.c.l.b16 %v614
  %v3018 = vunpack.c.h.b16 %v614
  %v3019 = vunpack.c.l.b16 %v615
  %v3020 = vunpack.c.h.b16 %v615
  %v3021 = vunpack.c.l.b16 %v616
  %v3022 = vunpack.c.h.b16 %v616
  %v3023 = vunpack.c.l.b16 %v617
  %v3024 = vunpack.c.h.b16 %v617
  %v3025 = vunpack.c.l.b16 %v618
  %v3026 = vunpack.c.l.b16 %v619
  %v3027 = vunpack.c.h.b16 %v619
  %v3028 = vunpack.c.l.b16 %v620
  %v3029 = vunpack.c.h.b16 %v620
  %v3030 = vunpack.c.l.b16 %v621
  %v3031 = vunpack.c.h.b16 %v621
  %v3032 = vunpack.c.l.b16 %v622
  %v3033 = vunpack.c.h.b16 %v622
  %v3034 = vunpack.c.l.b16 %v623
  %v3035 = vunpack.c.h.b16 %v623
  %v3036 = vunpack.c.l.b16 %v624
  %v3037 = vunpack.c.h.b16 %v624
  %v3038 = vunpack.c.l.b16 %v625
  %v3039 = vunpack.c.h.b16 %v625
  %v3040 = vunpack.c.l.b16 %v626
  %v3041 = vunpack.c.h.b16 %v626
  %v3042 = vunpack.c.l.b16 %v627
  %v3043 = vunpack.c.l.b16 %v628
  %v3044 = vunpack.c.h.b16 %v628
  %v3045 = vunpack.c.l.b16 %v629
  %v3046 = vunpack.c.h.b16 %v629
  %v3047 = vunpack.c.l.b16 %v630
  %v3048 = vunpack.c.h.b16 %v630
  %v3049 = vunpack.c.l.b16 %v631
  %v3050 = vunpack.c.h.b16 %v631
  %v3051 = vunpack.c.l.b16 %v632
  %v3052 = vunpack.c.h.b16 %v632
  %v3053 = vunpack.c.l.b16 %v633
  %v3054 = vunpack.c.h.b16 %v633
  %v3055 = vunpack.c.l.b16 %v634
  %v3056 = vunpack.c.h.b16 %v634
  %v3057 = vunpack.c.l.b16 %v635
  %v3058 = vunpack.c.h.b16 %v635
  %v3059 = vunpack.c.l.b16 %v636
  %v3060 = vunpack.c.l.b16 %v637
  %v3061 = vunpack.c.h.b16 %v637
  %v3062 = vunpack.c.l.b16 %v638
  %v3063 = vunpack.c.h.b16 %v638
  %v3064 = vunpack.c.l.b16 %v639
  %v3065 = vunpack.c.h.b16 %v639
  %v3066 = vunpack.c.l.b16 %v640
  %v3067 = vunpack.c.h.b16 %v640
  %v3068 = vunpack.c.l.b16 %v641
  %v3069 = vunpack.c.h.b16 %v641
  %v3070 = vunpack.c.l.b16 %v642
  %v3071 = vunpack.c.h.b16 %v642
  %v3072 = vunpack.c.l.b16 %v643
  %v3073 = vunpack.c.h.b16 %v643
  %v3074 = vunpack.c.l.b16 %v644
  %v3075 = vunpack.c.h.b16 %v644
  %v3076 = vunpack.c.l.b16 %v645
  %v3077 = vunpack.c.l.b16 %v646
  %v3078 = vunpack.c.h.b16 %v646
  %v3079 = vunpack.c.l.b16 %v647
  %v3080 = vunpack.c.h.b16 %v647
  %v3081 = vunpack.c.l.b16 %v648
  %v3082 = vunpack.c.h.b16 %v648
  %v3083 = vunpack.c.l.b16 %v649
  %v3084 = vunpack.c.h.b16 %v649
  %v3085 = vunpack.c.l.b16 %v650
  %v3086 = vunpack.c.h.b16 %v650
  %v3087 = vunpack.c.l.b16 %v651
  %v3088 = vunpack.c.h.b16 %v651
  %v3089 = vunpack.c.l.b16 %v652
  %v3090 = vunpack.c.h.b16 %v652
  %v3091 = vunpack.c.l.b16 %v653
  %v3092 = vunpack.c.h.b16 %v653
  %v3093 = vunpack.c.l.b16 %v654
  %v3094 = vunpack.c.l.b16 %v655
  %v3095 = vunpack.c.h.b16 %v655
  %v3096 = vunpack.c.l.b16 %v656
  %v3097 = vunpack.c.h.b16 %v656
  %v3098 = vunpack.c.l.b16 %v657
  %v3099 = vunpack.c.h.b16 %v657
  %v3100 = vunpack.c.l.b16 %v658
  %v3101 = vunpack.c.h.b16 %v658
  %v3102 = vunpack.c.l.b16 %v659
  %v3103 = vunpack.c.h.b16 %v659
  %v3104 = vunpack.c.l.b16 %v660
  %v3105 = vunpack.c.h.b16 %v660
  %v3106 = vunpack.c.l.b16 %v661
  %v3107 = vunpack.c.h.b16 %v661
  %v3108 = vunpack.c.l.b16 %v662
  %v3109 = vunpack.c.h.b16 %v662
  %v3110 = vunpack.c.l.b16 %v663
  %v3111 = vunpack.c.l.b16 %v664
  %v3112 = vunpack.c.h.b16 %v664
  %v3113 = vunpack.c.l.b16 %v665
  %v3114 = vunpack.c.h.b16 %v665
  %v3115 = vunpack.c.l.b16 %v666
  %v3116 = vunpack.c.h.b16 %v666
  %v3117 = vunpack.c.l.b16 %v667
  %v3118 = vunpack.c.h.b16 %v667
  %v3119 = vunpack.c.l.b16 %v668
  %v3120 = vunpack.c.h.b16 %v668
  %v3121 = vunpack.c.l.b16 %v669
  %v3122 = vunpack.c.h.b16 %v669
  %v3123 = vunpack.c.l.b16 %v670
  %v3124 = vunpack.c.h.b16 %v670
  %v3125 = vunpack.c.l.b16 %v671
  %v3126 = vunpack.c.h.b16 %v671
  %v3127 = vunpack.c.l.b16 %v672
  %v3128 = vunpack.c.l.b16 %v673
  %v3129 = vunpack.c.h.b16 %v673
  %v3130 = vunpack.c.l.b16 %v674
  %v3131 = vunpack.c.h.b16 %v674
  %v3132 = vunpack.c.l.b16 %v675
  %v3133 = vunpack.c.h.b16 %v675
  %v3134 = vunpack.c.l.b16 %v676
  %v3135 = vunpack.c.h.b16 %v676
  %v3136 = vunpack.c.l.b16 %v677
  %v3137 = vunpack.c.h.b16 %v677
  %v3138 = vunpack.c.l.b16 %v678
  %v3139 = vunpack.c.h.b16 %v678
  %v3140 = vunpack.c.l.b16 %v679
  %v3141 = vunpack.c.h.b16 %v679
  %v3142 = vunpack.c.l.b16 %v680
  %v3143 = vunpack.c.h.b16 %v680
  %v3144 = vunpack.c.l.b16 %v681
  %v3145 = vunpack.c.l.b16 %v682
  %v3146 = vunpack.c.h.b16 %v682
  %v3147 = vunpack.c.l.b16 %v683
  %v3148 = vunpack.c.h.b16 %v683
  %v3149 = vunpack.c.l.b16 %v684
  %v3150 = vunpack.c.h.b16 %v684
  %v3151 = vunpack.c.l.b16 %v685
  %v3152 = vunpack.c.h.b16 %v685
  %v3153 = vunpack.c.l.b16 %v686
  %v3154 = vunpack.c.h.b16 %v686
  %v3155 = vunpack.c.l.b16 %v687
  %v3156 = vunpack.c.h.b16 %v687
  %v3157 = vunpack.c.l.b16 %v688
  %v3158 = vunpack.c.h.b16 %v688
  %v3159 = vunpack.c.l.b16 %v689
  %v3160 = vunpack.c.h.b16 %v689
  %v3161 = vunpack.c.l.b16 %v690
  %v3162 = vunpack.c.l.b16 %v691
  %v3163 = vunpack.c.h.b16 %v691
  %v3164 = vunpack.c.l.b16 %v692
  %v3165 = vunpack.c.h.b16 %v692
  %v3166 = vunpack.c.l.b16 %v693
  %v3167 = vunpack.c.h.b16 %v693
  %v3168 = vunpack.c.l.b16 %v694
  %v3169 = vunpack.c.h.b16 %v694
  %v3170 = vunpack.c.l.b16 %v695
  %v3171 = vunpack.c.h.b16 %v695
  %v3172 = vunpack.c.l.b16 %v696
  %v3173 = vunpack.c.h.b16 %v696
  %v3174 = vunpack.c.l.b16 %v697
  %v3175 = vunpack.c.h.b16 %v697
  %v3176 = vunpack.c.l.b16 %v698
  %v3177 = vunpack.c.h.b16 %v698
  %v3178 = vunpack.c.l.b16 %v699
  %v3179 = vunpack.c.l.b16 %v700
  %v3180 = vunpack.c.h.b16 %v700
  %v3181 = vunpack.c.l.b16 %v701
  %v3182 = vunpack.c.h.b16 %v701
  %v3183 = vunpack.c.l.b16 %v702
  %v3184 = vunpack.c.h.b16 %v702
  %v3185 = vunpack.c.l.b16 %v703
  %v3186 = vunpack.c.h.b16 %v703
  %v3187 = vunpack.c.l.b16 %v704
  %v3188 = vunpack.c.h.b16 %v704
  %v3189 = vunpack.c.l.b16 %v705
  %v3190 = vunpack.c.h.b16 %v705
  %v3191 = vunpack.c.l.b16 %v706
  %v3192 = vunpack.c.h.b16 %v706
  %v3193 = vunpack.c.l.b16 %v707
  %v3194 = vunpack.c.h.b16 %v707
  %v3195 = vunpack.c.l.b16 %v708
  %v3196 = vunpack.c.l.b16 %v709
  %v3197 = vunpack.c.h.b16 %v709
  %v3198 = vunpack.c.l.b16 %v710
  %v3199 = vunpack.c.h.b16 %v710
  %v3200 = vunpack.c.l.b16 %v711
  %v3201 = vunpack.c.h.b16 %v711
  %v3202 = vunpack.c.l.b16 %v712
  %v3203 = vunpack.c.h.b16 %v712
  %v3204 = vunpack.c.l.b16 %v713
  %v3205 = vunpack.c.h.b16 %v713
  %v3206 = vunpack.c.l.b16 %v714
  %v3207 = vunpack.c.h.b16 %v714
  %v3208 = vunpack.c.l.b16 %v715
  %v3209 = vunpack.c.h.b16 %v715
  %v3210 = vunpack.c.l.b16 %v716
  %v3211 = vunpack.c.h.b16 %v716
  %v3212 = vunpack.c.l.b16 %v717
  %v3213 = vunpack.c.l.b16 %v718
  %v3214 = vunpack.c.h.b16 %v718
  %v3215 = vunpack.c.l.b16 %v719
  %v3216 = vunpack.c.h.b16 %v719
  %v3217 = vunpack.c.l.b16 %v720
  %v3218 = vunpack.c.h.b16 %v720
  %v3219 = vunpack.c.l.b16 %v721
  %v3220 = vunpack.c.h.b16 %v721
  %v3221 = vunpack.c.l.b16 %v722
  %v3222 = vunpack.c.h.b16 %v722
  %v3223 = vunpack.c.l.b16 %v723
  %v3224 = vunpack.c.h.b16 %v723
  %v3225 = vunpack.c.l.b16 %v724
  %v3226 = vunpack.c.h.b16 %v724
  %v3227 = vunpack.c.l.b16 %v725
  %v3228 = vunpack.c.h.b16 %v725
  %v3229 = vunpack.c.l.b16 %v726
  %v3230 = vunpack.c.l.b16 %v727
  %v3231 = vunpack.c.h.b16 %v727
  %v3232 = vunpack.c.l.b16 %v728
  %v3233 = vunpack.c.h.b16 %v728
  %v3234 = vunpack.c.l.b16 %v729
  %v3235 = vunpack.c.h.b16 %v729
  %v3236 = vunpack.c.l.b16 %v730
  %v3237 = vunpack.c.h.b16 %v730
  %v3238 = vunpack.c.l.b16 %v731
  %v3239 = vunpack.c.h.b16 %v731
  %v3240 = vunpack.c.l.b16 %v732
  %v3241 = vunpack.c.h.b16 %v732
  %v3242 = vunpack.c.l.b16 %v733
  %v3243 = vunpack.c.h.b16 %v733
  %v3244 = vunpack.c.l.b16 %v734
  %v3245 = vunpack.c.h.b16 %v734
  %v3246 = vunpack.c.l.b16 %v735
  %v3247 = vunpack.c.l.b16 %v736
  %v3248 = vunpack.c.h.b16 %v736
  %v3249 = vunpack.c.l.b16 %v737
  %v3250 = vunpack.c.h.b16 %v737
  %v3251 = vunpack.c.l.b16 %v738
  %v3252 = vunpack.c.h.b16 %v738
  %v3253 = vunpack.c.l.b16 %v739
  %v3254 = vunpack.c.h.b16 %v739
  %v3255 = vunpack.c.l.b16 %v740
  %v3256 = vunpack.c.h.b16 %v740
  %v3257 = vunpack.c.l.b16 %v741
  %v3258 = vunpack.c.h.b16 %v741
  %v3259 = vunpack.c.l.b16 %v742
  %v3260 = vunpack.c.h.b16 %v742
  %v3261 = vunpack.c.l.b16 %v743
  %v3262 = vunpack.c.h.b16 %v743
  %v3263 = vunpack.c.l.b16 %v744
  %v3264 = vunpack.c.l.b16 %v745
  %v3265 = vunpack.c.h.b16 %v745
  %v3266 = vunpack.c.l.b16 %v746
  %v3267 = vunpack.c.h.b16 %v746
  %v3268 = vunpack.c.l.b16 %v747
  %v3269 = vunpack.c.h.b16 %v747
  %v3270 = vunpack.c.l.b16 %v748
  %v3271 = vunpack.c.h.b16 %v748
  %v3272 = vunpack.c.l.b16 %v749
  %v3273 = vunpack.c.h.b16 %v749
  %v3274 = vunpack.c.l.b16 %v750
  %v3275 = vunpack.c.h.b16 %v750
  %v3276 = vunpack.c.l.b16 %v751
  %v3277 = vunpack.c.h.b16 %v751
  %v3278 = vunpack.c.l.b16 %v752
  %v3279 = vunpack.c.h.b16 %v752
  %v3280 = vunpack.c.l.b16 %v753
  %v3281 = vunpack.c.l.b16 %v754
  %v3282 = vunpack.c.h.b16 %v754
  %v3283 = vunpack.c.l.b16 %v755
  %v3284 = vunpack.c.h.b16 %v755
  %v3285 = vunpack.c.l.b16 %v756
  %v3286 = vunpack.c.h.b16 %v756
  %v3287 = vunpack.c.l.b16 %v757
  %v3288 = vunpack.c.h.b16 %v757
  %v3289 = vunpack.c.l.b16 %v758
  %v3290 = vunpack.c.h.b16 %v758
  %v3291 = vunpack.c.l.b16 %v759
  %v3292 = vunpack.c.h.b16 %v759
  %v3293 = vunpack.c.l.b16 %v760
  %v3294 = vunpack.c.h.b16 %v760
  %v3295 = vunpack.c.l.b16 %v761
  %v3296 = vunpack.c.h.b16 %v761
  %v3297 = vunpack.c.l.b16 %v762
  %v3298 = vunpack.c.l.b16 %v763
  %v3299 = vunpack.c.h.b16 %v763
  %v3300 = vunpack.c.l.b16 %v764
  %v3301 = vunpack.c.h.b16 %v764
  %v3302 = vunpack.c.l.b16 %v765
  %v3303 = vunpack.c.h.b16 %v765
  %v3304 = vunpack.c.l.b16 %v766
  %v3305 = vunpack.c.h.b16 %v766
  %v3306 = vunpack.c.l.b16 %v767
  %v3307 = vunpack.c.h.b16 %v767
  %v3308 = vunpack.c.l.b16 %v768
  %v3309 = vunpack.c.h.b16 %v768
  %v3310 = vunpack.c.l.b16 %v769
  %v3311 = vunpack.c.h.b16 %v769
  %v3312 = vunpack.c.l.b16 %v770
  %v3313 = vunpack.c.h.b16 %v770
  %v3314 = vunpack.c.l.b16 %v771
  %v3315 = vunpack.c.l.b16 %v772
  %v3316 = vunpack.c.h.b16 %v772
  %v3317 = vunpack.c.l.b16 %v773
  %v3318 = vunpack.c.h.b16 %v773
  %v3319 = vunpack.c.l.b16 %v774
  %v3320 = vunpack.c.h.b16 %v774
  %v3321 = vunpack.c.l.b16 %v775
  %v3322 = vunpack.c.h.b16 %v775
  %v3323 = vunpack.c.l.b16 %v776
  %v3324 = vunpack.c.h.b16 %v776
  %v3325 = vunpack.c.l.b16 %v777
  %v3326 = vunpack.c.h.b16 %v777
  %v3327 = vunpack.c.l.b16 %v778
  %v3328 = vunpack.c.h.b16 %v778
  %v3329 = vunpack.c.l.b16 %v779
  %v3330 = vunpack.c.h.b16 %v779
  %v3331 = vunpack.c.l.b16 %v780
  %v3332 = vunpack.c.l.b16 %v781
  %v3333 = vunpack.c.h.b16 %v781
  %v3334 = vunpack.c.l.b16 %v782
  %v3335 = vunpack.c.h.b16 %v782
  %v3336 = vunpack.c.l.b16 %v783
  %v3337 = vunpack.c.h.b16 %v783
  %v3338 = vunpack.c.l.b16 %v784
  %v3339 = vunpack.c.h.b16 %v784
  %v3340 = vunpack.c.l.b16 %v785
  %v3341 = vunpack.c.h.b16 %v785
  %v3342 = vunpack.c.l.b16 %v786
  %v3343 = vunpack.c.h.b16 %v786
  %v3344 = vunpack.c.l.b16 %v787
  %v3345 = vunpack.c.h.b16 %v787
  %v3346 = vunpack.c.l.b16 %v788
  %v3347 = vunpack.c.h.b16 %v788
  %v3348 = vunpack.c.l.b16 %v789
  %v3349 = vunpack.c.l.b16 %v790
  %v3350 = vunpack.c.h.b16 %v790
  %v3351 = vunpack.c.l.b16 %v791
  %v3352 = vunpack.c.h.b16 %v791
  %v3353 = vunpack.c.l.b16 %v792
  %v3354 = vunpack.c.h.b16 %v792
  %v3355 = vunpack.c.l.b16 %v793
  %v3356 = vunpack.c.h.b16 %v793
  %v3357 = vunpack.c.l.b16 %v794
  %v3358 = vunpack.c.h.b16 %v794
  %v3359 = vunpack.c.l.b16 %v795
  %v3360 = vunpack.c.h.b16 %v795
  %v3361 = vunpack.c.l.b16 %v796
  %v3362 = vunpack.c.h.b16 %v796
  %v3363 = vunpack.c.l.b16 %v797
  %v3364 = vunpack.c.h.b16 %v797
  %v3365 = vunpack.c.l.b16 %v798
  %v3366 = vunpack.c.l.b16 %v799
  %v3367 = vunpack.c.h.b16 %v799
  %v3368 = vunpack.c.l.b16 %v800
  %v3369 = vunpack.c.h.b16 %v800
  %v3370 = vunpack.c.l.b16 %v801
  %v3371 = vunpack.c.h.b16 %v801
  %v3372 = vunpack.c.l.b16 %v802
  %v3373 = vunpack.c.h.b16 %v802
  %v3374 = vunpack.c.l.b16 %v803
  %v3375 = vunpack.c.h.b16 %v803
  %v3376 = vunpack.c.l.b16 %v804
  %v3377 = vunpack.c.h.b16 %v804
  %v3378 = vunpack.c.l.b16 %v805
  %v3379 = vunpack.c.h.b16 %v805
  %v3380 = vunpack.c.l.b16 %v806
  %v3381 = vunpack.c.h.b16 %v806
  %v3382 = vunpack.c.l.b16 %v807
  %v3383 = vunpack.c.l.b16 %v808
  %v3384 = vunpack.c.h.b16 %v808
  %v3385 = vunpack.c.l.b16 %v809
  %v3386 = vunpack.c.h.b16 %v809
  %v3387 = vunpack.c.l.b16 %v810
  %v3388 = vunpack.c.h.b16 %v810
  %v3389 = vunpack.c.l.b16 %v811
  %v3390 = vunpack.c.h.b16 %v811
  %v3391 = vunpack.c.l.b16 %v812
  %v3392 = vunpack.c.h.b16 %v812
  %v3393 = vunpack.c.l.b16 %v813
  %v3394 = vunpack.c.h.b16 %v813
  %v3395 = vunpack.c.l.b16 %v814
  %v3396 = vunpack.c.h.b16 %v814
  %v3397 = vunpack.c.l.b16 %v815
  %v3398 = vunpack.c.h.b16 %v815
  %v3399 = vunpack.c.l.b16 %v816
  %v3400 = vunpack.c.l.b16 %v817
  %v3401 = vunpack.c.h.b16 %v817
  %v3402 = vunpack.c.l.b16 %v818
  %v3403 = vunpack.c.h.b16 %v818
  %v3404 = vunpack.c.l.b16 %v819
  %v3405 = vunpack.c.h.b16 %v819
  %v3406 = vunpack.c.l.b16 %v820
  %v3407 = vunpack.c.h.b16 %v820
  %v3408 = vunpack.c.l.b16 %v821
  %v3409 = vunpack.c.h.b16 %v821
  %v3410 = vunpack.c.l.b16 %v822
  %v3411 = vunpack.c.h.b16 %v822
  %v3412 = vunpack.c.l.b16 %v823
  %v3413 = vunpack.c.h.b16 %v823
  %v3414 = vunpack.c.l.b16 %v824
  %v3415 = vunpack.c.h.b16 %v824
  %v3416 = vunpack.c.l.b16 %v825
  %v3417 = vunpack.c.l.b16 %v826
  %v3418 = vunpack.c.h.b16 %v826
  %v3419 = vunpack.c.l.b16 %v827
  %v3420 = vunpack.c.h.b16 %v827
  %v3421 = vunpack.c.l.b16 %v828
  %v3422 = vunpack.c.h.b16 %v828
  %v3423 = vunpack.c.l.b16 %v829
  %v3424 = vunpack.c.h.b16 %v829
  %v3425 = vunpack.c.l.b16 %v830
  %v3426 = vunpack.c.h.b16 %v830
  %v3427 = vunpack.c.l.b16 %v831
  %v3428 = vunpack.c.h.b16 %v831
  %v3429 = vunpack.c.l.b16 %v832
  %v3430 = vunpack.c.h.b16 %v832
  %v3431 = vunpack.c.l.b16 %v833
  %v3432 = vunpack.c.h.b16 %v833
  %v3433 = vunpack.c.l.b16 %v834
  %v3434 = vunpack.c.l.b16 %v835
  %v3435 = vunpack.c.h.b16 %v835
  %v3436 = vunpack.c.l.b16 %v836
  %v3437 = vunpack.c.h.b16 %v836
  %v3438 = vunpack.c.l.b16 %v837
  %v3439 = vunpack.c.h.b16 %v837
  %v3440 = vunpack.c.l.b16 %v838
  %v3441 = vunpack.c.h.b16 %v838
  %v3442 = vunpack.c.l.b16 %v839
  %v3443 = vunpack.c.h.b16 %v839
  %v3444 = vunpack.c.l.b16 %v840
  %v3445 = vunpack.c.h.b16 %v840
  %v3446 = vunpack.c.l.b16 %v841
  %v3447 = vunpack.c.h.b16 %v841
  %v3448 = vunpack.c.l.b16 %v842
  %v3449 = vunpack.c.h.b16 %v842
  %v3450 = vunpack.c.l.b16 %v843
  %v3451 = vunpack.c.l.b16 %v844
  %v3452 = vunpack.c.h.b16 %v844
  %v3453 = vunpack.c.l.b16 %v845
  %v3454 = vunpack.c.h.b16 %v845
  %v3455 = vunpack.c.l.b16 %v846
  %v3456 = vunpack.c.h.b16 %v846
  %v3457 = vunpack.c.l.b16 %v847
  %v3458 = vunpack.c.h.b16 %v847
  %v3459 = vunpack.c.l.b16 %v848
  %v3460 = vunpack.c.h.b16 %v848
  %v3461 = vunpack.c.l.b16 %v849
  %v3462 = vunpack.c.h.b16 %v849
  %v3463 = vunpack.c.l.b16 %v850
  %v3464 = vunpack.c.h.b16 %v850
  %v3465 = vunpack.c.l.b16 %v851
  %v3466 = vunpack.c.h.b16 %v851
  %v3467 = vunpack.c.l.b16 %v852
  %v3468 = vunpack.c.l.b16 %v853
  %v3469 = vunpack.c.h.b16 %v853
  %v3470 = vunpack.c.l.b16 %v854
  %v3471 = vunpack.c.h.b16 %v854
  %v3472 = vunpack.c.l.b16 %v855
  %v3473 = vunpack.c.h.b16 %v855
  %v3474 = vunpack.c.l.b16 %v856
  %v3475 = vunpack.c.h.b16 %v856
  %v3476 = vunpack.c.l.b16 %v857
  %v3477 = vunpack.c.h.b16 %v857
  %v3478 = vunpack.c.l.b16 %v858
  %v3479 = vunpack.c.h.b16 %v858
  %v3480 = vunpack.c.l.b16 %v859
  %v3481 = vunpack.c.h.b16 %v859
  %v3482 = vunpack.c.l.b16 %v860
  %v3483 = vunpack.c.h.b16 %v860
  %v3484 = vunpack.c.l.b16 %v861
  %v3485 = vunpack.c.l.b16 %v862
  %v3486 = vunpack.c.h.b16 %v862
  %v3487 = vunpack.c.l.b16 %v863
  %v3488 = vunpack.c.h.b16 %v863
  %v3489 = vunpack.c.l.b16 %v864
  %v3490 = vunpack.c.h.b16 %v864
  %v3491 = vunpack.c.l.b16 %v865
  %v3492 = vunpack.c.h.b16 %v865
  %v3493 = vunpack.c.l.b16 %v866
  %v3494 = vunpack.c.h.b16 %v866
  %v3495 = vunpack.c.l.b16 %v867
  %v3496 = vunpack.c.h.b16 %v867
  %v3497 = vunpack.c.l.b16 %v868
  %v3498 = vunpack.c.h.b16 %v868
  %v3499 = vunpack.c.l.b16 %v869
  %v3500 = vunpack.c.h.b16 %v869
  %v3501 = vunpack.c.l.b16 %v870
  %v3502 = vunpack.c.l.b16 %v871
  %v3503 = vunpack.c.h.b16 %v871
  %v3504 = vunpack.c.l.b16 %v872
  %v3505 = vunpack.c.h.b16 %v872
  %v3506 = vunpack.c.l.b16 %v873
  %v3507 = vunpack.c.h.b16 %v873
  %v3508 = vunpack.c.l.b16 %v874
  %v3509 = vunpack.c.h.b16 %v874
  %v3510 = vunpack.c.l.b16 %v875
  %v3511 = vunpack.c.h.b16 %v875
  %v3512 = vunpack.c.l.b16 %v876
  %v3513 = vunpack.c.h.b16 %v876
  %v3514 = vunpack.c.l.b16 %v877
  %v3515 = vunpack.c.h.b16 %v877
  %v3516 = vunpack.c.l.b16 %v878
  %v3517 = vunpack.c.h.b16 %v878
  %v3518 = vunpack.c.l.b16 %v879
  %v3519 = vunpack.c.l.b16 %v880
  %v3520 = vunpack.c.h.b16 %v880
  %v3521 = vunpack.c.l.b16 %v881
  %v3522 = vunpack.c.h.b16 %v881
  %v3523 = vunpack.c.l.b16 %v882
  %v3524 = vunpack.c.h.b16 %v882
  %v3525 = vunpack.c.l.b16 %v883
  %v3526 = vunpack.c.h.b16 %v883
  %v3527 = vunpack.c.l.b16 %v884
  %v3528 = vunpack.c.h.b16 %v884
  %v3529 = vunpack.c.l.b16 %v885
  %v3530 = vunpack.c.h.b16 %v885
  %v3531 = vunpack.c.l.b16 %v886
  %v3532 = vunpack.c.h.b16 %v886
  %v3533 = vunpack.c.l.b16 %v887
  %v3534 = vunpack.c.h.b16 %v887
  %v3535 = vunpack.c.l.b16 %v888
  %v3536 = vunpack.c.l.b16 %v889
  %v3537 = vunpack.c.h.b16 %v889
  %v3538 = vunpack.c.l.b16 %v890
  %v3539 = vunpack.c.h.b16 %v890
  %v3540 = vunpack.c.l.b16 %v891
  %v3541 = vunpack.c.h.b16 %v891
  %v3542 = vunpack.c.l.b16 %v892
  %v3543 = vunpack.c.h.b16 %v892
  %v3544 = vunpack.c.l.b16 %v893
  %v3545 = vunpack.c.h.b16 %v893
  %v3546 = vunpack.c.l.b16 %v894
  %v3547 = vunpack.c.h.b16 %v894
  %v3548 = vunpack.c.l.b16 %v895
  %v3549 = vunpack.c.h.b16 %v895
  %v3550 = vunpack.c.l.b16 %v896
  %v3551 = vunpack.c.h.b16 %v896
  %v3552 = vunpack.c.l.b16 %v897
  %v3553 = vunpack.c.l.b16 %v898
  %v3554 = vunpack.c.h.b16 %v898
  %v3555 = vunpack.c.l.b16 %v899
  %v3556 = vunpack.c.h.b16 %v899
  %v3557 = vunpack.c.l.b16 %v900
  %v3558 = vunpack.c.h.b16 %v900
  %v3559 = vunpack.c.l.b16 %v901
  %v3560 = vunpack.c.h.b16 %v901
  %v3561 = vunpack.c.l.b16 %v902
  %v3562 = vunpack.c.h.b16 %v902
  %v3563 = vunpack.c.l.b16 %v903
  %v3564 = vunpack.c.h.b16 %v903
  %v3565 = vunpack.c.l.b16 %v904
  %v3566 = vunpack.c.h.b16 %v904
  %v3567 = vunpack.c.l.b16 %v905
  %v3568 = vunpack.c.h.b16 %v905
  %v3569 = vunpack.c.l.b16 %v906
  %v3570 = vpack.c.b16 %v1921, %v1904
  %v3571 = vpack.c.b16 %v1922, %v1905
  %v3572 = vpack.c.b16 %v1923, %v1906
  %v3573 = vpack.c.b16 %v1924, %v1907
  %v3574 = vpack.c.b16 %v1925, %v1908
  %v3575 = vpack.c.b16 %v1926, %v1909
  %v3576 = vpack.c.b16 %v1927, %v1910
  %v3577 = vpack.c.b16 %v1928, %v1911
  %v3578 = vpack.c.b16 %v1929, %v1912
  %v3579 = vpack.c.b16 %v1930, %v1913
  %v3580 = vpack.c.b16 %v1931, %v1914
  %v3581 = vpack.c.b16 %v1932, %v1915
  %v3582 = vpack.c.b16 %v1933, %v1916
  %v3583 = vpack.c.b16 %v1934, %v1917
  %v3584 = vpack.c.b16 %v1935, %v1918
  %v3585 = vpack.c.b16 %v1936, %v1919
  %v3586 = vpack.c.b16 %v1937, %v1920
  %v3587 = vpack.c.b16 %v1955, %v1938
  %v3588 = vpack.c.b16 %v1956, %v1939
  %v3589 = vpack.c.b16 %v1957, %v1940
  %v3590 = vpack.c.b16 %v1958, %v1941
  %v3591 = vpack.c.b16 %v1959, %v1942
  %v3592 = vpack.c.b16 %v1960, %v1943
  %v3593 = vpack.c.b16 %v1961, %v1944
  %v3594 = vpack.c.b16 %v1962, %v1945
  %v3595 = vpack.c.b16 %v1963, %v1946
  %v3596 = vpack.c.b16 %v1964, %v1947
  %v3597 = vpack.c.b16 %v1965, %v1948
  %v3598 = vpack.c.b16 %v1966, %v1949
  %v3599 = vpack.c.b16 %v1967, %v1950
  %v3600 = vpack.c.b16 %v1968, %v1951
  %v3601 = vpack.c.b16 %v1969, %v1952
  %v3602 = vpack.c.b16 %v1970, %v1953
  %v3603 = vpack.c.b16 %v1971, %v1954
  %v3604 = vpack.c.b16 %v1989, %v1972
  %v3605 = vpack.c.b16 %v1990, %v1973
  %v3606 = vpack.c.b16 %v1991, %v1974
  %v3607 = vpack.c.b16 %v1992, %v1975
  %v3608 = vpack.c.b16 %v1993, %v1976
  %v3609 = vpack.c.b16 %v1994, %v1977
  %v3610 = vpack.c.b16 %v1995, %v1978
  %v3611 = vpack.c.b16 %v1996, %v1979
  %v3612 = vpack.c.b16 %v1997, %v1980
  %v3613 = vpack.c.b16 %v1998, %v1981
  %v3614 = vpack.c.b16 %v1999, %v1982
  %v3615 = vpack.c.b16 %v2000, %v1983
  %v3616 = vpack.c.b16 %v2001, %v1984
  %v3617 = vpack.c.b16 %v2002, %v1985
  %v3618 = vpack.c.b16 %v2003, %v1986
  %v3619 = vpack.c.b16 %v2004, %v1987
  %v3620 = vpack.c.b16 %v2005, %v1988
  %v3621 = vpack.c.b16 %v2023, %v2006
  %v3622 = vpack.c.b16 %v2024, %v2007
  %v3623 = vpack.c.b16 %v2025, %v2008
  %v3624 = vpack.c.b16 %v2026, %v2009
  %v3625 = vpack.c.b16 %v2027, %v2010
  %v3626 = vpack.c.b16 %v2028, %v2011
  %v3627 = vpack.c.b16 %v2029, %v2012
  %v3628 = vpack.c.b16 %v2030, %v2013
  %v3629 = vpack.c.b16 %v2031, %v2014
  %v3630 = vpack.c.b16 %v2032, %v2015
  %v3631 = vpack.c.b16 %v2033, %v2016
  %v3632 = vpack.c.b16 %v2034, %v2017
  %v3633 = vpack.c.b16 %v2035, %v2018
  %v3634 = vpack.c.b16 %v2036, %v2019
  %v3635 = vpack.c.b16 %v2037, %v2020
  %v3636 = vpack.c.b16 %v2038, %v2021
  %v3637 = vpack.c.b16 %v2039, %v2022
  %v3638 = vpack.c.b16 %v2057, %v2040
  %v3639 = vpack.c.b16 %v2058, %v2041
  %v3640 = vpack.c.b16 %v2059, %v2042
  %v3641 = vpack.c.b16 %v2060, %v2043
  %v3642 = vpack.c.b16 %v2061, %v2044
  %v3643 = vpack.c.b16 %v2062, %v2045
  %v3644 = vpack.c.b16 %v2063, %v2046
  %v3645 = vpack.c.b16 %v2064, %v2047
  %v3646 = vpack.c.b16 %v2065, %v2048
  %v3647 = vpack.c.b16 %v2066, %v2049
  %v3648 = vpack.c.b16 %v2067, %v2050
  %v3649 = vpack.c.b16 %v2068, %v2051
  %v3650 = vpack.c.b16 %v2069, %v2052
  %v3651 = vpack.c.b16 %v2070, %v2053
  %v3652 = vpack.c.b16 %v2071, %v2054
  %v3653 = vpack.c.b16 %v2072, %v2055
  %v3654 = vpack.c.b16 %v2073, %v2056
  %v3655 = vpack.c.b16 %v2091, %v2074
  %v3656 = vpack.c.b16 %v2092, %v2075
  %v3657 = vpack.c.b16 %v2093, %v2076
  %v3658 = vpack.c.b16 %v2094, %v2077
  %v3659 = vpack.c.b16 %v2095, %v2078
  %v3660 = vpack.c.b16 %v2096, %v2079
  %v3661 = vpack.c.b16 %v2097, %v2080
  %v3662 = vpack.c.b16 %v2098, %v2081
  %v3663 = vpack.c.b16 %v2099, %v2082
  %v3664 = vpack.c.b16 %v2100, %v2083
  %v3665 = vpack.c.b16 %v2101, %v2084
  %v3666 = vpack.c.b16 %v2102, %v2085
  %v3667 = vpack.c.b16 %v2103, %v2086
  %v3668 = vpack.c.b16 %v2104, %v2087
  %v3669 = vpack.c.b16 %v2105, %v2088
  %v3670 = vpack.c.b16 %v2106, %v2089
  %v3671 = vpack.c.b16 %v2107, %v2090
  %v3672 = vpack.c.b16 %v2125, %v2108
  %v3673 = vpack.c.b16 %v2126, %v2109
  %v3674 = vpack.c.b16 %v2127, %v2110
  %v3675 = vpack.c.b16 %v2128, %v2111
  %v3676 = vpack.c.b16 %v2129, %v2112
  %v3677 = vpack.c.b16 %v2130, %v2113
  %v3678 = vpack.c.b16 %v2131, %v2114
  %v3679 = vpack.c.b16 %v2132, %v2115
  %v3680 = vpack.c.b16 %v2133, %v2116
  %v3681 = vpack.c.b16 %v2134, %v2117
  %v3682 = vpack.c.b16 %v2135, %v2118
  %v3683 = vpack.c.b16 %v2136, %v2119
  %v3684 = vpack.c.b16 %v2137, %v2120
  %v3685 = vpack.c.b16 %v2138, %v2121
  %v3686 = vpack.c.b16 %v2139, %v2122
  %v3687 = vpack.c.b16 %v2140, %v2123
  %v3688 = vpack.c.b16 %v2141, %v2124
  %v3689 = vpack.c.b16 %v2159, %v2142
  %v3690 = vpack.c.b16 %v2160, %v2143
  %v3691 = vpack.c.b16 %v2161, %v2144
  %v3692 = vpack.c.b16 %v2162, %v2145
  %v3693 = vpack.c.b16 %v2163, %v2146
  %v3694 = vpack.c.b16 %v2164, %v2147
  %v3695 = vpack.c.b16 %v2165, %v2148
  %v3696 = vpack.c.b16 %v2166, %v2149
  %v3697 = vpack.c.b16 %v2167, %v2150
  %v3698 = vpack.c.b16 %v2168, %v2151
  %v3699 = vpack.c.b16 %v2169, %v2152
  %v3700 = vpack.c.b16 %v2170, %v2153
  %v3701 = vpack.c.b16 %v2171, %v2154
  %v3702 = vpack.c.b16 %v2172, %v2155
  %v3703 = vpack.c.b16 %v2173, %v2156
  %v3704 = vpack.c.b16 %v2174, %v2157
  %v3705 = vpack.c.b16 %v2175, %v2158
  %v3706 = vpack.c.b16 %v2193, %v2176
  %v3707 = vpack.c.b16 %v2194, %v2177
  %v3708 = vpack.c.b16 %v2195, %v2178
  %v3709 = vpack.c.b16 %v2196, %v2179
  %v3710 = vpack.c.b16 %v2197, %v2180
  %v3711 = vpack.c.b16 %v2198, %v2181
  %v3712 = vpack.c.b16 %v2199, %v2182
  %v3713 = vpack.c.b16 %v2200, %v2183
  %v3714 = vpack.c.b16 %v2201, %v2184
  %v3715 = vpack.c.b16 %v2202, %v2185
  %v3716 = vpack.c.b16 %v2203, %v2186
  %v3717 = vpack.c.b16 %v2204, %v2187
  %v3718 = vpack.c.b16 %v2205, %v2188
  %v3719 = vpack.c.b16 %v2206, %v2189
  %v3720 = vpack.c.b16 %v2207, %v2190
  %v3721 = vpack.c.b16 %v2208, %v2191
  %v3722 = vpack.c.b16 %v2209, %v2192
  %v3723 = vpack.c.b16 %v2227, %v2210
  %v3724 = vpack.c.b16 %v2228, %v2211
  %v3725 = vpack.c.b16 %v2229, %v2212
  %v3726 = vpack.c.b16 %v2230, %v2213
  %v3727 = vpack.c.b16 %v2231, %v2214
  %v3728 = vpack.c.b16 %v2232, %v2215
  %v3729 = vpack.c.b16 %v2233, %v2216
  %v3730 = vpack.c.b16 %v2234, %v2217
  %v3731 = vpack.c.b16 %v2235, %v2218
  %v3732 = vpack.c.b16 %v2236, %v2219
  %v3733 = vpack.c.b16 %v2237, %v2220
  %v3734 = vpack.c.b16 %v2238, %v2221
  %v3735 = vpack.c.b16 %v2239, %v2222
  %v3736 = vpack.c.b16 %v2240, %v2223
  %v3737 = vpack.c.b16 %v2241, %v2224
  %v3738 = vpack.c.b16 %v2242, %v2225
  %v3739 = vpack.c.b16 %v2243, %v2226
  %v3740 = vpack.c.b16 %v2261, %v2244
  %v3741 = vpack.c.b16 %v2262, %v2245
  %v3742 = vpack.c.b16 %v2263, %v2246
  %v3743 = vpack.c.b16 %v2264, %v2247
  %v3744 = vpack.c.b16 %v2265, %v2248
  %v3745 = vpack.c.b16 %v2266, %v2249
  %v3746 = vpack.c.b16 %v2267, %v2250
  %v3747 = vpack.c.b16 %v2268, %v2251
  %v3748 = vpack.c.b16 %v2269, %v2252
  %v3749 = vpack.c.b16 %v2270, %v2253
  %v3750 = vpack.c.b16 %v2271, %v2254
  %v3751 = vpack.c.b16 %v2272, %v2255
  %v3752 = vpack.c.b16 %v2273, %v2256
  %v3753 = vpack.c.b16 %v2274, %v2257
  %v3754 = vpack.c.b16 %v2275, %v2258
  %v3755 = vpack.c.b16 %v2276, %v2259
  %v3756 = vpack.c.b16 %v2277, %v2260
  %v3757 = vpack.c.b16 %v2295, %v2278
  %v3758 = vpack.c.b16 %v2296, %v2279
  %v3759 = vpack.c.b16 %v2297, %v2280
  %v3760 = vpack.c.b16 %v2298, %v2281
  %v3761 = vpack.c.b16 %v2299, %v2282
  %v3762 = vpack.c.b16 %v2300, %v2283
  %v3763 = vpack.c.b16 %v2301, %v2284
  %v3764 = vpack.c.b16 %v2302, %v2285
  %v3765 = vpack.c.b16 %v2303, %v2286
  %v3766 = vpack.c.b16 %v2304, %v2287
  %v3767 = vpack.c.b16 %v2305, %v2288
  %v3768 = vpack.c.b16 %v2306, %v2289
  %v3769 = vpack.c.b16 %v2307, %v2290
  %v3770 = vpack.c.b16 %v2308, %v2291
  %v3771 = vpack.c.b16 %v2309, %v2292
  %v3772 = vpack.c.b16 %v2310, %v2293
  %v3773 = vpack.c.b16 %v2311, %v2294
  %v3774 = vpack.c.b16 %v2329, %v2312
  %v3775 = vpack.c.b16 %v2330, %v2313
  %v3776 = vpack.c.b16 %v2331, %v2314
  %v3777 = vpack.c.b16 %v2332, %v2315
  %v3778 = vpack.c.b16 %v2333, %v2316
  %v3779 = vpack.c.b16 %v2334, %v2317
  %v3780 = vpack.c.b16 %v2335, %v2318
  %v3781 = vpack.c.b16 %v2336, %v2319
  %v3782 = vpack.c.b16 %v2337, %v2320
  %v3783 = vpack.c.b16 %v2338, %v2321
  %v3784 = vpack.c.b16 %v2339, %v2322
  %v3785 = vpack.c.b16 %v2340, %v2323
  %v3786 = vpack.c.b16 %v2341, %v2324
  %v3787 = vpack.c.b16 %v2342, %v2325
  %v3788 = vpack.c.b16 %v2343, %v2326
  %v3789 = vpack.c.b16 %v2344, %v2327
  %v3790 = vpack.c.b16 %v2345, %v2328
  %v3791 = vpack.c.b16 %v2363, %v2346
  %v3792 = vpack.c.b16 %v2364, %v2347
  %v3793 = vpack.c.b16 %v2365, %v2348
  %v3794 = vpack.c.b16 %v2366, %v2349
  %v3795 = vpack.c.b16 %v2367, %v2350
  %v3796 = vpack.c.b16 %v2368, %v2351
  %v3797 = vpack.c.b16 %v2369, %v2352
  %v3798 = vpack.c.b16 %v2370, %v2353
  %v3799 = vpack.c.b16 %v2371, %v2354
  %v3800 = vpack.c.b16 %v2372, %v2355
  %v3801 = vpack.c.b16 %v2373, %v2356
  %v3802 = vpack.c.b16 %v2374, %v2357
  %v3803 = vpack.c.b16 %v2375, %v2358
  %v3804 = vpack.c.b16 %v2376, %v2359
  %v3805 = vpack.c.b16 %v2377, %v2360
  %v3806 = vpack.c.b16 %v2378, %v2361
  %v3807 = vpack.c.b16 %v2379, %v2362
  %v3808 = vpack.c.b16 %v2397, %v2380
  %v3809 = vpack.c.b16 %v2398, %v2381
  %v3810 = vpack.c.b16 %v2399, %v2382
  %v3811 = vpack.c.b16 %v2400, %v2383
  %v3812 = vpack.c.b16 %v2401, %v2384
  %v3813 = vpack.c.b16 %v2402, %v2385
  %v3814 = vpack.c.b16 %v2403, %v2386
  %v3815 = vpack.c.b16 %v2404, %v2387
  %v3816 = vpack.c.b16 %v2405, %v2388
  %v3817 = vpack.c.b16 %v2406, %v2389
  %v3818 = vpack.c.b16 %v2407, %v2390
  %v3819 = vpack.c.b16 %v2408, %v2391
  %v3820 = vpack.c.b16 %v2409, %v2392
  %v3821 = vpack.c.b16 %v2410, %v2393
  %v3822 = vpack.c.b16 %v2411, %v2394
  %v3823 = vpack.c.b16 %v2412, %v2395
  %v3824 = vpack.c.b16 %v2413, %v2396
  %v3825 = vpack.c.b16 %v2431, %v2414
  %v3826 = vpack.c.b16 %v2432, %v2415
  %v3827 = vpack.c.b16 %v2433, %v2416
  %v3828 = vpack.c.b16 %v2434, %v2417
  %v3829 = vpack.c.b16 %v2435, %v2418
  %v3830 = vpack.c.b16 %v2436, %v2419
  %v3831 = vpack.c.b16 %v2437, %v2420
  %v3832 = vpack.c.b16 %v2438, %v2421
  %v3833 = vpack.c.b16 %v2439, %v2422
  %v3834 = vpack.c.b16 %v2440, %v2423
  %v3835 = vpack.c.b16 %v2441, %v2424
  %v3836 = vpack.c.b16 %v2442, %v2425
  %v3837 = vpack.c.b16 %v2443, %v2426
  %v3838 = vpack.c.b16 %v2444, %v2427
  %v3839 = vpack.c.b16 %v2445, %v2428
  %v3840 = vpack.c.b16 %v2446, %v2429
  %v3841 = vpack.c.b16 %v2447, %v2430
  %v3842 = vpack.c.b16 %v2465, %v2448
  %v3843 = vpack.c.b16 %v2466, %v2449
  %v3844 = vpack.c.b16 %v2467, %v2450
  %v3845 = vpack.c.b16 %v2468, %v2451
  %v3846 = vpack.c.b16 %v2469, %v2452
  %v3847 = vpack.c.b16 %v2470, %v2453
  %v3848 = vpack.c.b16 %v2471, %v2454
  %v3849 = vpack.c.b16 %v2472, %v2455
  %v3850 = vpack.c.b16 %v2473, %v2456
  %v3851 = vpack.c.b16 %v2474, %v2457
  %v3852 = vpack.c.b16 %v2475, %v2458
  %v3853 = vpack.c.b16 %v2476, %v2459
  %v3854 = vpack.c.b16 %v2477, %v2460
  %v3855 = vpack.c.b16 %v2478, %v2461
  %v3856 = vpack.c.b16 %v2479, %v2462
  %v3857 = vpack.c.b16 %v2480, %v2463
  %v3858 = vpack.c.b16 %v2481, %v2464
  %v3859 = vpack.c.b16 %v2499, %v2482
  %v3860 = vpack.c.b16 %v2500, %v2483
  %v3861 = vpack.c.b16 %v2501, %v2484
  %v3862 = vpack.c.b16 %v2502, %v2485
  %v3863 = vpack.c.b16 %v2503, %v2486
  %v3864 = vpack.c.b16 %v2504, %v2487
  %v3865 = vpack.c.b16 %v2505, %v2488
  %v3866 = vpack.c.b16 %v2506, %v2489
  %v3867 = vpack.c.b16 %v2507, %v2490
  %v3868 = vpack.c.b16 %v2508, %v2491
  %v3869 = vpack.c.b16 %v2509, %v2492
  %v3870 = vpack.c.b16 %v2510, %v2493
  %v3871 = vpack.c.b16 %v2511, %v2494
  %v3872 = vpack.c.b16 %v2512, %v2495
  %v3873 = vpack.c.b16 %v2513, %v2496
  %v3874 = vpack.c.b16 %v2514, %v2497
  %v3875 = vpack.c.b16 %v2515, %v2498
  %v3876 = vpack.c.b16 %v2533, %v2516
  %v3877 = vpack.c.b16 %v2534, %v2517
  %v3878 = vpack.c.b16 %v2535, %v2518
  %v3879 = vpack.c.b16 %v2536, %v2519
  %v3880 = vpack.c.b16 %v2537, %v2520
  %v3881 = vpack.c.b16 %v2538, %v2521
  %v3882 = vpack.c.b16 %v2539, %v2522
  %v3883 = vpack.c.b16 %v2540, %v2523
  %v3884 = vpack.c.b16 %v2541, %v2524
  %v3885 = vpack.c.b16 %v2542, %v2525
  %v3886 = vpack.c.b16 %v2543, %v2526
  %v3887 = vpack.c.b16 %v2544, %v2527
  %v3888 = vpack.c.b16 %v2545, %v2528
  %v3889 = vpack.c.b16 %v2546, %v2529
  %v3890 = vpack.c.b16 %v2547, %v2530
  %v3891 = vpack.c.b16 %v2548, %v2531
  %v3892 = vpack.c.b16 %v2549, %v2532
  %v3893 = vpack.c.b16 %v2567, %v2550
  %v3894 = vpack.c.b16 %v2568, %v2551
  %v3895 = vpack.c.b16 %v2569, %v2552
  %v3896 = vpack.c.b16 %v2570, %v2553
  %v3897 = vpack.c.b16 %v2571, %v2554
  %v3898 = vpack.c.b16 %v2572, %v2555
  %v3899 = vpack.c.b16 %v2573, %v2556
  %v3900 = vpack.c.b16 %v2574, %v2557
  %v3901 = vpack.c.b16 %v2575, %v2558
  %v3902 = vpack.c.b16 %v2576, %v2559
  %v3903 = vpack.c.b16 %v2577, %v2560
  %v3904 = vpack.c.b16 %v2578, %v2561
  %v3905 = vpack.c.b16 %v2579, %v2562
  %v3906 = vpack.c.b16 %v2580, %v2563
  %v3907 = vpack.c.b16 %v2581, %v2564
  %v3908 = vpack.c.b16 %v2582, %v2565
  %v3909 = vpack.c.b16 %v2583, %v2566
  %v3910 = vpack.c.b16 %v2601, %v2584
  %v3911 = vpack.c.b16 %v2602, %v2585
  %v3912 = vpack.c.b16 %v2603, %v2586
  %v3913 = vpack.c.b16 %v2604, %v2587
  %v3914 = vpack.c.b16 %v2605, %v2588
  %v3915 = vpack.c.b16 %v2606, %v2589
  %v3916 = vpack.c.b16 %v2607, %v2590
  %v3917 = vpack.c.b16 %v2608, %v2591
  %v3918 = vpack.c.b16 %v2609, %v2592
  %v3919 = vpack.c.b16 %v2610, %v2593
  %v3920 = vpack.c.b16 %v2611, %v2594
  %v3921 = vpack.c.b16 %v2612, %v2595
  %v3922 = vpack.c.b16 %v2613, %v2596
  %v3923 = vpack.c.b16 %v2614, %v2597
  %v3924 = vpack.c.b16 %v2615, %v2598
  %v3925 = vpack.c.b16 %v2616, %v2599
  %v3926 = vpack.c.b16 %v2617, %v2600
  %v3927 = vpack.c.b16 %v2635, %v2618
  %v3928 = vpack.c.b16 %v2636, %v2619
  %v3929 = vpack.c.b16 %v2637, %v2620
  %v3930 = vpack.c.b16 %v2638, %v2621
  %v3931 = vpack.c.b16 %v2639, %v2622
  %v3932 = vpack.c.b16 %v2640, %v2623
  %v3933 = vpack.c.b16 %v2641, %v2624
  %v3934 = vpack.c.b16 %v2642, %v2625
  %v3935 = vpack.c.b16 %v2643, %v2626
  %v3936 = vpack.c.b16 %v2644, %v2627
  %v3937 = vpack.c.b16 %v2645, %v2628
  %v3938 = vpack.c.b16 %v2646, %v2629
  %v3939 = vpack.c.b16 %v2647, %v2630
  %v3940 = vpack.c.b16 %v2648, %v2631
  %v3941 = vpack.c.b16 %v2649, %v2632
  %v3942 = vpack.c.b16 %v2650, %v2633
  %v3943 = vpack.c.b16 %v2651, %v2634
  %v3944 = vpack.c.b16 %v2669, %v2652
  %v3945 = vpack.c.b16 %v2670, %v2653
  %v3946 = vpack.c.b16 %v2671, %v2654
  %v3947 = vpack.c.b16 %v2672, %v2655
  %v3948 = vpack.c.b16 %v2673, %v2656
  %v3949 = vpack.c.b16 %v2674, %v2657
  %v3950 = vpack.c.b16 %v2675, %v2658
  %v3951 = vpack.c.b16 %v2676, %v2659
  %v3952 = vpack.c.b16 %v2677, %v2660
  %v3953 = vpack.c.b16 %v2678, %v2661
  %v3954 = vpack.c.b16 %v2679, %v2662
  %v3955 = vpack.c.b16 %v2680, %v2663
  %v3956 = vpack.c.b16 %v2681, %v2664
  %v3957 = vpack.c.b16 %v2682, %v2665
  %v3958 = vpack.c.b16 %v2683, %v2666
  %v3959 = vpack.c.b16 %v2684, %v2667
  %v3960 = vpack.c.b16 %v2685, %v2668
  %v3961 = vpack.c.b16 %v2703, %v2686
  %v3962 = vpack.c.b16 %v2704, %v2687
  %v3963 = vpack.c.b16 %v2705, %v2688
  %v3964 = vpack.c.b16 %v2706, %v2689
  %v3965 = vpack.c.b16 %v2707, %v2690
  %v3966 = vpack.c.b16 %v2708, %v2691
  %v3967 = vpack.c.b16 %v2709, %v2692
  %v3968 = vpack.c.b16 %v2710, %v2693
  %v3969 = vpack.c.b16 %v2711, %v2694
  %v3970 = vpack.c.b16 %v2712, %v2695
  %v3971 = vpack.c.b16 %v2713, %v2696
  %v3972 = vpack.c.b16 %v2714, %v2697
  %v3973 = vpack.c.b16 %v2715, %v2698
  %v3974 = vpack.c.b16 %v2716, %v2699
  %v3975 = vpack.c.b16 %v2717, %v2700
  %v3976 = vpack.c.b16 %v2718, %v2701
  %v3977 = vpack.c.b16 %v2719, %v2702
  %v3978 = vpack.c.b16 %v2737, %v2720
  %v3979 = vpack.c.b16 %v2738, %v2721
  %v3980 = vpack.c.b16 %v2739, %v2722
  %v3981 = vpack.c.b16 %v2740, %v2723
  %v3982 = vpack.c.b16 %v2741, %v2724
  %v3983 = vpack.c.b16 %v2742, %v2725
  %v3984 = vpack.c.b16 %v2743, %v2726
  %v3985 = vpack.c.b16 %v2744, %v2727
  %v3986 = vpack.c.b16 %v2745, %v2728
  %v3987 = vpack.c.b16 %v2746, %v2729
  %v3988 = vpack.c.b16 %v2747, %v2730
  %v3989 = vpack.c.b16 %v2748, %v2731
  %v3990 = vpack.c.b16 %v2749, %v2732
  %v3991 = vpack.c.b16 %v2750, %v2733
  %v3992 = vpack.c.b16 %v2751, %v2734
  %v3993 = vpack.c.b16 %v2752, %v2735
  %v3994 = vpack.c.b16 %v2753, %v2736
  %v3995 = vpack.c.b16 %v2771, %v2754
  %v3996 = vpack.c.b16 %v2772, %v2755
  %v3997 = vpack.c.b16 %v2773, %v2756
  %v3998 = vpack.c.b16 %v2774, %v2757
  %v3999 = vpack.c.b16 %v2775, %v2758
  %v4000 = vpack.c.b16 %v2776, %v2759
  %v4001 = vpack.c.b16 %v2777, %v2760
  %v4002 = vpack.c.b16 %v2778, %v2761
  %v4003 = vpack.c.b16 %v2779, %v2762
  %v4004 = vpack.c.b16 %v2780, %v2763
  %v4005 = vpack.c.b16 %v2781, %v2764
  %v4006 = vpack.c.b16 %v2782, %v2765
  %v4007 = vpack.c.b16 %v2783, %v2766
  %v4008 = vpack.c.b16 %v2784, %v2767
  %v4009 = vpack.c.b16 %v2785, %v2768
  %v4010 = vpack.c.b16 %v2786, %v2769
  %v4011 = vpack.c.b16 %v2787, %v2770
  %v4012 = vpack.c.b16 %v2805, %v2788
  %v4013 = vpack.c.b16 %v2806, %v2789
  %v4014 = vpack.c.b16 %v2807, %v2790
  %v4015 = vpack.c.b16 %v2808, %v2791
  %v4016 = vpack.c.b16 %v2809, %v2792
  %v4017 = vpack.c.b16 %v2810, %v2793
  %v4018 = vpack.c.b16 %v2811, %v2794
  %v4019 = vpack.c.b16 %v2812, %v2795
  %v4020 = vpack.c.b16 %v2813, %v2796
  %v4021 = vpack.c.b16 %v2814, %v2797
  %v4022 = vpack.c.b16 %v2815, %v2798
  %v4023 = vpack.c.b16 %v2816, %v2799
  %v4024 = vpack.c.b16 %v2817, %v2800
  %v4025 = vpack.c.b16 %v2818, %v2801
  %v4026 = vpack.c.b16 %v2819, %v2802
  %v4027 = vpack.c.b16 %v2820, %v2803
  %v4028 = vpack.c.b16 %v2821, %v2804
  %v4029 = vpack.c.b16 %v2839, %v2822
  %v4030 = vpack.c.b16 %v2840, %v2823
  %v4031 = vpack.c.b16 %v2841, %v2824
  %v4032 = vpack.c.b16 %v2842, %v2825
  %v4033 = vpack.c.b16 %v2843, %v2826
  %v4034 = vpack.c.b16 %v2844, %v2827
  %v4035 = vpack.c.b16 %v2845, %v2828
  %v4036 = vpack.c.b16 %v2846, %v2829
  %v4037 = vpack.c.b16 %v2847, %v2830
  %v4038 = vpack.c.b16 %v2848, %v2831
  %v4039 = vpack.c.b16 %v2849, %v2832
  %v4040 = vpack.c.b16 %v2850, %v2833
  %v4041 = vpack.c.b16 %v2851, %v2834
  %v4042 = vpack.c.b16 %v2852, %v2835
  %v4043 = vpack.c.b16 %v2853, %v2836
  %v4044 = vpack.c.b16 %v2854, %v2837
  %v4045 = vpack.c.b16 %v2855, %v2838
  %v4046 = vpack.c.b16 %v2873, %v2856
  %v4047 = vpack.c.b16 %v2874, %v2857
  %v4048 = vpack.c.b16 %v2875, %v2858
  %v4049 = vpack.c.b16 %v2876, %v2859
  %v4050 = vpack.c.b16 %v2877, %v2860
  %v4051 = vpack.c.b16 %v2878, %v2861
  %v4052 = vpack.c.b16 %v2879, %v2862
  %v4053 = vpack.c.b16 %v2880, %v2863
  %v4054 = vpack.c.b16 %v2881, %v2864
  %v4055 = vpack.c.b16 %v2882, %v2865
  %v4056 = vpack.c.b16 %v2883, %v2866
  %v4057 = vpack.c.b16 %v2884, %v2867
  %v4058 = vpack.c.b16 %v2885, %v2868
  %v4059 = vpack.c.b16 %v2886, %v2869
  %v4060 = vpack.c.b16 %v2887, %v2870
  %v4061 = vpack.c.b16 %v2888, %v2871
  %v4062 = vpack.c.b16 %v2889, %v2872
  %v4063 = vpack.c.b16 %v2907, %v2890
  %v4064 = vpack.c.b16 %v2908, %v2891
  %v4065 = vpack.c.b16 %v2909, %v2892
  %v4066 = vpack.c.b16 %v2910, %v2893
  %v4067 = vpack.c.b16 %v2911, %v2894
  %v4068 = vpack.c.b16 %v2912, %v2895
  %v4069 = vpack.c.b16 %v2913, %v2896
  %v4070 = vpack.c.b16 %v2914, %v2897
  %v4071 = vpack.c.b16 %v2915, %v2898
  %v4072 = vpack.c.b16 %v2916, %v2899
  %v4073 = vpack.c.b16 %v2917, %v2900
  %v4074 = vpack.c.b16 %v2918, %v2901
  %v4075 = vpack.c.b16 %v2919, %v2902
  %v4076 = vpack.c.b16 %v2920, %v2903
  %v4077 = vpack.c.b16 %v2921, %v2904
  %v4078 = vpack.c.b16 %v2922, %v2905
  %v4079 = vpack.c.b16 %v2923, %v2906
  %v4080 = vpack.c.b16 %v2941, %v2924
  %v4081 = vpack.c.b16 %v2942, %v2925
  %v4082 = vpack.c.b16 %v2943, %v2926
  %v4083 = vpack.c.b16 %v2944, %v2927
  %v4084 = vpack.c.b16 %v2945, %v2928
  %v4085 = vpack.c.b16 %v2946, %v2929
  %v4086 = vpack.c.b16 %v2947, %v2930
  %v4087 = vpack.c.b16 %v2948, %v2931
  %v4088 = vpack.c.b16 %v2949, %v2932
  %v4089 = vpack.c.b16 %v2950, %v2933
  %v4090 = vpack.c.b16 %v2951, %v2934
  %v4091 = vpack.c.b16 %v2952, %v2935
  %v4092 = vpack.c.b16 %v2953, %v2936
  %v4093 = vpack.c.b16 %v2954, %v2937
  %v4094 = vpack.c.b16 %v2955, %v2938
  %v4095 = vpack.c.b16 %v2956, %v2939
  %v4096 = vpack.c.b16 %v2957, %v2940
  %v4097 = vpack.c.b16 %v2975, %v2958
  %v4098 = vpack.c.b16 %v2976, %v2959
  %v4099 = vpack.c.b16 %v2977, %v2960
  %v4100 = vpack.c.b16 %v2978, %v2961
  %v4101 = vpack.c.b16 %v2979, %v2962
  %v4102 = vpack.c.b16 %v2980, %v2963
  %v4103 = vpack.c.b16 %v2981, %v2964
  %v4104 = vpack.c.b16 %v2982, %v2965
  %v4105 = vpack.c.b16 %v2983, %v2966
  %v4106 = vpack.c.b16 %v2984, %v2967
  %v4107 = vpack.c.b16 %v2985, %v2968
  %v4108 = vpack.c.b16 %v2986, %v2969
  %v4109 = vpack.c.b16 %v2987, %v2970
  %v4110 = vpack.c.b16 %v2988, %v2971
  %v4111 = vpack.c.b16 %v2989, %v2972
  %v4112 = vpack.c.b16 %v2990, %v2973
  %v4113 = vpack.c.b16 %v2991, %v2974
  %v4114 = vpack.c.b16 %v3009, %v2992
  %v4115 = vpack.c.b16 %v3010, %v2993
  %v4116 = vpack.c.b16 %v3011, %v2994
  %v4117 = vpack.c.b16 %v3012, %v2995
  %v4118 = vpack.c.b16 %v3013, %v2996
  %v4119 = vpack.c.b16 %v3014, %v2997
  %v4120 = vpack.c.b16 %v3015, %v2998
  %v4121 = vpack.c.b16 %v3016, %v2999
  %v4122 = vpack.c.b16 %v3017, %v3000
  %v4123 = vpack.c.b16 %v3018, %v3001
  %v4124 = vpack.c.b16 %v3019, %v3002
  %v4125 = vpack.c.b16 %v3020, %v3003
  %v4126 = vpack.c.b16 %v3021, %v3004
  %v4127 = vpack.c.b16 %v3022, %v3005
  %v4128 = vpack.c.b16 %v3023, %v3006
  %v4129 = vpack.c.b16 %v3024, %v3007
  %v4130 = vpack.c.b16 %v3025, %v3008
  %v4131 = vpack.c.b16 %v3043, %v3026
  %v4132 = vpack.c.b16 %v3044, %v3027
  %v4133 = vpack.c.b16 %v3045, %v3028
  %v4134 = vpack.c.b16 %v3046, %v3029
  %v4135 = vpack.c.b16 %v3047, %v3030
  %v4136 = vpack.c.b16 %v3048, %v3031
  %v4137 = vpack.c.b16 %v3049, %v3032
  %v4138 = vpack.c.b16 %v3050, %v3033
  %v4139 = vpack.c.b16 %v3051, %v3034
  %v4140 = vpack.c.b16 %v3052, %v3035
  %v4141 = vpack.c.b16 %v3053, %v3036
  %v4142 = vpack.c.b16 %v3054, %v3037
  %v4143 = vpack.c.b16 %v3055, %v3038
  %v4144 = vpack.c.b16 %v3056, %v3039
  %v4145 = vpack.c.b16 %v3057, %v3040
  %v4146 = vpack.c.b16 %v3058, %v3041
  %v4147 = vpack.c.b16 %v3059, %v3042
  %v4148 = vpack.c.b16 %v3077, %v3060
  %v4149 = vpack.c.b16 %v3078, %v3061
  %v4150 = vpack.c.b16 %v3079, %v3062
  %v4151 = vpack.c.b16 %v3080, %v3063
  %v4152 = vpack.c.b16 %v3081, %v3064
  %v4153 = vpack.c.b16 %v3082, %v3065
  %v4154 = vpack.c.b16 %v3083, %v3066
  %v4155 = vpack.c.b16 %v3084, %v3067
  %v4156 = vpack.c.b16 %v3085, %v3068
  %v4157 = vpack.c.b16 %v3086, %v3069
  %v4158 = vpack.c.b16 %v3087, %v3070
  %v4159 = vpack.c.b16 %v3088, %v3071
  %v4160 = vpack.c.b16 %v3089, %v3072
  %v4161 = vpack.c.b16 %v3090, %v3073
  %v4162 = vpack.c.b16 %v3091, %v3074
  %v4163 = vpack.c.b16 %v3092, %v3075
  %v4164 = vpack.c.b16 %v3093, %v3076
  %v4165 = vpack.c.b16 %v3111, %v3094
  %v4166 = vpack.c.b16 %v3112, %v3095
  %v4167 = vpack.c.b16 %v3113, %v3096
  %v4168 = vpack.c.b16 %v3114, %v3097
  %v4169 = vpack.c.b16 %v3115, %v3098
  %v4170 = vpack.c.b16 %v3116, %v3099
  %v4171 = vpack.c.b16 %v3117, %v3100
  %v4172 = vpack.c.b16 %v3118, %v3101
  %v4173 = vpack.c.b16 %v3119, %v3102
  %v4174 = vpack.c.b16 %v3120, %v3103
  %v4175 = vpack.c.b16 %v3121, %v3104
  %v4176 = vpack.c.b16 %v3122, %v3105
  %v4177 = vpack.c.b16 %v3123, %v3106
  %v4178 = vpack.c.b16 %v3124, %v3107
  %v4179 = vpack.c.b16 %v3125, %v3108
  %v4180 = vpack.c.b16 %v3126, %v3109
  %v4181 = vpack.c.b16 %v3127, %v3110
  %v4182 = vpack.c.b16 %v3145, %v3128
  %v4183 = vpack.c.b16 %v3146, %v3129
  %v4184 = vpack.c.b16 %v3147, %v3130
  %v4185 = vpack.c.b16 %v3148, %v3131
  %v4186 = vpack.c.b16 %v3149, %v3132
  %v4187 = vpack.c.b16 %v3150, %v3133
  %v4188 = vpack.c.b16 %v3151, %v3134
  %v4189 = vpack.c.b16 %v3152, %v3135
  %v4190 = vpack.c.b16 %v3153, %v3136
  %v4191 = vpack.c.b16 %v3154, %v3137
  %v4192 = vpack.c.b16 %v3155, %v3138
  %v4193 = vpack.c.b16 %v3156, %v3139
  %v4194 = vpack.c.b16 %v3157, %v3140
  %v4195 = vpack.c.b16 %v3158, %v3141
  %v4196 = vpack.c.b16 %v3159, %v3142
  %v4197 = vpack.c.b16 %v3160, %v3143
  %v4198 = vpack.c.b16 %v3161, %v3144
  %v4199 = vpack.c.b16 %v3179, %v3162
  %v4200 = vpack.c.b16 %v3180, %v3163
  %v4201 = vpack.c.b16 %v3181, %v3164
  %v4202 = vpack.c.b16 %v3182, %v3165
  %v4203 = vpack.c.b16 %v3183, %v3166
  %v4204 = vpack.c.b16 %v3184, %v3167
  %v4205 = vpack.c.b16 %v3185, %v3168
  %v4206 = vpack.c.b16 %v3186, %v3169
  %v4207 = vpack.c.b16 %v3187, %v3170
  %v4208 = vpack.c.b16 %v3188, %v3171
  %v4209 = vpack.c.b16 %v3189, %v3172
  %v4210 = vpack.c.b16 %v3190, %v3173
  %v4211 = vpack.c.b16 %v3191, %v3174
  %v4212 = vpack.c.b16 %v3192, %v3175
  %v4213 = vpack.c.b16 %v3193, %v3176
  %v4214 = vpack.c.b16 %v3194, %v3177
  %v4215 = vpack.c.b16 %v3195, %v3178
  %v4216 = vpack.c.b16 %v3213, %v3196
  %v4217 = vpack.c.b16 %v3214, %v3197
  %v4218 = vpack.c.b16 %v3215, %v3198
  %v4219 = vpack.c.b16 %v3216, %v3199
  %v4220 = vpack.c.b16 %v3217, %v3200
  %v4221 = vpack.c.b16 %v3218, %v3201
  %v4222 = vpack.c.b16 %v3219, %v3202
  %v4223 = vpack.c.b16 %v3220, %v3203
  %v4224 = vpack.c.b16 %v3221, %v3204
  %v4225 = vpack.c.b16 %v3222, %v3205
  %v4226 = vpack.c.b16 %v3223, %v3206
  %v4227 = vpack.c.b16 %v3224, %v3207
  %v4228 = vpack.c.b16 %v3225, %v3208
  %v4229 = vpack.c.b16 %v3226, %v3209
  %v4230 = vpack.c.b16 %v3227, %v3210
  %v4231 = vpack.c.b16 %v3228, %v3211
  %v4232 = vpack.c.b16 %v3229, %v3212
  %v4233 = vpack.c.b16 %v3247, %v3230
  %v4234 = vpack.c.b16 %v3248, %v3231
  %v4235 = vpack.c.b16 %v3249, %v3232
  %v4236 = vpack.c.b16 %v3250, %v3233
  %v4237 = vpack.c.b16 %v3251, %v3234
  %v4238 = vpack.c.b16 %v3252, %v3235
  %v4239 = vpack.c.b16 %v3253, %v3236
  %v4240 = vpack.c.b16 %v3254, %v3237
  %v4241 = vpack.c.b16 %v3255, %v3238
  %v4242 = vpack.c.b16 %v3256, %v3239
  %v4243 = vpack.c.b16 %v3257, %v3240
  %v4244 = vpack.c.b16 %v3258, %v3241
  %v4245 = vpack.c.b16 %v3259, %v3242
  %v4246 = vpack.c.b16 %v3260, %v3243
  %v4247 = vpack.c.b16 %v3261, %v3244
  %v4248 = vpack.c.b16 %v3262, %v3245
  %v4249 = vpack.c.b16 %v3263, %v3246
  %v4250 = vpack.c.b16 %v3281, %v3264
  %v4251 = vpack.c.b16 %v3282, %v3265
  %v4252 = vpack.c.b16 %v3283, %v3266
  %v4253 = vpack.c.b16 %v3284, %v3267
  %v4254 = vpack.c.b16 %v3285, %v3268
  %v4255 = vpack.c.b16 %v3286, %v3269
  %v4256 = vpack.c.b16 %v3287, %v3270
  %v4257 = vpack.c.b16 %v3288, %v3271
  %v4258 = vpack.c.b16 %v3289, %v3272
  %v4259 = vpack.c.b16 %v3290, %v3273
  %v4260 = vpack.c.b16 %v3291, %v3274
  %v4261 = vpack.c.b16 %v3292, %v3275
  %v4262 = vpack.c.b16 %v3293, %v3276
  %v4263 = vpack.c.b16 %v3294, %v3277
  %v4264 = vpack.c.b16 %v3295, %v3278
  %v4265 = vpack.c.b16 %v3296, %v3279
  %v4266 = vpack.c.b16 %v3297, %v3280
  %v4267 = vpack.c.b16 %v3315, %v3298
  %v4268 = vpack.c.b16 %v3316, %v3299
  %v4269 = vpack.c.b16 %v3317, %v3300
  %v4270 = vpack.c.b16 %v3318, %v3301
  %v4271 = vpack.c.b16 %v3319, %v3302
  %v4272 = vpack.c.b16 %v3320, %v3303
  %v4273 = vpack.c.b16 %v3321, %v3304
  %v4274 = vpack.c.b16 %v3322, %v3305
  %v4275 = vpack.c.b16 %v3323, %v3306
  %v4276 = vpack.c.b16 %v3324, %v3307
  %v4277 = vpack.c.b16 %v3325, %v3308
  %v4278 = vpack.c.b16 %v3326, %v3309
  %v4279 = vpack.c.b16 %v3327, %v3310
  %v4280 = vpack.c.b16 %v3328, %v3311
  %v4281 = vpack.c.b16 %v3329, %v3312
  %v4282 = vpack.c.b16 %v3330, %v3313
  %v4283 = vpack.c.b16 %v3331, %v3314
  %v4284 = vpack.c.b16 %v3349, %v3332
  %v4285 = vpack.c.b16 %v3350, %v3333
  %v4286 = vpack.c.b16 %v3351, %v3334
  %v4287 = vpack.c.b16 %v3352, %v3335
  %v4288 = vpack.c.b16 %v3353, %v3336
  %v4289 = vpack.c.b16 %v3354, %v3337
  %v4290 = vpack.c.b16 %v3355, %v3338
  %v4291 = vpack.c.b16 %v3356, %v3339
  %v4292 = vpack.c.b16 %v3357, %v3340
  %v4293 = vpack.c.b16 %v3358, %v3341
  %v4294 = vpack.c.b16 %v3359, %v3342
  %v4295 = vpack.c.b16 %v3360, %v3343
  %v4296 = vpack.c.b16 %v3361, %v3344
  %v4297 = vpack.c.b16 %v3362, %v3345
  %v4298 = vpack.c.b16 %v3363, %v3346
  %v4299 = vpack.c.b16 %v3364, %v3347
  %v4300 = vpack.c.b16 %v3365, %v3348
  %v4301 = vpack.c.b16 %v3383, %v3366
  %v4302 = vpack.c.b16 %v3384, %v3367
  %v4303 = vpack.c.b16 %v3385, %v3368
  %v4304 = vpack.c.b16 %v3386, %v3369
  %v4305 = vpack.c.b16 %v3387, %v3370
  %v4306 = vpack.c.b16 %v3388, %v3371
  %v4307 = vpack.c.b16 %v3389, %v3372
  %v4308 = vpack.c.b16 %v3390, %v3373
  %v4309 = vpack.c.b16 %v3391, %v3374
  %v4310 = vpack.c.b16 %v3392, %v3375
  %v4311 = vpack.c.b16 %v3393, %v3376
  %v4312 = vpack.c.b16 %v3394, %v3377
  %v4313 = vpack.c.b16 %v3395, %v3378
  %v4314 = vpack.c.b16 %v3396, %v3379
  %v4315 = vpack.c.b16 %v3397, %v3380
  %v4316 = vpack.c.b16 %v3398, %v3381
  %v4317 = vpack.c.b16 %v3399, %v3382
  %v4318 = vpack.c.b16 %v3417, %v3400
  %v4319 = vpack.c.b16 %v3418, %v3401
  %v4320 = vpack.c.b16 %v3419, %v3402
  %v4321 = vpack.c.b16 %v3420, %v3403
  %v4322 = vpack.c.b16 %v3421, %v3404
  %v4323 = vpack.c.b16 %v3422, %v3405
  %v4324 = vpack.c.b16 %v3423, %v3406
  %v4325 = vpack.c.b16 %v3424, %v3407
  %v4326 = vpack.c.b16 %v3425, %v3408
  %v4327 = vpack.c.b16 %v3426, %v3409
  %v4328 = vpack.c.b16 %v3427, %v3410
  %v4329 = vpack.c.b16 %v3428, %v3411
  %v4330 = vpack.c.b16 %v3429, %v3412
  %v4331 = vpack.c.b16 %v3430, %v3413
  %v4332 = vpack.c.b16 %v3431, %v3414
  %v4333 = vpack.c.b16 %v3432, %v3415
  %v4334 = vpack.c.b16 %v3433, %v3416
  %v4335 = vpack.c.b16 %v3451, %v3434
  %v4336 = vpack.c.b16 %v3452, %v3435
  %v4337 = vpack.c.b16 %v3453, %v3436
  %v4338 = vpack.c.b16 %v3454, %v3437
  %v4339 = vpack.c.b16 %v3455, %v3438
  %v4340 = vpack.c.b16 %v3456, %v3439
  %v4341 = vpack.c.b16 %v3457, %v3440
  %v4342 = vpack.c.b16 %v3458, %v3441
  %v4343 = vpack.c.b16 %v3459, %v3442
  %v4344 = vpack.c.b16 %v3460, %v3443
  %v4345 = vpack.c.b16 %v3461, %v3444
  %v4346 = vpack.c.b16 %v3462, %v3445
  %v4347 = vpack.c.b16 %v3463, %v3446
  %v4348 = vpack.c.b16 %v3464, %v3447
  %v4349 = vpack.c.b16 %v3465, %v3448
  %v4350 = vpack.c.b16 %v3466, %v3449
  %v4351 = vpack.c.b16 %v3467, %v3450
  %v4352 = vpack.c.b16 %v3485, %v3468
  %v4353 = vpack.c.b16 %v3486, %v3469
  %v4354 = vpack.c.b16 %v3487, %v3470
  %v4355 = vpack.c.b16 %v3488, %v3471
  %v4356 = vpack.c.b16 %v3489, %v3472
  %v4357 = vpack.c.b16 %v3490, %v3473
  %v4358 = vpack.c.b16 %v3491, %v3474
  %v4359 = vpack.c.b16 %v3492, %v3475
  %v4360 = vpack.c.b16 %v3493, %v3476
  %v4361 = vpack.c.b16 %v3494, %v3477
  %v4362 = vpack.c.b16 %v3495, %v3478
  %v4363 = vpack.c.b16 %v3496, %v3479
  %v4364 = vpack.c.b16 %v3497, %v3480
  %v4365 = vpack.c.b16 %v3498, %v3481
  %v4366 = vpack.c.b16 %v3499, %v3482
  %v4367 = vpack.c.b16 %v3500, %v3483
  %v4368 = vpack.c.b16 %v3501, %v3484
  %v4369 = vpack.c.b16 %v3519, %v3502
  %v4370 = vpack.c.b16 %v3520, %v3503
  %v4371 = vpack.c.b16 %v3521, %v3504
  %v4372 = vpack.c.b16 %v3522, %v3505
  %v4373 = vpack.c.b16 %v3523, %v3506
  %v4374 = vpack.c.b16 %v3524, %v3507
  %v4375 = vpack.c.b16 %v3525, %v3508
  %v4376 = vpack.c.b16 %v3526, %v3509
  %v4377 = vpack.c.b16 %v3527, %v3510
  %v4378 = vpack.c.b16 %v3528, %v3511
  %v4379 = vpack.c.b16 %v3529, %v3512
  %v4380 = vpack.c.b16 %v3530, %v3513
  %v4381 = vpack.c.b16 %v3531, %v3514
  %v4382 = vpack.c.b16 %v3532, %v3515
  %v4383 = vpack.c.b16 %v3533, %v3516
  %v4384 = vpack.c.b16 %v3534, %v3517
  %v4385 = vpack.c.b16 %v3535, %v3518
  %v4386 = vpack.c.b16 %v3553, %v3536
  %v4387 = vpack.c.b16 %v3554, %v3537
  %v4388 = vpack.c.b16 %v3555, %v3538
  %v4389 = vpack.c.b16 %v3556, %v3539
  %v4390 = vpack.c.b16 %v3557, %v3540
  %v4391 = vpack.c.b16 %v3558, %v3541
  %v4392 = vpack.c.b16 %v3559, %v3542
  %v4393 = vpack.c.b16 %v3560, %v3543
  %v4394 = vpack.c.b16 %v3561, %v3544
  %v4395 = vpack.c.b16 %v3562, %v3545
  %v4396 = vpack.c.b16 %v3563, %v3546
  %v4397 = vpack.c.b16 %v3564, %v3547
  %v4398 = vpack.c.b16 %v3565, %v3548
  %v4399 = vpack.c.b16 %v3566, %v3549
  %v4400 = vpack.c.b16 %v3567, %v3550
  %v4401 = vpack.c.b16 %v3568, %v3551
  %v4402 = vpack.c.b16 %v3569, %v3552
  %vm5236 = vcmask 130048
  %v5238 = vsel %vm5236, %v1015, 0
  %5240 = vmatprep.subr.bf16.mxu0 %v3690
  %5241 = vmatpush1.bf16.msra.mxu0 %v3689
  %5242 = vmatprep.subr.bf16.mxu0 %v3673
  %5243 = vmatpush1.bf16.msra.mxu0 %v3672
  %5244 = vmatprep.subr.bf16.mxu0 %v3656
  %5245 = vmatpush1.bf16.msra.mxu0 %v3655
  %5246 = vmatprep.subr.bf16.mxu0 %v3639
  %5247 = vmatpush1.bf16.msra.mxu0 %v3638
  %5248 = vmatprep.subr.bf16.mxu0 %v3622
  %5249 = vmatpush1.bf16.msra.mxu0 %v3621
  %5250 = vmatprep.subr.bf16.mxu0 %v3605
  %5251 = vmatpush1.bf16.msra.mxu0 %v3604
  %5252 = vmatprep.subr.bf16.mxu0 %v3588
  %5253 = vmatpush1.bf16.msra.mxu0 %v3587
  %5254 = vmatprep.subr.bf16.mxu0 %v3571
  %5255 = vmatpush1.bf16.msra.mxu0 %v3570
  %5256 = vmatprep.subr.bf16.mxu0 %v3826
  %5257 = vmatpush2.bf16.msra.mxu0 %v3825
  %5258 = vmatprep.subr.bf16.mxu0 %v3809
  %5259 = vmatpush2.bf16.msra.mxu0 %v3808
  %5260 = vmatprep.subr.bf16.mxu0 %v3792
  %5261 = vmatpush2.bf16.msra.mxu0 %v3791
  %5262 = vmatprep.subr.bf16.mxu0 %v3775
  %5263 = vmatpush2.bf16.msra.mxu0 %v3774
  %5264 = vmatprep.subr.bf16.mxu0 %v3758
  %5265 = vmatpush2.bf16.msra.mxu0 %v3757
  %5266 = vmatprep.subr.bf16.mxu0 %v3741
  %5267 = vmatpush2.bf16.msra.mxu0 %v3740
  %5268 = vmatprep.subr.bf16.mxu0 %v3724
  %5269 = vmatpush2.bf16.msra.mxu0 %v3723
  %5270 = vmatprep.subr.bf16.mxu0 %v3707
  %5271 = vmatpush2.bf16.msra.mxu0 %v3706
  %5272 = vmatprep.mubr.bf16.mxu0 %v1010
  %5273 = vmatmul.mubr.bf16.gmra.mxu0 %v1009
  %v5274 = vpop.f32.mrf.mxu0
  %v5275 = vadd.f32 %v916, %v5274
  %v5276 = vpop.f32.mrf.mxu0
  %v5277 = vadd.f32 %v920, %v5276
  %v5278 = vpop.f32.mrf.mxu0
  %v5279 = vpop.f32.mrf.mxu0
  %5280 = vdwg.mxu0
  %5281 = vmatprep.subr.bf16.mxu0 %v3962
  %5282 = vmatpush1.bf16.msra.mxu0 %v3961
  %5283 = vmatprep.subr.bf16.mxu0 %v3945
  %5284 = vmatpush1.bf16.msra.mxu0 %v3944
  %5285 = vmatprep.subr.bf16.mxu0 %v3928
  %5286 = vmatpush1.bf16.msra.mxu0 %v3927
  %5287 = vmatprep.subr.bf16.mxu0 %v3911
  %5288 = vmatpush1.bf16.msra.mxu0 %v3910
  %5289 = vmatprep.subr.bf16.mxu0 %v3894
  %5290 = vmatpush1.bf16.msra.mxu0 %v3893
  %5291 = vmatprep.subr.bf16.mxu0 %v3877
  %5292 = vmatpush1.bf16.msra.mxu0 %v3876
  %5293 = vmatprep.subr.bf16.mxu0 %v3860
  %5294 = vmatpush1.bf16.msra.mxu0 %v3859
  %5295 = vmatprep.subr.bf16.mxu0 %v3843
  %5296 = vmatpush1.bf16.msra.mxu0 %v3842
  %5297 = vmatprep.subr.bf16.mxu0 %v4098
  %5298 = vmatpush2.bf16.msra.mxu0 %v4097
  %5299 = vmatprep.subr.bf16.mxu0 %v4081
  %5300 = vmatpush2.bf16.msra.mxu0 %v4080
  %5301 = vmatprep.subr.bf16.mxu0 %v4064
  %5302 = vmatpush2.bf16.msra.mxu0 %v4063
  %5303 = vmatprep.subr.bf16.mxu0 %v4047
  %5304 = vmatpush2.bf16.msra.mxu0 %v4046
  %5305 = vmatprep.subr.bf16.mxu0 %v4030
  %5306 = vmatpush2.bf16.msra.mxu0 %v4029
  %5307 = vmatprep.subr.bf16.mxu0 %v4013
  %5308 = vmatpush2.bf16.msra.mxu0 %v4012
  %5309 = vmatprep.subr.bf16.mxu0 %v3996
  %5310 = vmatpush2.bf16.msra.mxu0 %v3995
  %5311 = vmatprep.subr.bf16.mxu0 %v3979
  %5312 = vmatpush2.bf16.msra.mxu0 %v3978
  %5313 = vmatprep.mubr.bf16.mxu0 %v1012
  %5314 = vmatmul.mubr.bf16.gmra.mxu0 %v1011
  %v5315 = vpop.f32.mrf.mxu0
  %v5316 = vadd.f32 %v5275, %v5315
  %v5317 = vpop.f32.mrf.mxu0
  %v5318 = vadd.f32 %v5277, %v5317
  %v5319 = vpop.f32.mrf.mxu0
  %v5320 = vpop.f32.mrf.mxu0
  %5321 = vdwg.mxu0
  %5322 = vmatprep.subr.bf16.mxu0 %v4234
  %5323 = vmatpush1.bf16.msra.mxu0 %v4233
  %5324 = vmatprep.subr.bf16.mxu0 %v4217
  %5325 = vmatpush1.bf16.msra.mxu0 %v4216
  %5326 = vmatprep.subr.bf16.mxu0 %v4200
  %5327 = vmatpush1.bf16.msra.mxu0 %v4199
  %5328 = vmatprep.subr.bf16.mxu0 %v4183
  %5329 = vmatpush1.bf16.msra.mxu0 %v4182
  %5330 = vmatprep.subr.bf16.mxu0 %v4166
  %5331 = vmatpush1.bf16.msra.mxu0 %v4165
  %5332 = vmatprep.subr.bf16.mxu0 %v4149
  %5333 = vmatpush1.bf16.msra.mxu0 %v4148
  %5334 = vmatprep.subr.bf16.mxu0 %v4132
  %5335 = vmatpush1.bf16.msra.mxu0 %v4131
  %5336 = vmatprep.subr.bf16.mxu0 %v4115
  %5337 = vmatpush1.bf16.msra.mxu0 %v4114
  %5338 = vmatprep.subr.bf16.mxu0 %v4370
  %5339 = vmatpush2.bf16.msra.mxu0 %v4369
  %5340 = vmatprep.subr.bf16.mxu0 %v4353
  %5341 = vmatpush2.bf16.msra.mxu0 %v4352
  %5342 = vmatprep.subr.bf16.mxu0 %v4336
  %5343 = vmatpush2.bf16.msra.mxu0 %v4335
  %5344 = vmatprep.subr.bf16.mxu0 %v4319
  %5345 = vmatpush2.bf16.msra.mxu0 %v4318
  %5346 = vmatprep.subr.bf16.mxu0 %v4302
  %5347 = vmatpush2.bf16.msra.mxu0 %v4301
  %5348 = vmatprep.subr.bf16.mxu0 %v4285
  %5349 = vmatpush2.bf16.msra.mxu0 %v4284
  %5350 = vmatprep.subr.bf16.mxu0 %v4268
  %5351 = vmatpush2.bf16.msra.mxu0 %v4267
  %5352 = vmatprep.subr.bf16.mxu0 %v4251
  %5353 = vmatpush2.bf16.msra.mxu0 %v4250
  %5354 = vmatprep.mubr.bf16.mxu0 %v1014
  %5355 = vmatmul.mubr.bf16.gmra.mxu0 %v1013
  %v5356 = vpop.f32.mrf.mxu0
  %v5357 = vadd.f32 %v5316, %v5356
  %v5358 = vpop.f32.mrf.mxu0
  %v5359 = vadd.f32 %v5318, %v5358
  %v5360 = vpop.f32.mrf.mxu0
  %v5361 = vpop.f32.mrf.mxu0
  %5362 = vdwg.mxu0
  %5363 = vmatprep.subr.bf16.mxu0 0
  %5364 = vmatpush1.bf16.msra.mxu0 0
  %5365 = vmatprep.subr.bf16.mxu0 0
  %5366 = vmatpush1.bf16.msra.mxu0 0
  %5367 = vmatprep.subr.bf16.mxu0 0
  %5368 = vmatpush1.bf16.msra.mxu0 0
  %5369 = vmatprep.subr.bf16.mxu0 0
  %5370 = vmatpush1.bf16.msra.mxu0 0
  %5371 = vmatprep.subr.bf16.mxu0 0
  %5372 = vmatpush1.bf16.msra.mxu0 0
  %5373 = vmatprep.subr.bf16.mxu0 0
  %5374 = vmatpush1.bf16.msra.mxu0 0
  %5375 = vmatprep.subr.bf16.mxu0 0
  %5376 = vmatpush1.bf16.msra.mxu0 0
  %5377 = vmatprep.subr.bf16.mxu0 %v4387
  %5378 = vmatpush1.bf16.msra.mxu0 %v4386
  %5379 = vmatprep.subr.bf16.mxu0 0
  %5380 = vmatpush2.bf16.msra.mxu0 0
  %5381 = vmatprep.subr.bf16.mxu0 0
  %5382 = vmatpush2.bf16.msra.mxu0 0
  %5383 = vmatprep.subr.bf16.mxu0 0
  %5384 = vmatpush2.bf16.msra.mxu0 0
  %5385 = vmatprep.subr.bf16.mxu0 0
  %5386 = vmatpush2.bf16.msra.mxu0 0
  %5387 = vmatprep.subr.bf16.mxu0 0
  %5388 = vmatpush2.bf16.msra.mxu0 0
  %5389 = vmatprep.subr.bf16.mxu0 0
  %5390 = vmatpush2.bf16.msra.mxu0 0
  %5391 = vmatprep.subr.bf16.mxu0 0
  %5392 = vmatpush2.bf16.msra.mxu0 0
  %5393 = vmatprep.subr.bf16.mxu0 0
  %5394 = vmatpush2.bf16.msra.mxu0 0
  %5395 = vmatprep.mubr.bf16.mxu0 0
  %5396 = vmatmul.mubr.bf16.gmra.mxu0 %v5238
  %v5397 = vpop.f32.mrf.mxu0
  %v5398 = vadd.f32 %v5357, %v5397
  %v5399 = vpop.f32.mrf.mxu0
  %v5400 = vadd.f32 %v5359, %v5399
  %v5401 = vpop.f32.mrf.mxu0
  %v5402 = vpop.f32.mrf.mxu0
  %5403 = vdwg.mxu0
  %5404 = vmatprep.subr.bf16.mxu0 %v3692
  %5405 = vmatpush1.bf16.msra.mxu0 %v3691
  %5406 = vmatprep.subr.bf16.mxu0 %v3675
  %5407 = vmatpush1.bf16.msra.mxu0 %v3674
  %5408 = vmatprep.subr.bf16.mxu0 %v3658
  %5409 = vmatpush1.bf16.msra.mxu0 %v3657
  %5410 = vmatprep.subr.bf16.mxu0 %v3641
  %5411 = vmatpush1.bf16.msra.mxu0 %v3640
  %5412 = vmatprep.subr.bf16.mxu0 %v3624
  %5413 = vmatpush1.bf16.msra.mxu0 %v3623
  %5414 = vmatprep.subr.bf16.mxu0 %v3607
  %5415 = vmatpush1.bf16.msra.mxu0 %v3606
  %5416 = vmatprep.subr.bf16.mxu0 %v3590
  %5417 = vmatpush1.bf16.msra.mxu0 %v3589
  %5418 = vmatprep.subr.bf16.mxu0 %v3573
  %5419 = vmatpush1.bf16.msra.mxu0 %v3572
  %5420 = vmatprep.subr.bf16.mxu0 %v3828
  %5421 = vmatpush2.bf16.msra.mxu0 %v3827
  %5422 = vmatprep.subr.bf16.mxu0 %v3811
  %5423 = vmatpush2.bf16.msra.mxu0 %v3810
  %5424 = vmatprep.subr.bf16.mxu0 %v3794
  %5425 = vmatpush2.bf16.msra.mxu0 %v3793
  %5426 = vmatprep.subr.bf16.mxu0 %v3777
  %5427 = vmatpush2.bf16.msra.mxu0 %v3776
  %5428 = vmatprep.subr.bf16.mxu0 %v3760
  %5429 = vmatpush2.bf16.msra.mxu0 %v3759
  %5430 = vmatprep.subr.bf16.mxu0 %v3743
  %5431 = vmatpush2.bf16.msra.mxu0 %v3742
  %5432 = vmatprep.subr.bf16.mxu0 %v3726
  %5433 = vmatpush2.bf16.msra.mxu0 %v3725
  %5434 = vmatprep.subr.bf16.mxu0 %v3709
  %5435 = vmatpush2.bf16.msra.mxu0 %v3708
  %5436 = vmatprep.mubr.bf16.mxu0 %v1010
  %5437 = vmatmul.mubr.bf16.gmra.mxu0 %v1009
  %v5438 = vpop.f32.mrf.mxu0
  %v5439 = vadd.f32 %v924, %v5438
  %v5440 = vpop.f32.mrf.mxu0
  %v5441 = vadd.f32 %v928, %v5440
  %v5442 = vpop.f32.mrf.mxu0
  %v5443 = vpop.f32.mrf.mxu0
  %5444 = vdwg.mxu0
  %5445 = vmatprep.subr.bf16.mxu0 %v3964
  %5446 = vmatpush1.bf16.msra.mxu0 %v3963
  %5447 = vmatprep.subr.bf16.mxu0 %v3947
  %5448 = vmatpush1.bf16.msra.mxu0 %v3946
  %5449 = vmatprep.subr.bf16.mxu0 %v3930
  %5450 = vmatpush1.bf16.msra.mxu0 %v3929
  %5451 = vmatprep.subr.bf16.mxu0 %v3913
  %5452 = vmatpush1.bf16.msra.mxu0 %v3912
  %5453 = vmatprep.subr.bf16.mxu0 %v3896
  %5454 = vmatpush1.bf16.msra.mxu0 %v3895
  %5455 = vmatprep.subr.bf16.mxu0 %v3879
  %5456 = vmatpush1.bf16.msra.mxu0 %v3878
  %5457 = vmatprep.subr.bf16.mxu0 %v3862
  %5458 = vmatpush1.bf16.msra.mxu0 %v3861
  %5459 = vmatprep.subr.bf16.mxu0 %v3845
  %5460 = vmatpush1.bf16.msra.mxu0 %v3844
  %5461 = vmatprep.subr.bf16.mxu0 %v4100
  %5462 = vmatpush2.bf16.msra.mxu0 %v4099
  %5463 = vmatprep.subr.bf16.mxu0 %v4083
  %5464 = vmatpush2.bf16.msra.mxu0 %v4082
  %5465 = vmatprep.subr.bf16.mxu0 %v4066
  %5466 = vmatpush2.bf16.msra.mxu0 %v4065
  %5467 = vmatprep.subr.bf16.mxu0 %v4049
  %5468 = vmatpush2.bf16.msra.mxu0 %v4048
  %5469 = vmatprep.subr.bf16.mxu0 %v4032
  %5470 = vmatpush2.bf16.msra.mxu0 %v4031
  %5471 = vmatprep.subr.bf16.mxu0 %v4015
  %5472 = vmatpush2.bf16.msra.mxu0 %v4014
  %5473 = vmatprep.subr.bf16.mxu0 %v3998
  %5474 = vmatpush2.bf16.msra.mxu0 %v3997
  %5475 = vmatprep.subr.bf16.mxu0 %v3981
  %5476 = vmatpush2.bf16.msra.mxu0 %v3980
  %5477 = vmatprep.mubr.bf16.mxu0 %v1012
  %5478 = vmatmul.mubr.bf16.gmra.mxu0 %v1011
  %v5479 = vpop.f32.mrf.mxu0
  %v5480 = vadd.f32 %v5439, %v5479
  %v5481 = vpop.f32.mrf.mxu0
  %v5482 = vadd.f32 %v5441, %v5481
  %v5483 = vpop.f32.mrf.mxu0
  %v5484 = vpop.f32.mrf.mxu0
  %5485 = vdwg.mxu0
  %5486 = vmatprep.subr.bf16.mxu0 %v4236
  %5487 = vmatpush1.bf16.msra.mxu0 %v4235
  %5488 = vmatprep.subr.bf16.mxu0 %v4219
  %5489 = vmatpush1.bf16.msra.mxu0 %v4218
  %5490 = vmatprep.subr.bf16.mxu0 %v4202
  %5491 = vmatpush1.bf16.msra.mxu0 %v4201
  %5492 = vmatprep.subr.bf16.mxu0 %v4185
  %5493 = vmatpush1.bf16.msra.mxu0 %v4184
  %5494 = vmatprep.subr.bf16.mxu0 %v4168
  %5495 = vmatpush1.bf16.msra.mxu0 %v4167
  %5496 = vmatprep.subr.bf16.mxu0 %v4151
  %5497 = vmatpush1.bf16.msra.mxu0 %v4150
  %5498 = vmatprep.subr.bf16.mxu0 %v4134
  %5499 = vmatpush1.bf16.msra.mxu0 %v4133
  %5500 = vmatprep.subr.bf16.mxu0 %v4117
  %5501 = vmatpush1.bf16.msra.mxu0 %v4116
  %5502 = vmatprep.subr.bf16.mxu0 %v4372
  %5503 = vmatpush2.bf16.msra.mxu0 %v4371
  %5504 = vmatprep.subr.bf16.mxu0 %v4355
  %5505 = vmatpush2.bf16.msra.mxu0 %v4354
  %5506 = vmatprep.subr.bf16.mxu0 %v4338
  %5507 = vmatpush2.bf16.msra.mxu0 %v4337
  %5508 = vmatprep.subr.bf16.mxu0 %v4321
  %5509 = vmatpush2.bf16.msra.mxu0 %v4320
  %5510 = vmatprep.subr.bf16.mxu0 %v4304
  %5511 = vmatpush2.bf16.msra.mxu0 %v4303
  %5512 = vmatprep.subr.bf16.mxu0 %v4287
  %5513 = vmatpush2.bf16.msra.mxu0 %v4286
  %5514 = vmatprep.subr.bf16.mxu0 %v4270
  %5515 = vmatpush2.bf16.msra.mxu0 %v4269
  %5516 = vmatprep.subr.bf16.mxu0 %v4253
  %5517 = vmatpush2.bf16.msra.mxu0 %v4252
  %5518 = vmatprep.mubr.bf16.mxu0 %v1014
  %5519 = vmatmul.mubr.bf16.gmra.mxu0 %v1013
  %v5520 = vpop.f32.mrf.mxu0
  %v5521 = vadd.f32 %v5480, %v5520
  %v5522 = vpop.f32.mrf.mxu0
  %v5523 = vadd.f32 %v5482, %v5522
  %v5524 = vpop.f32.mrf.mxu0
  %v5525 = vpop.f32.mrf.mxu0
  %5526 = vdwg.mxu0
  %5527 = vmatprep.subr.bf16.mxu0 0
  %5528 = vmatpush1.bf16.msra.mxu0 0
  %5529 = vmatprep.subr.bf16.mxu0 0
  %5530 = vmatpush1.bf16.msra.mxu0 0
  %5531 = vmatprep.subr.bf16.mxu0 0
  %5532 = vmatpush1.bf16.msra.mxu0 0
  %5533 = vmatprep.subr.bf16.mxu0 0
  %5534 = vmatpush1.bf16.msra.mxu0 0
  %5535 = vmatprep.subr.bf16.mxu0 0
  %5536 = vmatpush1.bf16.msra.mxu0 0
  %5537 = vmatprep.subr.bf16.mxu0 0
  %5538 = vmatpush1.bf16.msra.mxu0 0
  %5539 = vmatprep.subr.bf16.mxu0 0
  %5540 = vmatpush1.bf16.msra.mxu0 0
  %5541 = vmatprep.subr.bf16.mxu0 %v4389
  %5542 = vmatpush1.bf16.msra.mxu0 %v4388
  %5543 = vmatprep.subr.bf16.mxu0 0
  %5544 = vmatpush2.bf16.msra.mxu0 0
  %5545 = vmatprep.subr.bf16.mxu0 0
  %5546 = vmatpush2.bf16.msra.mxu0 0
  %5547 = vmatprep.subr.bf16.mxu0 0
  %5548 = vmatpush2.bf16.msra.mxu0 0
  %5549 = vmatprep.subr.bf16.mxu0 0
  %5550 = vmatpush2.bf16.msra.mxu0 0
  %5551 = vmatprep.subr.bf16.mxu0 0
  %5552 = vmatpush2.bf16.msra.mxu0 0
  %5553 = vmatprep.subr.bf16.mxu0 0
  %5554 = vmatpush2.bf16.msra.mxu0 0
  %5555 = vmatprep.subr.bf16.mxu0 0
  %5556 = vmatpush2.bf16.msra.mxu0 0
  %5557 = vmatprep.subr.bf16.mxu0 0
  %5558 = vmatpush2.bf16.msra.mxu0 0
  %5559 = vmatprep.mubr.bf16.mxu0 0
  %5560 = vmatmul.mubr.bf16.gmra.mxu0 %v5238
  %v5561 = vpop.f32.mrf.mxu0
  %v5562 = vadd.f32 %v5521, %v5561
  %v5563 = vpop.f32.mrf.mxu0
  %v5564 = vadd.f32 %v5523, %v5563
  %v5565 = vpop.f32.mrf.mxu0
  %v5566 = vpop.f32.mrf.mxu0
  %5567 = vdwg.mxu0
  %5568 = vmatprep.subr.bf16.mxu0 %v3694
  %5569 = vmatpush1.bf16.msra.mxu0 %v3693
  %5570 = vmatprep.subr.bf16.mxu0 %v3677
  %5571 = vmatpush1.bf16.msra.mxu0 %v3676
  %5572 = vmatprep.subr.bf16.mxu0 %v3660
  %5573 = vmatpush1.bf16.msra.mxu0 %v3659
  %5574 = vmatprep.subr.bf16.mxu0 %v3643
  %5575 = vmatpush1.bf16.msra.mxu0 %v3642
  %5576 = vmatprep.subr.bf16.mxu0 %v3626
  %5577 = vmatpush1.bf16.msra.mxu0 %v3625
  %5578 = vmatprep.subr.bf16.mxu0 %v3609
  %5579 = vmatpush1.bf16.msra.mxu0 %v3608
  %5580 = vmatprep.subr.bf16.mxu0 %v3592
  %5581 = vmatpush1.bf16.msra.mxu0 %v3591
  %5582 = vmatprep.subr.bf16.mxu0 %v3575
  %5583 = vmatpush1.bf16.msra.mxu0 %v3574
  %5584 = vmatprep.subr.bf16.mxu0 %v3830
  %5585 = vmatpush2.bf16.msra.mxu0 %v3829
  %5586 = vmatprep.subr.bf16.mxu0 %v3813
  %5587 = vmatpush2.bf16.msra.mxu0 %v3812
  %5588 = vmatprep.subr.bf16.mxu0 %v3796
  %5589 = vmatpush2.bf16.msra.mxu0 %v3795
  %5590 = vmatprep.subr.bf16.mxu0 %v3779
  %5591 = vmatpush2.bf16.msra.mxu0 %v3778
  %5592 = vmatprep.subr.bf16.mxu0 %v3762
  %5593 = vmatpush2.bf16.msra.mxu0 %v3761
  %5594 = vmatprep.subr.bf16.mxu0 %v3745
  %5595 = vmatpush2.bf16.msra.mxu0 %v3744
  %5596 = vmatprep.subr.bf16.mxu0 %v3728
  %5597 = vmatpush2.bf16.msra.mxu0 %v3727
  %5598 = vmatprep.subr.bf16.mxu0 %v3711
  %5599 = vmatpush2.bf16.msra.mxu0 %v3710
  %5600 = vmatprep.mubr.bf16.mxu0 %v1010
  %5601 = vmatmul.mubr.bf16.gmra.mxu0 %v1009
  %v5602 = vpop.f32.mrf.mxu0
  %v5603 = vadd.f32 %v932, %v5602
  %v5604 = vpop.f32.mrf.mxu0
  %v5605 = vadd.f32 %v936, %v5604
  %v5606 = vpop.f32.mrf.mxu0
  %v5607 = vpop.f32.mrf.mxu0
  %5608 = vdwg.mxu0
  %5609 = vmatprep.subr.bf16.mxu0 %v3966
  %5610 = vmatpush1.bf16.msra.mxu0 %v3965
  %5611 = vmatprep.subr.bf16.mxu0 %v3949
  %5612 = vmatpush1.bf16.msra.mxu0 %v3948
  %5613 = vmatprep.subr.bf16.mxu0 %v3932
  %5614 = vmatpush1.bf16.msra.mxu0 %v3931
  %5615 = vmatprep.subr.bf16.mxu0 %v3915
  %5616 = vmatpush1.bf16.msra.mxu0 %v3914
  %5617 = vmatprep.subr.bf16.mxu0 %v3898
  %5618 = vmatpush1.bf16.msra.mxu0 %v3897
  %5619 = vmatprep.subr.bf16.mxu0 %v3881
  %5620 = vmatpush1.bf16.msra.mxu0 %v3880
  %5621 = vmatprep.subr.bf16.mxu0 %v3864
  %5622 = vmatpush1.bf16.msra.mxu0 %v3863
  %5623 = vmatprep.subr.bf16.mxu0 %v3847
  %5624 = vmatpush1.bf16.msra.mxu0 %v3846
  %5625 = vmatprep.subr.bf16.mxu0 %v4102
  %5626 = vmatpush2.bf16.msra.mxu0 %v4101
  %5627 = vmatprep.subr.bf16.mxu0 %v4085
  %5628 = vmatpush2.bf16.msra.mxu0 %v4084
  %5629 = vmatprep.subr.bf16.mxu0 %v4068
  %5630 = vmatpush2.bf16.msra.mxu0 %v4067
  %5631 = vmatprep.subr.bf16.mxu0 %v4051
  %5632 = vmatpush2.bf16.msra.mxu0 %v4050
  %5633 = vmatprep.subr.bf16.mxu0 %v4034
  %5634 = vmatpush2.bf16.msra.mxu0 %v4033
  %5635 = vmatprep.subr.bf16.mxu0 %v4017
  %5636 = vmatpush2.bf16.msra.mxu0 %v4016
  %5637 = vmatprep.subr.bf16.mxu0 %v4000
  %5638 = vmatpush2.bf16.msra.mxu0 %v3999
  %5639 = vmatprep.subr.bf16.mxu0 %v3983
  %5640 = vmatpush2.bf16.msra.mxu0 %v3982
  %5641 = vmatprep.mubr.bf16.mxu0 %v1012
  %5642 = vmatmul.mubr.bf16.gmra.mxu0 %v1011
  %v5643 = vpop.f32.mrf.mxu0
  %v5644 = vadd.f32 %v5603, %v5643
  %v5645 = vpop.f32.mrf.mxu0
  %v5646 = vadd.f32 %v5605, %v5645
  %v5647 = vpop.f32.mrf.mxu0
  %v5648 = vpop.f32.mrf.mxu0
  %5649 = vdwg.mxu0
  %5650 = vmatprep.subr.bf16.mxu0 %v4238
  %5651 = vmatpush1.bf16.msra.mxu0 %v4237
  %5652 = vmatprep.subr.bf16.mxu0 %v4221
  %5653 = vmatpush1.bf16.msra.mxu0 %v4220
  %5654 = vmatprep.subr.bf16.mxu0 %v4204
  %5655 = vmatpush1.bf16.msra.mxu0 %v4203
  %5656 = vmatprep.subr.bf16.mxu0 %v4187
  %5657 = vmatpush1.bf16.msra.mxu0 %v4186
  %5658 = vmatprep.subr.bf16.mxu0 %v4170
  %5659 = vmatpush1.bf16.msra.mxu0 %v4169
  %5660 = vmatprep.subr.bf16.mxu0 %v4153
  %5661 = vmatpush1.bf16.msra.mxu0 %v4152
  %5662 = vmatprep.subr.bf16.mxu0 %v4136
  %5663 = vmatpush1.bf16.msra.mxu0 %v4135
  %5664 = vmatprep.subr.bf16.mxu0 %v4119
  %5665 = vmatpush1.bf16.msra.mxu0 %v4118
  %5666 = vmatprep.subr.bf16.mxu0 %v4374
  %5667 = vmatpush2.bf16.msra.mxu0 %v4373
  %5668 = vmatprep.subr.bf16.mxu0 %v4357
  %5669 = vmatpush2.bf16.msra.mxu0 %v4356
  %5670 = vmatprep.subr.bf16.mxu0 %v4340
  %5671 = vmatpush2.bf16.msra.mxu0 %v4339
  %5672 = vmatprep.subr.bf16.mxu0 %v4323
  %5673 = vmatpush2.bf16.msra.mxu0 %v4322
  %5674 = vmatprep.subr.bf16.mxu0 %v4306
  %5675 = vmatpush2.bf16.msra.mxu0 %v4305
  %5676 = vmatprep.subr.bf16.mxu0 %v4289
  %5677 = vmatpush2.bf16.msra.mxu0 %v4288
  %5678 = vmatprep.subr.bf16.mxu0 %v4272
  %5679 = vmatpush2.bf16.msra.mxu0 %v4271
  %5680 = vmatprep.subr.bf16.mxu0 %v4255
  %5681 = vmatpush2.bf16.msra.mxu0 %v4254
  %5682 = vmatprep.mubr.bf16.mxu0 %v1014
  %5683 = vmatmul.mubr.bf16.gmra.mxu0 %v1013
  %v5684 = vpop.f32.mrf.mxu0
  %v5685 = vadd.f32 %v5644, %v5684
  %v5686 = vpop.f32.mrf.mxu0
  %v5687 = vadd.f32 %v5646, %v5686
  %v5688 = vpop.f32.mrf.mxu0
  %v5689 = vpop.f32.mrf.mxu0
  %5690 = vdwg.mxu0
  %5691 = vmatprep.subr.bf16.mxu0 0
  %5692 = vmatpush1.bf16.msra.mxu0 0
  %5693 = vmatprep.subr.bf16.mxu0 0
  %5694 = vmatpush1.bf16.msra.mxu0 0
  %5695 = vmatprep.subr.bf16.mxu0 0
  %5696 = vmatpush1.bf16.msra.mxu0 0
  %5697 = vmatprep.subr.bf16.mxu0 0
  %5698 = vmatpush1.bf16.msra.mxu0 0
  %5699 = vmatprep.subr.bf16.mxu0 0
  %5700 = vmatpush1.bf16.msra.mxu0 0
  %5701 = vmatprep.subr.bf16.mxu0 0
  %5702 = vmatpush1.bf16.msra.mxu0 0
  %5703 = vmatprep.subr.bf16.mxu0 0
  %5704 = vmatpush1.bf16.msra.mxu0 0
  %5705 = vmatprep.subr.bf16.mxu0 %v4391
  %5706 = vmatpush1.bf16.msra.mxu0 %v4390
  %5707 = vmatprep.subr.bf16.mxu0 0
  %5708 = vmatpush2.bf16.msra.mxu0 0
  %5709 = vmatprep.subr.bf16.mxu0 0
  %5710 = vmatpush2.bf16.msra.mxu0 0
  %5711 = vmatprep.subr.bf16.mxu0 0
  %5712 = vmatpush2.bf16.msra.mxu0 0
  %5713 = vmatprep.subr.bf16.mxu0 0
  %5714 = vmatpush2.bf16.msra.mxu0 0
  %5715 = vmatprep.subr.bf16.mxu0 0
  %5716 = vmatpush2.bf16.msra.mxu0 0
  %5717 = vmatprep.subr.bf16.mxu0 0
  %5718 = vmatpush2.bf16.msra.mxu0 0
  %5719 = vmatprep.subr.bf16.mxu0 0
  %5720 = vmatpush2.bf16.msra.mxu0 0
  %5721 = vmatprep.subr.bf16.mxu0 0
  %5722 = vmatpush2.bf16.msra.mxu0 0
  %5723 = vmatprep.mubr.bf16.mxu0 0
  %5724 = vmatmul.mubr.bf16.gmra.mxu0 %v5238
  %v5725 = vpop.f32.mrf.mxu0
  %v5726 = vadd.f32 %v5685, %v5725
  %v5727 = vpop.f32.mrf.mxu0
  %v5728 = vadd.f32 %v5687, %v5727
  %v5729 = vpop.f32.mrf.mxu0
  %v5730 = vpop.f32.mrf.mxu0
  %5731 = vdwg.mxu0
  %5732 = vmatprep.subr.bf16.mxu0 %v3696
  %5733 = vmatpush1.bf16.msra.mxu0 %v3695
  %5734 = vmatprep.subr.bf16.mxu0 %v3679
  %5735 = vmatpush1.bf16.msra.mxu0 %v3678
  %5736 = vmatprep.subr.bf16.mxu0 %v3662
  %5737 = vmatpush1.bf16.msra.mxu0 %v3661
  %5738 = vmatprep.subr.bf16.mxu0 %v3645
  %5739 = vmatpush1.bf16.msra.mxu0 %v3644
  %5740 = vmatprep.subr.bf16.mxu0 %v3628
  %5741 = vmatpush1.bf16.msra.mxu0 %v3627
  %5742 = vmatprep.subr.bf16.mxu0 %v3611
  %5743 = vmatpush1.bf16.msra.mxu0 %v3610
  %5744 = vmatprep.subr.bf16.mxu0 %v3594
  %5745 = vmatpush1.bf16.msra.mxu0 %v3593
  %5746 = vmatprep.subr.bf16.mxu0 %v3577
  %5747 = vmatpush1.bf16.msra.mxu0 %v3576
  %5748 = vmatprep.subr.bf16.mxu0 %v3832
  %5749 = vmatpush2.bf16.msra.mxu0 %v3831
  %5750 = vmatprep.subr.bf16.mxu0 %v3815
  %5751 = vmatpush2.bf16.msra.mxu0 %v3814
  %5752 = vmatprep.subr.bf16.mxu0 %v3798
  %5753 = vmatpush2.bf16.msra.mxu0 %v3797
  %5754 = vmatprep.subr.bf16.mxu0 %v3781
  %5755 = vmatpush2.bf16.msra.mxu0 %v3780
  %5756 = vmatprep.subr.bf16.mxu0 %v3764
  %5757 = vmatpush2.bf16.msra.mxu0 %v3763
  %5758 = vmatprep.subr.bf16.mxu0 %v3747
  %5759 = vmatpush2.bf16.msra.mxu0 %v3746
  %5760 = vmatprep.subr.bf16.mxu0 %v3730
  %5761 = vmatpush2.bf16.msra.mxu0 %v3729
  %5762 = vmatprep.subr.bf16.mxu0 %v3713
  %5763 = vmatpush2.bf16.msra.mxu0 %v3712
  %5764 = vmatprep.mubr.bf16.mxu0 %v1010
  %5765 = vmatmul.mubr.bf16.gmra.mxu0 %v1009
  %v5766 = vpop.f32.mrf.mxu0
  %v5767 = vadd.f32 %v940, %v5766
  %v5768 = vpop.f32.mrf.mxu0
  %v5769 = vadd.f32 %v944, %v5768
  %v5770 = vpop.f32.mrf.mxu0
  %v5771 = vpop.f32.mrf.mxu0
  %5772 = vdwg.mxu0
  %5773 = vmatprep.subr.bf16.mxu0 %v3968
  %5774 = vmatpush1.bf16.msra.mxu0 %v3967
  %5775 = vmatprep.subr.bf16.mxu0 %v3951
  %5776 = vmatpush1.bf16.msra.mxu0 %v3950
  %5777 = vmatprep.subr.bf16.mxu0 %v3934
  %5778 = vmatpush1.bf16.msra.mxu0 %v3933
  %5779 = vmatprep.subr.bf16.mxu0 %v3917
  %5780 = vmatpush1.bf16.msra.mxu0 %v3916
  %5781 = vmatprep.subr.bf16.mxu0 %v3900
  %5782 = vmatpush1.bf16.msra.mxu0 %v3899
  %5783 = vmatprep.subr.bf16.mxu0 %v3883
  %5784 = vmatpush1.bf16.msra.mxu0 %v3882
  %5785 = vmatprep.subr.bf16.mxu0 %v3866
  %5786 = vmatpush1.bf16.msra.mxu0 %v3865
  %5787 = vmatprep.subr.bf16.mxu0 %v3849
  %5788 = vmatpush1.bf16.msra.mxu0 %v3848
  %5789 = vmatprep.subr.bf16.mxu0 %v4104
  %5790 = vmatpush2.bf16.msra.mxu0 %v4103
  %5791 = vmatprep.subr.bf16.mxu0 %v4087
  %5792 = vmatpush2.bf16.msra.mxu0 %v4086
  %5793 = vmatprep.subr.bf16.mxu0 %v4070
  %5794 = vmatpush2.bf16.msra.mxu0 %v4069
  %5795 = vmatprep.subr.bf16.mxu0 %v4053
  %5796 = vmatpush2.bf16.msra.mxu0 %v4052
  %5797 = vmatprep.subr.bf16.mxu0 %v4036
  %5798 = vmatpush2.bf16.msra.mxu0 %v4035
  %5799 = vmatprep.subr.bf16.mxu0 %v4019
  %5800 = vmatpush2.bf16.msra.mxu0 %v4018
  %5801 = vmatprep.subr.bf16.mxu0 %v4002
  %5802 = vmatpush2.bf16.msra.mxu0 %v4001
  %5803 = vmatprep.subr.bf16.mxu0 %v3985
  %5804 = vmatpush2.bf16.msra.mxu0 %v3984
  %5805 = vmatprep.mubr.bf16.mxu0 %v1012
  %5806 = vmatmul.mubr.bf16.gmra.mxu0 %v1011
  %v5807 = vpop.f32.mrf.mxu0
  %v5808 = vadd.f32 %v5767, %v5807
  %v5809 = vpop.f32.mrf.mxu0
  %v5810 = vadd.f32 %v5769, %v5809
  %v5811 = vpop.f32.mrf.mxu0
  %v5812 = vpop.f32.mrf.mxu0
  %5813 = vdwg.mxu0
  %5814 = vmatprep.subr.bf16.mxu0 %v4240
  %5815 = vmatpush1.bf16.msra.mxu0 %v4239
  %5816 = vmatprep.subr.bf16.mxu0 %v4223
  %5817 = vmatpush1.bf16.msra.mxu0 %v4222
  %5818 = vmatprep.subr.bf16.mxu0 %v4206
  %5819 = vmatpush1.bf16.msra.mxu0 %v4205
  %5820 = vmatprep.subr.bf16.mxu0 %v4189
  %5821 = vmatpush1.bf16.msra.mxu0 %v4188
  %5822 = vmatprep.subr.bf16.mxu0 %v4172
  %5823 = vmatpush1.bf16.msra.mxu0 %v4171
  %5824 = vmatprep.subr.bf16.mxu0 %v4155
  %5825 = vmatpush1.bf16.msra.mxu0 %v4154
  %5826 = vmatprep.subr.bf16.mxu0 %v4138
  %5827 = vmatpush1.bf16.msra.mxu0 %v4137
  %5828 = vmatprep.subr.bf16.mxu0 %v4121
  %5829 = vmatpush1.bf16.msra.mxu0 %v4120
  %5830 = vmatprep.subr.bf16.mxu0 %v4376
  %5831 = vmatpush2.bf16.msra.mxu0 %v4375
  %5832 = vmatprep.subr.bf16.mxu0 %v4359
  %5833 = vmatpush2.bf16.msra.mxu0 %v4358
  %5834 = vmatprep.subr.bf16.mxu0 %v4342
  %5835 = vmatpush2.bf16.msra.mxu0 %v4341
  %5836 = vmatprep.subr.bf16.mxu0 %v4325
  %5837 = vmatpush2.bf16.msra.mxu0 %v4324
  %5838 = vmatprep.subr.bf16.mxu0 %v4308
  %5839 = vmatpush2.bf16.msra.mxu0 %v4307
  %5840 = vmatprep.subr.bf16.mxu0 %v4291
  %5841 = vmatpush2.bf16.msra.mxu0 %v4290
  %5842 = vmatprep.subr.bf16.mxu0 %v4274
  %5843 = vmatpush2.bf16.msra.mxu0 %v4273
  %5844 = vmatprep.subr.bf16.mxu0 %v4257
  %5845 = vmatpush2.bf16.msra.mxu0 %v4256
  %5846 = vmatprep.mubr.bf16.mxu0 %v1014
  %5847 = vmatmul.mubr.bf16.gmra.mxu0 %v1013
  %v5848 = vpop.f32.mrf.mxu0
  %v5849 = vadd.f32 %v5808, %v5848
  %v5850 = vpop.f32.mrf.mxu0
  %v5851 = vadd.f32 %v5810, %v5850
  %v5852 = vpop.f32.mrf.mxu0
  %v5853 = vpop.f32.mrf.mxu0
  %5854 = vdwg.mxu0
  %5855 = vmatprep.subr.bf16.mxu0 0
  %5856 = vmatpush1.bf16.msra.mxu0 0
  %5857 = vmatprep.subr.bf16.mxu0 0
  %5858 = vmatpush1.bf16.msra.mxu0 0
  %5859 = vmatprep.subr.bf16.mxu0 0
  %5860 = vmatpush1.bf16.msra.mxu0 0
  %5861 = vmatprep.subr.bf16.mxu0 0
  %5862 = vmatpush1.bf16.msra.mxu0 0
  %5863 = vmatprep.subr.bf16.mxu0 0
  %5864 = vmatpush1.bf16.msra.mxu0 0
  %5865 = vmatprep.subr.bf16.mxu0 0
  %5866 = vmatpush1.bf16.msra.mxu0 0
  %5867 = vmatprep.subr.bf16.mxu0 0
  %5868 = vmatpush1.bf16.msra.mxu0 0
  %5869 = vmatprep.subr.bf16.mxu0 %v4393
  %5870 = vmatpush1.bf16.msra.mxu0 %v4392
  %5871 = vmatprep.subr.bf16.mxu0 0
  %5872 = vmatpush2.bf16.msra.mxu0 0
  %5873 = vmatprep.subr.bf16.mxu0 0
  %5874 = vmatpush2.bf16.msra.mxu0 0
  %5875 = vmatprep.subr.bf16.mxu0 0
  %5876 = vmatpush2.bf16.msra.mxu0 0
  %5877 = vmatprep.subr.bf16.mxu0 0
  %5878 = vmatpush2.bf16.msra.mxu0 0
  %5879 = vmatprep.subr.bf16.mxu0 0
  %5880 = vmatpush2.bf16.msra.mxu0 0
  %5881 = vmatprep.subr.bf16.mxu0 0
  %5882 = vmatpush2.bf16.msra.mxu0 0
  %5883 = vmatprep.subr.bf16.mxu0 0
  %5884 = vmatpush2.bf16.msra.mxu0 0
  %5885 = vmatprep.subr.bf16.mxu0 0
  %5886 = vmatpush2.bf16.msra.mxu0 0
  %5887 = vmatprep.mubr.bf16.mxu0 0
  %5888 = vmatmul.mubr.bf16.gmra.mxu0 %v5238
  %v5889 = vpop.f32.mrf.mxu0
  %v5890 = vadd.f32 %v5849, %v5889
  %v5891 = vpop.f32.mrf.mxu0
  %v5892 = vadd.f32 %v5851, %v5891
  %v5893 = vpop.f32.mrf.mxu0
  %v5894 = vpop.f32.mrf.mxu0
  %5895 = vdwg.mxu0
  %5896 = vmatprep.subr.bf16.mxu0 %v3698
  %5897 = vmatpush1.bf16.msra.mxu0 %v3697
  %5898 = vmatprep.subr.bf16.mxu0 %v3681
  %5899 = vmatpush1.bf16.msra.mxu0 %v3680
  %5900 = vmatprep.subr.bf16.mxu0 %v3664
  %5901 = vmatpush1.bf16.msra.mxu0 %v3663
  %5902 = vmatprep.subr.bf16.mxu0 %v3647
  %5903 = vmatpush1.bf16.msra.mxu0 %v3646
  %5904 = vmatprep.subr.bf16.mxu0 %v3630
  %5905 = vmatpush1.bf16.msra.mxu0 %v3629
  %5906 = vmatprep.subr.bf16.mxu0 %v3613
  %5907 = vmatpush1.bf16.msra.mxu0 %v3612
  %5908 = vmatprep.subr.bf16.mxu0 %v3596
  %5909 = vmatpush1.bf16.msra.mxu0 %v3595
  %5910 = vmatprep.subr.bf16.mxu0 %v3579
  %5911 = vmatpush1.bf16.msra.mxu0 %v3578
  %5912 = vmatprep.subr.bf16.mxu0 %v3834
  %5913 = vmatpush2.bf16.msra.mxu0 %v3833
  %5914 = vmatprep.subr.bf16.mxu0 %v3817
  %5915 = vmatpush2.bf16.msra.mxu0 %v3816
  %5916 = vmatprep.subr.bf16.mxu0 %v3800
  %5917 = vmatpush2.bf16.msra.mxu0 %v3799
  %5918 = vmatprep.subr.bf16.mxu0 %v3783
  %5919 = vmatpush2.bf16.msra.mxu0 %v3782
  %5920 = vmatprep.subr.bf16.mxu0 %v3766
  %5921 = vmatpush2.bf16.msra.mxu0 %v3765
  %5922 = vmatprep.subr.bf16.mxu0 %v3749
  %5923 = vmatpush2.bf16.msra.mxu0 %v3748
  %5924 = vmatprep.subr.bf16.mxu0 %v3732
  %5925 = vmatpush2.bf16.msra.mxu0 %v3731
  %5926 = vmatprep.subr.bf16.mxu0 %v3715
  %5927 = vmatpush2.bf16.msra.mxu0 %v3714
  %5928 = vmatprep.mubr.bf16.mxu0 %v1010
  %5929 = vmatmul.mubr.bf16.gmra.mxu0 %v1009
  %v5930 = vpop.f32.mrf.mxu0
  %v5931 = vadd.f32 %v948, %v5930
  %v5932 = vpop.f32.mrf.mxu0
  %v5933 = vadd.f32 %v952, %v5932
  %v5934 = vpop.f32.mrf.mxu0
  %v5935 = vpop.f32.mrf.mxu0
  %5936 = vdwg.mxu0
  %5937 = vmatprep.subr.bf16.mxu0 %v3970
  %5938 = vmatpush1.bf16.msra.mxu0 %v3969
  %5939 = vmatprep.subr.bf16.mxu0 %v3953
  %5940 = vmatpush1.bf16.msra.mxu0 %v3952
  %5941 = vmatprep.subr.bf16.mxu0 %v3936
  %5942 = vmatpush1.bf16.msra.mxu0 %v3935
  %5943 = vmatprep.subr.bf16.mxu0 %v3919
  %5944 = vmatpush1.bf16.msra.mxu0 %v3918
  %5945 = vmatprep.subr.bf16.mxu0 %v3902
  %5946 = vmatpush1.bf16.msra.mxu0 %v3901
  %5947 = vmatprep.subr.bf16.mxu0 %v3885
  %5948 = vmatpush1.bf16.msra.mxu0 %v3884
  %5949 = vmatprep.subr.bf16.mxu0 %v3868
  %5950 = vmatpush1.bf16.msra.mxu0 %v3867
  %5951 = vmatprep.subr.bf16.mxu0 %v3851
  %5952 = vmatpush1.bf16.msra.mxu0 %v3850
  %5953 = vmatprep.subr.bf16.mxu0 %v4106
  %5954 = vmatpush2.bf16.msra.mxu0 %v4105
  %5955 = vmatprep.subr.bf16.mxu0 %v4089
  %5956 = vmatpush2.bf16.msra.mxu0 %v4088
  %5957 = vmatprep.subr.bf16.mxu0 %v4072
  %5958 = vmatpush2.bf16.msra.mxu0 %v4071
  %5959 = vmatprep.subr.bf16.mxu0 %v4055
  %5960 = vmatpush2.bf16.msra.mxu0 %v4054
  %5961 = vmatprep.subr.bf16.mxu0 %v4038
  %5962 = vmatpush2.bf16.msra.mxu0 %v4037
  %5963 = vmatprep.subr.bf16.mxu0 %v4021
  %5964 = vmatpush2.bf16.msra.mxu0 %v4020
  %5965 = vmatprep.subr.bf16.mxu0 %v4004
  %5966 = vmatpush2.bf16.msra.mxu0 %v4003
  %5967 = vmatprep.subr.bf16.mxu0 %v3987
  %5968 = vmatpush2.bf16.msra.mxu0 %v3986
  %5969 = vmatprep.mubr.bf16.mxu0 %v1012
  %5970 = vmatmul.mubr.bf16.gmra.mxu0 %v1011
  %v5971 = vpop.f32.mrf.mxu0
  %v5972 = vadd.f32 %v5931, %v5971
  %v5973 = vpop.f32.mrf.mxu0
  %v5974 = vadd.f32 %v5933, %v5973
  %v5975 = vpop.f32.mrf.mxu0
  %v5976 = vpop.f32.mrf.mxu0
  %5977 = vdwg.mxu0
  %5978 = vmatprep.subr.bf16.mxu0 %v4242
  %5979 = vmatpush1.bf16.msra.mxu0 %v4241
  %5980 = vmatprep.subr.bf16.mxu0 %v4225
  %5981 = vmatpush1.bf16.msra.mxu0 %v4224
  %5982 = vmatprep.subr.bf16.mxu0 %v4208
  %5983 = vmatpush1.bf16.msra.mxu0 %v4207
  %5984 = vmatprep.subr.bf16.mxu0 %v4191
  %5985 = vmatpush1.bf16.msra.mxu0 %v4190
  %5986 = vmatprep.subr.bf16.mxu0 %v4174
  %5987 = vmatpush1.bf16.msra.mxu0 %v4173
  %5988 = vmatprep.subr.bf16.mxu0 %v4157
  %5989 = vmatpush1.bf16.msra.mxu0 %v4156
  %5990 = vmatprep.subr.bf16.mxu0 %v4140
  %5991 = vmatpush1.bf16.msra.mxu0 %v4139
  %5992 = vmatprep.subr.bf16.mxu0 %v4123
  %5993 = vmatpush1.bf16.msra.mxu0 %v4122
  %5994 = vmatprep.subr.bf16.mxu0 %v4378
  %5995 = vmatpush2.bf16.msra.mxu0 %v4377
  %5996 = vmatprep.subr.bf16.mxu0 %v4361
  %5997 = vmatpush2.bf16.msra.mxu0 %v4360
  %5998 = vmatprep.subr.bf16.mxu0 %v4344
  %5999 = vmatpush2.bf16.msra.mxu0 %v4343
  %6000 = vmatprep.subr.bf16.mxu0 %v4327
  %6001 = vmatpush2.bf16.msra.mxu0 %v4326
  %6002 = vmatprep.subr.bf16.mxu0 %v4310
  %6003 = vmatpush2.bf16.msra.mxu0 %v4309
  %6004 = vmatprep.subr.bf16.mxu0 %v4293
  %6005 = vmatpush2.bf16.msra.mxu0 %v4292
  %6006 = vmatprep.subr.bf16.mxu0 %v4276
  %6007 = vmatpush2.bf16.msra.mxu0 %v4275
  %6008 = vmatprep.subr.bf16.mxu0 %v4259
  %6009 = vmatpush2.bf16.msra.mxu0 %v4258
  %6010 = vmatprep.mubr.bf16.mxu0 %v1014
  %6011 = vmatmul.mubr.bf16.gmra.mxu0 %v1013
  %v6012 = vpop.f32.mrf.mxu0
  %v6013 = vadd.f32 %v5972, %v6012
  %v6014 = vpop.f32.mrf.mxu0
  %v6015 = vadd.f32 %v5974, %v6014
  %v6016 = vpop.f32.mrf.mxu0
  %v6017 = vpop.f32.mrf.mxu0
  %6018 = vdwg.mxu0
  %6019 = vmatprep.subr.bf16.mxu0 0
  %6020 = vmatpush1.bf16.msra.mxu0 0
  %6021 = vmatprep.subr.bf16.mxu0 0
  %6022 = vmatpush1.bf16.msra.mxu0 0
  %6023 = vmatprep.subr.bf16.mxu0 0
  %6024 = vmatpush1.bf16.msra.mxu0 0
  %6025 = vmatprep.subr.bf16.mxu0 0
  %6026 = vmatpush1.bf16.msra.mxu0 0
  %6027 = vmatprep.subr.bf16.mxu0 0
  %6028 = vmatpush1.bf16.msra.mxu0 0
  %6029 = vmatprep.subr.bf16.mxu0 0
  %6030 = vmatpush1.bf16.msra.mxu0 0
  %6031 = vmatprep.subr.bf16.mxu0 0
  %6032 = vmatpush1.bf16.msra.mxu0 0
  %6033 = vmatprep.subr.bf16.mxu0 %v4395
  %6034 = vmatpush1.bf16.msra.mxu0 %v4394
  %6035 = vmatprep.subr.bf16.mxu0 0
  %6036 = vmatpush2.bf16.msra.mxu0 0
  %6037 = vmatprep.subr.bf16.mxu0 0
  %6038 = vmatpush2.bf16.msra.mxu0 0
  %6039 = vmatprep.subr.bf16.mxu0 0
  %6040 = vmatpush2.bf16.msra.mxu0 0
  %6041 = vmatprep.subr.bf16.mxu0 0
  %6042 = vmatpush2.bf16.msra.mxu0 0
  %6043 = vmatprep.subr.bf16.mxu0 0
  %6044 = vmatpush2.bf16.msra.mxu0 0
  %6045 = vmatprep.subr.bf16.mxu0 0
  %6046 = vmatpush2.bf16.msra.mxu0 0
  %6047 = vmatprep.subr.bf16.mxu0 0
  %6048 = vmatpush2.bf16.msra.mxu0 0
  %6049 = vmatprep.subr.bf16.mxu0 0
  %6050 = vmatpush2.bf16.msra.mxu0 0
  %6051 = vmatprep.mubr.bf16.mxu0 0
  %6052 = vmatmul.mubr.bf16.gmra.mxu0 %v5238
  %v6053 = vpop.f32.mrf.mxu0
  %v6054 = vadd.f32 %v6013, %v6053
  %v6055 = vpop.f32.mrf.mxu0
  %v6056 = vadd.f32 %v6015, %v6055
  %v6057 = vpop.f32.mrf.mxu0
  %v6058 = vpop.f32.mrf.mxu0
  %6059 = vdwg.mxu0
  %6060 = vmatprep.subr.bf16.mxu0 %v3700
  %6061 = vmatpush1.bf16.msra.mxu0 %v3699
  %6062 = vmatprep.subr.bf16.mxu0 %v3683
  %6063 = vmatpush1.bf16.msra.mxu0 %v3682
  %6064 = vmatprep.subr.bf16.mxu0 %v3666
  %6065 = vmatpush1.bf16.msra.mxu0 %v3665
  %6066 = vmatprep.subr.bf16.mxu0 %v3649
  %6067 = vmatpush1.bf16.msra.mxu0 %v3648
  %6068 = vmatprep.subr.bf16.mxu0 %v3632
  %6069 = vmatpush1.bf16.msra.mxu0 %v3631
  %6070 = vmatprep.subr.bf16.mxu0 %v3615
  %6071 = vmatpush1.bf16.msra.mxu0 %v3614
  %6072 = vmatprep.subr.bf16.mxu0 %v3598
  %6073 = vmatpush1.bf16.msra.mxu0 %v3597
  %6074 = vmatprep.subr.bf16.mxu0 %v3581
  %6075 = vmatpush1.bf16.msra.mxu0 %v3580
  %6076 = vmatprep.subr.bf16.mxu0 %v3836
  %6077 = vmatpush2.bf16.msra.mxu0 %v3835
  %6078 = vmatprep.subr.bf16.mxu0 %v3819
  %6079 = vmatpush2.bf16.msra.mxu0 %v3818
  %6080 = vmatprep.subr.bf16.mxu0 %v3802
  %6081 = vmatpush2.bf16.msra.mxu0 %v3801
  %6082 = vmatprep.subr.bf16.mxu0 %v3785
  %6083 = vmatpush2.bf16.msra.mxu0 %v3784
  %6084 = vmatprep.subr.bf16.mxu0 %v3768
  %6085 = vmatpush2.bf16.msra.mxu0 %v3767
  %6086 = vmatprep.subr.bf16.mxu0 %v3751
  %6087 = vmatpush2.bf16.msra.mxu0 %v3750
  %6088 = vmatprep.subr.bf16.mxu0 %v3734
  %6089 = vmatpush2.bf16.msra.mxu0 %v3733
  %6090 = vmatprep.subr.bf16.mxu0 %v3717
  %6091 = vmatpush2.bf16.msra.mxu0 %v3716
  %6092 = vmatprep.mubr.bf16.mxu0 %v1010
  %6093 = vmatmul.mubr.bf16.gmra.mxu0 %v1009
  %v6094 = vpop.f32.mrf.mxu0
  %v6095 = vadd.f32 %v956, %v6094
  %v6096 = vpop.f32.mrf.mxu0
  %v6097 = vadd.f32 %v960, %v6096
  %v6098 = vpop.f32.mrf.mxu0
  %v6099 = vpop.f32.mrf.mxu0
  %6100 = vdwg.mxu0
  %6101 = vmatprep.subr.bf16.mxu0 %v3972
  %6102 = vmatpush1.bf16.msra.mxu0 %v3971
  %6103 = vmatprep.subr.bf16.mxu0 %v3955
  %6104 = vmatpush1.bf16.msra.mxu0 %v3954
  %6105 = vmatprep.subr.bf16.mxu0 %v3938
  %6106 = vmatpush1.bf16.msra.mxu0 %v3937
  %6107 = vmatprep.subr.bf16.mxu0 %v3921
  %6108 = vmatpush1.bf16.msra.mxu0 %v3920
  %6109 = vmatprep.subr.bf16.mxu0 %v3904
  %6110 = vmatpush1.bf16.msra.mxu0 %v3903
  %6111 = vmatprep.subr.bf16.mxu0 %v3887
  %6112 = vmatpush1.bf16.msra.mxu0 %v3886
  %6113 = vmatprep.subr.bf16.mxu0 %v3870
  %6114 = vmatpush1.bf16.msra.mxu0 %v3869
  %6115 = vmatprep.subr.bf16.mxu0 %v3853
  %6116 = vmatpush1.bf16.msra.mxu0 %v3852
  %6117 = vmatprep.subr.bf16.mxu0 %v4108
  %6118 = vmatpush2.bf16.msra.mxu0 %v4107
  %6119 = vmatprep.subr.bf16.mxu0 %v4091
  %6120 = vmatpush2.bf16.msra.mxu0 %v4090
  %6121 = vmatprep.subr.bf16.mxu0 %v4074
  %6122 = vmatpush2.bf16.msra.mxu0 %v4073
  %6123 = vmatprep.subr.bf16.mxu0 %v4057
  %6124 = vmatpush2.bf16.msra.mxu0 %v4056
  %6125 = vmatprep.subr.bf16.mxu0 %v4040
  %6126 = vmatpush2.bf16.msra.mxu0 %v4039
  %6127 = vmatprep.subr.bf16.mxu0 %v4023
  %6128 = vmatpush2.bf16.msra.mxu0 %v4022
  %6129 = vmatprep.subr.bf16.mxu0 %v4006
  %6130 = vmatpush2.bf16.msra.mxu0 %v4005
  %6131 = vmatprep.subr.bf16.mxu0 %v3989
  %6132 = vmatpush2.bf16.msra.mxu0 %v3988
  %6133 = vmatprep.mubr.bf16.mxu0 %v1012
  %6134 = vmatmul.mubr.bf16.gmra.mxu0 %v1011
  %v6135 = vpop.f32.mrf.mxu0
  %v6136 = vadd.f32 %v6095, %v6135
  %v6137 = vpop.f32.mrf.mxu0
  %v6138 = vadd.f32 %v6097, %v6137
  %v6139 = vpop.f32.mrf.mxu0
  %v6140 = vpop.f32.mrf.mxu0
  %6141 = vdwg.mxu0
  %6142 = vmatprep.subr.bf16.mxu0 %v4244
  %6143 = vmatpush1.bf16.msra.mxu0 %v4243
  %6144 = vmatprep.subr.bf16.mxu0 %v4227
  %6145 = vmatpush1.bf16.msra.mxu0 %v4226
  %6146 = vmatprep.subr.bf16.mxu0 %v4210
  %6147 = vmatpush1.bf16.msra.mxu0 %v4209
  %6148 = vmatprep.subr.bf16.mxu0 %v4193
  %6149 = vmatpush1.bf16.msra.mxu0 %v4192
  %6150 = vmatprep.subr.bf16.mxu0 %v4176
  %6151 = vmatpush1.bf16.msra.mxu0 %v4175
  %6152 = vmatprep.subr.bf16.mxu0 %v4159
  %6153 = vmatpush1.bf16.msra.mxu0 %v4158
  %6154 = vmatprep.subr.bf16.mxu0 %v4142
  %6155 = vmatpush1.bf16.msra.mxu0 %v4141
  %6156 = vmatprep.subr.bf16.mxu0 %v4125
  %6157 = vmatpush1.bf16.msra.mxu0 %v4124
  %6158 = vmatprep.subr.bf16.mxu0 %v4380
  %6159 = vmatpush2.bf16.msra.mxu0 %v4379
  %6160 = vmatprep.subr.bf16.mxu0 %v4363
  %6161 = vmatpush2.bf16.msra.mxu0 %v4362
  %6162 = vmatprep.subr.bf16.mxu0 %v4346
  %6163 = vmatpush2.bf16.msra.mxu0 %v4345
  %6164 = vmatprep.subr.bf16.mxu0 %v4329
  %6165 = vmatpush2.bf16.msra.mxu0 %v4328
  %6166 = vmatprep.subr.bf16.mxu0 %v4312
  %6167 = vmatpush2.bf16.msra.mxu0 %v4311
  %6168 = vmatprep.subr.bf16.mxu0 %v4295
  %6169 = vmatpush2.bf16.msra.mxu0 %v4294
  %6170 = vmatprep.subr.bf16.mxu0 %v4278
  %6171 = vmatpush2.bf16.msra.mxu0 %v4277
  %6172 = vmatprep.subr.bf16.mxu0 %v4261
  %6173 = vmatpush2.bf16.msra.mxu0 %v4260
  %6174 = vmatprep.mubr.bf16.mxu0 %v1014
  %6175 = vmatmul.mubr.bf16.gmra.mxu0 %v1013
  %v6176 = vpop.f32.mrf.mxu0
  %v6177 = vadd.f32 %v6136, %v6176
  %v6178 = vpop.f32.mrf.mxu0
  %v6179 = vadd.f32 %v6138, %v6178
  %v6180 = vpop.f32.mrf.mxu0
  %v6181 = vpop.f32.mrf.mxu0
  %6182 = vdwg.mxu0
  %6183 = vmatprep.subr.bf16.mxu0 0
  %6184 = vmatpush1.bf16.msra.mxu0 0
  %6185 = vmatprep.subr.bf16.mxu0 0
  %6186 = vmatpush1.bf16.msra.mxu0 0
  %6187 = vmatprep.subr.bf16.mxu0 0
  %6188 = vmatpush1.bf16.msra.mxu0 0
  %6189 = vmatprep.subr.bf16.mxu0 0
  %6190 = vmatpush1.bf16.msra.mxu0 0
  %6191 = vmatprep.subr.bf16.mxu0 0
  %6192 = vmatpush1.bf16.msra.mxu0 0
  %6193 = vmatprep.subr.bf16.mxu0 0
  %6194 = vmatpush1.bf16.msra.mxu0 0
  %6195 = vmatprep.subr.bf16.mxu0 0
  %6196 = vmatpush1.bf16.msra.mxu0 0
  %6197 = vmatprep.subr.bf16.mxu0 %v4397
  %6198 = vmatpush1.bf16.msra.mxu0 %v4396
  %6199 = vmatprep.subr.bf16.mxu0 0
  %6200 = vmatpush2.bf16.msra.mxu0 0
  %6201 = vmatprep.subr.bf16.mxu0 0
  %6202 = vmatpush2.bf16.msra.mxu0 0
  %6203 = vmatprep.subr.bf16.mxu0 0
  %6204 = vmatpush2.bf16.msra.mxu0 0
  %6205 = vmatprep.subr.bf16.mxu0 0
  %6206 = vmatpush2.bf16.msra.mxu0 0
  %6207 = vmatprep.subr.bf16.mxu0 0
  %6208 = vmatpush2.bf16.msra.mxu0 0
  %6209 = vmatprep.subr.bf16.mxu0 0
  %6210 = vmatpush2.bf16.msra.mxu0 0
  %6211 = vmatprep.subr.bf16.mxu0 0
  %6212 = vmatpush2.bf16.msra.mxu0 0
  %6213 = vmatprep.subr.bf16.mxu0 0
  %6214 = vmatpush2.bf16.msra.mxu0 0
  %6215 = vmatprep.mubr.bf16.mxu0 0
  %6216 = vmatmul.mubr.bf16.gmra.mxu0 %v5238
  %v6217 = vpop.f32.mrf.mxu0
  %v6218 = vadd.f32 %v6177, %v6217
  %v6219 = vpop.f32.mrf.mxu0
  %v6220 = vadd.f32 %v6179, %v6219
  %v6221 = vpop.f32.mrf.mxu0
  %v6222 = vpop.f32.mrf.mxu0
  %6223 = vdwg.mxu0
  %6224 = vmatprep.subr.bf16.mxu0 %v3702
  %6225 = vmatpush1.bf16.msra.mxu0 %v3701
  %6226 = vmatprep.subr.bf16.mxu0 %v3685
  %6227 = vmatpush1.bf16.msra.mxu0 %v3684
  %6228 = vmatprep.subr.bf16.mxu0 %v3668
  %6229 = vmatpush1.bf16.msra.mxu0 %v3667
  %6230 = vmatprep.subr.bf16.mxu0 %v3651
  %6231 = vmatpush1.bf16.msra.mxu0 %v3650
  %6232 = vmatprep.subr.bf16.mxu0 %v3634
  %6233 = vmatpush1.bf16.msra.mxu0 %v3633
  %6234 = vmatprep.subr.bf16.mxu0 %v3617
  %6235 = vmatpush1.bf16.msra.mxu0 %v3616
  %6236 = vmatprep.subr.bf16.mxu0 %v3600
  %6237 = vmatpush1.bf16.msra.mxu0 %v3599
  %6238 = vmatprep.subr.bf16.mxu0 %v3583
  %6239 = vmatpush1.bf16.msra.mxu0 %v3582
  %6240 = vmatprep.subr.bf16.mxu0 %v3838
  %6241 = vmatpush2.bf16.msra.mxu0 %v3837
  %6242 = vmatprep.subr.bf16.mxu0 %v3821
  %6243 = vmatpush2.bf16.msra.mxu0 %v3820
  %6244 = vmatprep.subr.bf16.mxu0 %v3804
  %6245 = vmatpush2.bf16.msra.mxu0 %v3803
  %6246 = vmatprep.subr.bf16.mxu0 %v3787
  %6247 = vmatpush2.bf16.msra.mxu0 %v3786
  %6248 = vmatprep.subr.bf16.mxu0 %v3770
  %6249 = vmatpush2.bf16.msra.mxu0 %v3769
  %6250 = vmatprep.subr.bf16.mxu0 %v3753
  %6251 = vmatpush2.bf16.msra.mxu0 %v3752
  %6252 = vmatprep.subr.bf16.mxu0 %v3736
  %6253 = vmatpush2.bf16.msra.mxu0 %v3735
  %6254 = vmatprep.subr.bf16.mxu0 %v3719
  %6255 = vmatpush2.bf16.msra.mxu0 %v3718
  %6256 = vmatprep.mubr.bf16.mxu0 %v1010
  %6257 = vmatmul.mubr.bf16.gmra.mxu0 %v1009
  %v6258 = vpop.f32.mrf.mxu0
  %v6259 = vadd.f32 %v964, %v6258
  %v6260 = vpop.f32.mrf.mxu0
  %v6261 = vadd.f32 %v968, %v6260
  %v6262 = vpop.f32.mrf.mxu0
  %v6263 = vpop.f32.mrf.mxu0
  %6264 = vdwg.mxu0
  %6265 = vmatprep.subr.bf16.mxu0 %v3974
  %6266 = vmatpush1.bf16.msra.mxu0 %v3973
  %6267 = vmatprep.subr.bf16.mxu0 %v3957
  %6268 = vmatpush1.bf16.msra.mxu0 %v3956
  %6269 = vmatprep.subr.bf16.mxu0 %v3940
  %6270 = vmatpush1.bf16.msra.mxu0 %v3939
  %6271 = vmatprep.subr.bf16.mxu0 %v3923
  %6272 = vmatpush1.bf16.msra.mxu0 %v3922
  %6273 = vmatprep.subr.bf16.mxu0 %v3906
  %6274 = vmatpush1.bf16.msra.mxu0 %v3905
  %6275 = vmatprep.subr.bf16.mxu0 %v3889
  %6276 = vmatpush1.bf16.msra.mxu0 %v3888
  %6277 = vmatprep.subr.bf16.mxu0 %v3872
  %6278 = vmatpush1.bf16.msra.mxu0 %v3871
  %6279 = vmatprep.subr.bf16.mxu0 %v3855
  %6280 = vmatpush1.bf16.msra.mxu0 %v3854
  %6281 = vmatprep.subr.bf16.mxu0 %v4110
  %6282 = vmatpush2.bf16.msra.mxu0 %v4109
  %6283 = vmatprep.subr.bf16.mxu0 %v4093
  %6284 = vmatpush2.bf16.msra.mxu0 %v4092
  %6285 = vmatprep.subr.bf16.mxu0 %v4076
  %6286 = vmatpush2.bf16.msra.mxu0 %v4075
  %6287 = vmatprep.subr.bf16.mxu0 %v4059
  %6288 = vmatpush2.bf16.msra.mxu0 %v4058
  %6289 = vmatprep.subr.bf16.mxu0 %v4042
  %6290 = vmatpush2.bf16.msra.mxu0 %v4041
  %6291 = vmatprep.subr.bf16.mxu0 %v4025
  %6292 = vmatpush2.bf16.msra.mxu0 %v4024
  %6293 = vmatprep.subr.bf16.mxu0 %v4008
  %6294 = vmatpush2.bf16.msra.mxu0 %v4007
  %6295 = vmatprep.subr.bf16.mxu0 %v3991
  %6296 = vmatpush2.bf16.msra.mxu0 %v3990
  %6297 = vmatprep.mubr.bf16.mxu0 %v1012
  %6298 = vmatmul.mubr.bf16.gmra.mxu0 %v1011
  %v6299 = vpop.f32.mrf.mxu0
  %v6300 = vadd.f32 %v6259, %v6299
  %v6301 = vpop.f32.mrf.mxu0
  %v6302 = vadd.f32 %v6261, %v6301
  %v6303 = vpop.f32.mrf.mxu0
  %v6304 = vpop.f32.mrf.mxu0
  %6305 = vdwg.mxu0
  %6306 = vmatprep.subr.bf16.mxu0 %v4246
  %6307 = vmatpush1.bf16.msra.mxu0 %v4245
  %6308 = vmatprep.subr.bf16.mxu0 %v4229
  %6309 = vmatpush1.bf16.msra.mxu0 %v4228
  %6310 = vmatprep.subr.bf16.mxu0 %v4212
  %6311 = vmatpush1.bf16.msra.mxu0 %v4211
  %6312 = vmatprep.subr.bf16.mxu0 %v4195
  %6313 = vmatpush1.bf16.msra.mxu0 %v4194
  %6314 = vmatprep.subr.bf16.mxu0 %v4178
  %6315 = vmatpush1.bf16.msra.mxu0 %v4177
  %6316 = vmatprep.subr.bf16.mxu0 %v4161
  %6317 = vmatpush1.bf16.msra.mxu0 %v4160
  %6318 = vmatprep.subr.bf16.mxu0 %v4144
  %6319 = vmatpush1.bf16.msra.mxu0 %v4143
  %6320 = vmatprep.subr.bf16.mxu0 %v4127
  %6321 = vmatpush1.bf16.msra.mxu0 %v4126
  %6322 = vmatprep.subr.bf16.mxu0 %v4382
  %6323 = vmatpush2.bf16.msra.mxu0 %v4381
  %6324 = vmatprep.subr.bf16.mxu0 %v4365
  %6325 = vmatpush2.bf16.msra.mxu0 %v4364
  %6326 = vmatprep.subr.bf16.mxu0 %v4348
  %6327 = vmatpush2.bf16.msra.mxu0 %v4347
  %6328 = vmatprep.subr.bf16.mxu0 %v4331
  %6329 = vmatpush2.bf16.msra.mxu0 %v4330
  %6330 = vmatprep.subr.bf16.mxu0 %v4314
  %6331 = vmatpush2.bf16.msra.mxu0 %v4313
  %6332 = vmatprep.subr.bf16.mxu0 %v4297
  %6333 = vmatpush2.bf16.msra.mxu0 %v4296
  %6334 = vmatprep.subr.bf16.mxu0 %v4280
  %6335 = vmatpush2.bf16.msra.mxu0 %v4279
  %6336 = vmatprep.subr.bf16.mxu0 %v4263
  %6337 = vmatpush2.bf16.msra.mxu0 %v4262
  %6338 = vmatprep.mubr.bf16.mxu0 %v1014
  %6339 = vmatmul.mubr.bf16.gmra.mxu0 %v1013
  %v6340 = vpop.f32.mrf.mxu0
  %v6341 = vadd.f32 %v6300, %v6340
  %v6342 = vpop.f32.mrf.mxu0
  %v6343 = vadd.f32 %v6302, %v6342
  %v6344 = vpop.f32.mrf.mxu0
  %v6345 = vpop.f32.mrf.mxu0
  %6346 = vdwg.mxu0
  %6347 = vmatprep.subr.bf16.mxu0 0
  %6348 = vmatpush1.bf16.msra.mxu0 0
  %6349 = vmatprep.subr.bf16.mxu0 0
  %6350 = vmatpush1.bf16.msra.mxu0 0
  %6351 = vmatprep.subr.bf16.mxu0 0
  %6352 = vmatpush1.bf16.msra.mxu0 0
  %6353 = vmatprep.subr.bf16.mxu0 0
  %6354 = vmatpush1.bf16.msra.mxu0 0
  %6355 = vmatprep.subr.bf16.mxu0 0
  %6356 = vmatpush1.bf16.msra.mxu0 0
  %6357 = vmatprep.subr.bf16.mxu0 0
  %6358 = vmatpush1.bf16.msra.mxu0 0
  %6359 = vmatprep.subr.bf16.mxu0 0
  %6360 = vmatpush1.bf16.msra.mxu0 0
  %6361 = vmatprep.subr.bf16.mxu0 %v4399
  %6362 = vmatpush1.bf16.msra.mxu0 %v4398
  %6363 = vmatprep.subr.bf16.mxu0 0
  %6364 = vmatpush2.bf16.msra.mxu0 0
  %6365 = vmatprep.subr.bf16.mxu0 0
  %6366 = vmatpush2.bf16.msra.mxu0 0
  %6367 = vmatprep.subr.bf16.mxu0 0
  %6368 = vmatpush2.bf16.msra.mxu0 0
  %6369 = vmatprep.subr.bf16.mxu0 0
  %6370 = vmatpush2.bf16.msra.mxu0 0
  %6371 = vmatprep.subr.bf16.mxu0 0
  %6372 = vmatpush2.bf16.msra.mxu0 0
  %6373 = vmatprep.subr.bf16.mxu0 0
  %6374 = vmatpush2.bf16.msra.mxu0 0
  %6375 = vmatprep.subr.bf16.mxu0 0
  %6376 = vmatpush2.bf16.msra.mxu0 0
  %6377 = vmatprep.subr.bf16.mxu0 0
  %6378 = vmatpush2.bf16.msra.mxu0 0
  %6379 = vmatprep.mubr.bf16.mxu0 0
  %6380 = vmatmul.mubr.bf16.gmra.mxu0 %v5238
  %v6381 = vpop.f32.mrf.mxu0
  %v6382 = vadd.f32 %v6341, %v6381
  %v6383 = vpop.f32.mrf.mxu0
  %v6384 = vadd.f32 %v6343, %v6383
  %v6385 = vpop.f32.mrf.mxu0
  %v6386 = vpop.f32.mrf.mxu0
  %6387 = vdwg.mxu0
  %6388 = vmatprep.subr.bf16.mxu0 %v3704
  %6389 = vmatpush1.bf16.msra.mxu0 %v3703
  %6390 = vmatprep.subr.bf16.mxu0 %v3687
  %6391 = vmatpush1.bf16.msra.mxu0 %v3686
  %6392 = vmatprep.subr.bf16.mxu0 %v3670
  %6393 = vmatpush1.bf16.msra.mxu0 %v3669
  %6394 = vmatprep.subr.bf16.mxu0 %v3653
  %6395 = vmatpush1.bf16.msra.mxu0 %v3652
  %6396 = vmatprep.subr.bf16.mxu0 %v3636
  %6397 = vmatpush1.bf16.msra.mxu0 %v3635
  %6398 = vmatprep.subr.bf16.mxu0 %v3619
  %6399 = vmatpush1.bf16.msra.mxu0 %v3618
  %6400 = vmatprep.subr.bf16.mxu0 %v3602
  %6401 = vmatpush1.bf16.msra.mxu0 %v3601
  %6402 = vmatprep.subr.bf16.mxu0 %v3585
  %6403 = vmatpush1.bf16.msra.mxu0 %v3584
  %6404 = vmatprep.subr.bf16.mxu0 %v3840
  %6405 = vmatpush2.bf16.msra.mxu0 %v3839
  %6406 = vmatprep.subr.bf16.mxu0 %v3823
  %6407 = vmatpush2.bf16.msra.mxu0 %v3822
  %6408 = vmatprep.subr.bf16.mxu0 %v3806
  %6409 = vmatpush2.bf16.msra.mxu0 %v3805
  %6410 = vmatprep.subr.bf16.mxu0 %v3789
  %6411 = vmatpush2.bf16.msra.mxu0 %v3788
  %6412 = vmatprep.subr.bf16.mxu0 %v3772
  %6413 = vmatpush2.bf16.msra.mxu0 %v3771
  %6414 = vmatprep.subr.bf16.mxu0 %v3755
  %6415 = vmatpush2.bf16.msra.mxu0 %v3754
  %6416 = vmatprep.subr.bf16.mxu0 %v3738
  %6417 = vmatpush2.bf16.msra.mxu0 %v3737
  %6418 = vmatprep.subr.bf16.mxu0 %v3721
  %6419 = vmatpush2.bf16.msra.mxu0 %v3720
  %6420 = vmatprep.mubr.bf16.mxu0 %v1010
  %6421 = vmatmul.mubr.bf16.gmra.mxu0 %v1009
  %v6422 = vpop.f32.mrf.mxu0
  %v6423 = vadd.f32 %v972, %v6422
  %v6424 = vpop.f32.mrf.mxu0
  %v6425 = vadd.f32 %v976, %v6424
  %v6426 = vpop.f32.mrf.mxu0
  %v6427 = vpop.f32.mrf.mxu0
  %6428 = vdwg.mxu0
  %6429 = vmatprep.subr.bf16.mxu0 %v3976
  %6430 = vmatpush1.bf16.msra.mxu0 %v3975
  %6431 = vmatprep.subr.bf16.mxu0 %v3959
  %6432 = vmatpush1.bf16.msra.mxu0 %v3958
  %6433 = vmatprep.subr.bf16.mxu0 %v3942
  %6434 = vmatpush1.bf16.msra.mxu0 %v3941
  %6435 = vmatprep.subr.bf16.mxu0 %v3925
  %6436 = vmatpush1.bf16.msra.mxu0 %v3924
  %6437 = vmatprep.subr.bf16.mxu0 %v3908
  %6438 = vmatpush1.bf16.msra.mxu0 %v3907
  %6439 = vmatprep.subr.bf16.mxu0 %v3891
  %6440 = vmatpush1.bf16.msra.mxu0 %v3890
  %6441 = vmatprep.subr.bf16.mxu0 %v3874
  %6442 = vmatpush1.bf16.msra.mxu0 %v3873
  %6443 = vmatprep.subr.bf16.mxu0 %v3857
  %6444 = vmatpush1.bf16.msra.mxu0 %v3856
  %6445 = vmatprep.subr.bf16.mxu0 %v4112
  %6446 = vmatpush2.bf16.msra.mxu0 %v4111
  %6447 = vmatprep.subr.bf16.mxu0 %v4095
  %6448 = vmatpush2.bf16.msra.mxu0 %v4094
  %6449 = vmatprep.subr.bf16.mxu0 %v4078
  %6450 = vmatpush2.bf16.msra.mxu0 %v4077
  %6451 = vmatprep.subr.bf16.mxu0 %v4061
  %6452 = vmatpush2.bf16.msra.mxu0 %v4060
  %6453 = vmatprep.subr.bf16.mxu0 %v4044
  %6454 = vmatpush2.bf16.msra.mxu0 %v4043
  %6455 = vmatprep.subr.bf16.mxu0 %v4027
  %6456 = vmatpush2.bf16.msra.mxu0 %v4026
  %6457 = vmatprep.subr.bf16.mxu0 %v4010
  %6458 = vmatpush2.bf16.msra.mxu0 %v4009
  %6459 = vmatprep.subr.bf16.mxu0 %v3993
  %6460 = vmatpush2.bf16.msra.mxu0 %v3992
  %6461 = vmatprep.mubr.bf16.mxu0 %v1012
  %6462 = vmatmul.mubr.bf16.gmra.mxu0 %v1011
  %v6463 = vpop.f32.mrf.mxu0
  %v6464 = vadd.f32 %v6423, %v6463
  %v6465 = vpop.f32.mrf.mxu0
  %v6466 = vadd.f32 %v6425, %v6465
  %v6467 = vpop.f32.mrf.mxu0
  %v6468 = vpop.f32.mrf.mxu0
  %6469 = vdwg.mxu0
  %6470 = vmatprep.subr.bf16.mxu0 %v4248
  %6471 = vmatpush1.bf16.msra.mxu0 %v4247
  %6472 = vmatprep.subr.bf16.mxu0 %v4231
  %6473 = vmatpush1.bf16.msra.mxu0 %v4230
  %6474 = vmatprep.subr.bf16.mxu0 %v4214
  %6475 = vmatpush1.bf16.msra.mxu0 %v4213
  %6476 = vmatprep.subr.bf16.mxu0 %v4197
  %6477 = vmatpush1.bf16.msra.mxu0 %v4196
  %6478 = vmatprep.subr.bf16.mxu0 %v4180
  %6479 = vmatpush1.bf16.msra.mxu0 %v4179
  %6480 = vmatprep.subr.bf16.mxu0 %v4163
  %6481 = vmatpush1.bf16.msra.mxu0 %v4162
  %6482 = vmatprep.subr.bf16.mxu0 %v4146
  %6483 = vmatpush1.bf16.msra.mxu0 %v4145
  %6484 = vmatprep.subr.bf16.mxu0 %v4129
  %6485 = vmatpush1.bf16.msra.mxu0 %v4128
  %6486 = vmatprep.subr.bf16.mxu0 %v4384
  %6487 = vmatpush2.bf16.msra.mxu0 %v4383
  %6488 = vmatprep.subr.bf16.mxu0 %v4367
  %6489 = vmatpush2.bf16.msra.mxu0 %v4366
  %6490 = vmatprep.subr.bf16.mxu0 %v4350
  %6491 = vmatpush2.bf16.msra.mxu0 %v4349
  %6492 = vmatprep.subr.bf16.mxu0 %v4333
  %6493 = vmatpush2.bf16.msra.mxu0 %v4332
  %6494 = vmatprep.subr.bf16.mxu0 %v4316
  %6495 = vmatpush2.bf16.msra.mxu0 %v4315
  %6496 = vmatprep.subr.bf16.mxu0 %v4299
  %6497 = vmatpush2.bf16.msra.mxu0 %v4298
  %6498 = vmatprep.subr.bf16.mxu0 %v4282
  %6499 = vmatpush2.bf16.msra.mxu0 %v4281
  %6500 = vmatprep.subr.bf16.mxu0 %v4265
  %6501 = vmatpush2.bf16.msra.mxu0 %v4264
  %6502 = vmatprep.mubr.bf16.mxu0 %v1014
  %6503 = vmatmul.mubr.bf16.gmra.mxu0 %v1013
  %v6504 = vpop.f32.mrf.mxu0
  %v6505 = vadd.f32 %v6464, %v6504
  %v6506 = vpop.f32.mrf.mxu0
  %v6507 = vadd.f32 %v6466, %v6506
  %v6508 = vpop.f32.mrf.mxu0
  %v6509 = vpop.f32.mrf.mxu0
  %6510 = vdwg.mxu0
  %6511 = vmatprep.subr.bf16.mxu0 0
  %6512 = vmatpush1.bf16.msra.mxu0 0
  %6513 = vmatprep.subr.bf16.mxu0 0
  %6514 = vmatpush1.bf16.msra.mxu0 0
  %6515 = vmatprep.subr.bf16.mxu0 0
  %6516 = vmatpush1.bf16.msra.mxu0 0
  %6517 = vmatprep.subr.bf16.mxu0 0
  %6518 = vmatpush1.bf16.msra.mxu0 0
  %6519 = vmatprep.subr.bf16.mxu0 0
  %6520 = vmatpush1.bf16.msra.mxu0 0
  %6521 = vmatprep.subr.bf16.mxu0 0
  %6522 = vmatpush1.bf16.msra.mxu0 0
  %6523 = vmatprep.subr.bf16.mxu0 0
  %6524 = vmatpush1.bf16.msra.mxu0 0
  %6525 = vmatprep.subr.bf16.mxu0 %v4401
  %6526 = vmatpush1.bf16.msra.mxu0 %v4400
  %6527 = vmatprep.subr.bf16.mxu0 0
  %6528 = vmatpush2.bf16.msra.mxu0 0
  %6529 = vmatprep.subr.bf16.mxu0 0
  %6530 = vmatpush2.bf16.msra.mxu0 0
  %6531 = vmatprep.subr.bf16.mxu0 0
  %6532 = vmatpush2.bf16.msra.mxu0 0
  %6533 = vmatprep.subr.bf16.mxu0 0
  %6534 = vmatpush2.bf16.msra.mxu0 0
  %6535 = vmatprep.subr.bf16.mxu0 0
  %6536 = vmatpush2.bf16.msra.mxu0 0
  %6537 = vmatprep.subr.bf16.mxu0 0
  %6538 = vmatpush2.bf16.msra.mxu0 0
  %6539 = vmatprep.subr.bf16.mxu0 0
  %6540 = vmatpush2.bf16.msra.mxu0 0
  %6541 = vmatprep.subr.bf16.mxu0 0
  %6542 = vmatpush2.bf16.msra.mxu0 0
  %6543 = vmatprep.mubr.bf16.mxu0 0
  %6544 = vmatmul.mubr.bf16.gmra.mxu0 %v5238
  %v6545 = vpop.f32.mrf.mxu0
  %v6546 = vadd.f32 %v6505, %v6545
  %v6547 = vpop.f32.mrf.mxu0
  %v6548 = vadd.f32 %v6507, %v6547
  %v6549 = vpop.f32.mrf.mxu0
  %v6550 = vpop.f32.mrf.mxu0
  %6551 = vdwg.mxu0
  %6552 = vmatprep.subr.bf16.mxu0 0
  %6553 = vmatpush1.bf16.msra.mxu0 %v3705
  %6554 = vmatprep.subr.bf16.mxu0 0
  %6555 = vmatpush1.bf16.msra.mxu0 %v3688
  %6556 = vmatprep.subr.bf16.mxu0 0
  %6557 = vmatpush1.bf16.msra.mxu0 %v3671
  %6558 = vmatprep.subr.bf16.mxu0 0
  %6559 = vmatpush1.bf16.msra.mxu0 %v3654
  %6560 = vmatprep.subr.bf16.mxu0 0
  %6561 = vmatpush1.bf16.msra.mxu0 %v3637
  %6562 = vmatprep.subr.bf16.mxu0 0
  %6563 = vmatpush1.bf16.msra.mxu0 %v3620
  %6564 = vmatprep.subr.bf16.mxu0 0
  %6565 = vmatpush1.bf16.msra.mxu0 %v3603
  %6566 = vmatprep.subr.bf16.mxu0 0
  %6567 = vmatpush1.bf16.msra.mxu0 %v3586
  %6568 = vmatprep.subr.bf16.mxu0 0
  %6569 = vmatpush2.bf16.msra.mxu0 %v3841
  %6570 = vmatprep.subr.bf16.mxu0 0
  %6571 = vmatpush2.bf16.msra.mxu0 %v3824
  %6572 = vmatprep.subr.bf16.mxu0 0
  %6573 = vmatpush2.bf16.msra.mxu0 %v3807
  %6574 = vmatprep.subr.bf16.mxu0 0
  %6575 = vmatpush2.bf16.msra.mxu0 %v3790
  %6576 = vmatprep.subr.bf16.mxu0 0
  %6577 = vmatpush2.bf16.msra.mxu0 %v3773
  %6578 = vmatprep.subr.bf16.mxu0 0
  %6579 = vmatpush2.bf16.msra.mxu0 %v3756
  %6580 = vmatprep.subr.bf16.mxu0 0
  %6581 = vmatpush2.bf16.msra.mxu0 %v3739
  %6582 = vmatprep.subr.bf16.mxu0 0
  %6583 = vmatpush2.bf16.msra.mxu0 %v3722
  %6584 = vmatprep.mubr.bf16.mxu0 %v1010
  %6585 = vmatmul.mubr.bf16.gmra.mxu0 %v1009
  %v6586 = vpop.f32.mrf.mxu0
  %v6587 = vadd.f32 %v980, %v6586
  %v6588 = vpop.f32.mrf.mxu0
  %v6589 = vpop.f32.mrf.mxu0
  %v6590 = vpop.f32.mrf.mxu0
  %6591 = vdwg.mxu0
  %6592 = vmatprep.subr.bf16.mxu0 0
  %6593 = vmatpush1.bf16.msra.mxu0 %v3977
  %6594 = vmatprep.subr.bf16.mxu0 0
  %6595 = vmatpush1.bf16.msra.mxu0 %v3960
  %6596 = vmatprep.subr.bf16.mxu0 0
  %6597 = vmatpush1.bf16.msra.mxu0 %v3943
  %6598 = vmatprep.subr.bf16.mxu0 0
  %6599 = vmatpush1.bf16.msra.mxu0 %v3926
  %6600 = vmatprep.subr.bf16.mxu0 0
  %6601 = vmatpush1.bf16.msra.mxu0 %v3909
  %6602 = vmatprep.subr.bf16.mxu0 0
  %6603 = vmatpush1.bf16.msra.mxu0 %v3892
  %6604 = vmatprep.subr.bf16.mxu0 0
  %6605 = vmatpush1.bf16.msra.mxu0 %v3875
  %6606 = vmatprep.subr.bf16.mxu0 0
  %6607 = vmatpush1.bf16.msra.mxu0 %v3858
  %6608 = vmatprep.subr.bf16.mxu0 0
  %6609 = vmatpush2.bf16.msra.mxu0 %v4113
  %6610 = vmatprep.subr.bf16.mxu0 0
  %6611 = vmatpush2.bf16.msra.mxu0 %v4096
  %6612 = vmatprep.subr.bf16.mxu0 0
  %6613 = vmatpush2.bf16.msra.mxu0 %v4079
  %6614 = vmatprep.subr.bf16.mxu0 0
  %6615 = vmatpush2.bf16.msra.mxu0 %v4062
  %6616 = vmatprep.subr.bf16.mxu0 0
  %6617 = vmatpush2.bf16.msra.mxu0 %v4045
  %6618 = vmatprep.subr.bf16.mxu0 0
  %6619 = vmatpush2.bf16.msra.mxu0 %v4028
  %6620 = vmatprep.subr.bf16.mxu0 0
  %6621 = vmatpush2.bf16.msra.mxu0 %v4011
  %6622 = vmatprep.subr.bf16.mxu0 0
  %6623 = vmatpush2.bf16.msra.mxu0 %v3994
  %6624 = vmatprep.mubr.bf16.mxu0 %v1012
  %6625 = vmatmul.mubr.bf16.gmra.mxu0 %v1011
  %v6626 = vpop.f32.mrf.mxu0
  %v6627 = vadd.f32 %v6587, %v6626
  %v6628 = vpop.f32.mrf.mxu0
  %v6629 = vpop.f32.mrf.mxu0
  %v6630 = vpop.f32.mrf.mxu0
  %6631 = vdwg.mxu0
  %6632 = vmatprep.subr.bf16.mxu0 0
  %6633 = vmatpush1.bf16.msra.mxu0 %v4249
  %6634 = vmatprep.subr.bf16.mxu0 0
  %6635 = vmatpush1.bf16.msra.mxu0 %v4232
  %6636 = vmatprep.subr.bf16.mxu0 0
  %6637 = vmatpush1.bf16.msra.mxu0 %v4215
  %6638 = vmatprep.subr.bf16.mxu0 0
  %6639 = vmatpush1.bf16.msra.mxu0 %v4198
  %6640 = vmatprep.subr.bf16.mxu0 0
  %6641 = vmatpush1.bf16.msra.mxu0 %v4181
  %6642 = vmatprep.subr.bf16.mxu0 0
  %6643 = vmatpush1.bf16.msra.mxu0 %v4164
  %6644 = vmatprep.subr.bf16.mxu0 0
  %6645 = vmatpush1.bf16.msra.mxu0 %v4147
  %6646 = vmatprep.subr.bf16.mxu0 0
  %6647 = vmatpush1.bf16.msra.mxu0 %v4130
  %6648 = vmatprep.subr.bf16.mxu0 0
  %6649 = vmatpush2.bf16.msra.mxu0 %v4385
  %6650 = vmatprep.subr.bf16.mxu0 0
  %6651 = vmatpush2.bf16.msra.mxu0 %v4368
  %6652 = vmatprep.subr.bf16.mxu0 0
  %6653 = vmatpush2.bf16.msra.mxu0 %v4351
  %6654 = vmatprep.subr.bf16.mxu0 0
  %6655 = vmatpush2.bf16.msra.mxu0 %v4334
  %6656 = vmatprep.subr.bf16.mxu0 0
  %6657 = vmatpush2.bf16.msra.mxu0 %v4317
  %6658 = vmatprep.subr.bf16.mxu0 0
  %6659 = vmatpush2.bf16.msra.mxu0 %v4300
  %6660 = vmatprep.subr.bf16.mxu0 0
  %6661 = vmatpush2.bf16.msra.mxu0 %v4283
  %6662 = vmatprep.subr.bf16.mxu0 0
  %6663 = vmatpush2.bf16.msra.mxu0 %v4266
  %6664 = vmatprep.mubr.bf16.mxu0 %v1014
  %6665 = vmatmul.mubr.bf16.gmra.mxu0 %v1013
  %v6666 = vpop.f32.mrf.mxu0
  %v6667 = vadd.f32 %v6627, %v6666
  %v6668 = vpop.f32.mrf.mxu0
  %v6669 = vpop.f32.mrf.mxu0
  %v6670 = vpop.f32.mrf.mxu0
  %6671 = vdwg.mxu0
  %6672 = vmatprep.subr.bf16.mxu0 0
  %6673 = vmatpush1.bf16.msra.mxu0 0
  %6674 = vmatprep.subr.bf16.mxu0 0
  %6675 = vmatpush1.bf16.msra.mxu0 0
  %6676 = vmatprep.subr.bf16.mxu0 0
  %6677 = vmatpush1.bf16.msra.mxu0 0
  %6678 = vmatprep.subr.bf16.mxu0 0
  %6679 = vmatpush1.bf16.msra.mxu0 0
  %6680 = vmatprep.subr.bf16.mxu0 0
  %6681 = vmatpush1.bf16.msra.mxu0 0
  %6682 = vmatprep.subr.bf16.mxu0 0
  %6683 = vmatpush1.bf16.msra.mxu0 0
  %6684 = vmatprep.subr.bf16.mxu0 0
  %6685 = vmatpush1.bf16.msra.mxu0 0
  %6686 = vmatprep.subr.bf16.mxu0 0
  %6687 = vmatpush1.bf16.msra.mxu0 %v4402
  %6688 = vmatprep.subr.bf16.mxu0 0
  %6689 = vmatpush2.bf16.msra.mxu0 0
  %6690 = vmatprep.subr.bf16.mxu0 0
  %6691 = vmatpush2.bf16.msra.mxu0 0
  %6692 = vmatprep.subr.bf16.mxu0 0
  %6693 = vmatpush2.bf16.msra.mxu0 0
  %6694 = vmatprep.subr.bf16.mxu0 0
  %6695 = vmatpush2.bf16.msra.mxu0 0
  %6696 = vmatprep.subr.bf16.mxu0 0
  %6697 = vmatpush2.bf16.msra.mxu0 0
  %6698 = vmatprep.subr.bf16.mxu0 0
  %6699 = vmatpush2.bf16.msra.mxu0 0
  %6700 = vmatprep.subr.bf16.mxu0 0
  %6701 = vmatpush2.bf16.msra.mxu0 0
  %6702 = vmatprep.subr.bf16.mxu0 0
  %6703 = vmatpush2.bf16.msra.mxu0 0
  %6704 = vmatprep.mubr.bf16.mxu0 0
  %6705 = vmatmul.mubr.bf16.gmra.mxu0 %v5238
  %v6706 = vpop.f32.mrf.mxu0
  %v6707 = vadd.f32 %v6667, %v6706
  %v6708 = vpop.f32.mrf.mxu0
  %v6709 = vpop.f32.mrf.mxu0
  %v6710 = vpop.f32.mrf.mxu0
  %6711 = vdwg.mxu0
  %v6712 = vmax.f32 %v5398, 0.0
  %v6713 = vmax.f32 %v5400, 0.0
  %v6714 = vmax.f32 %v5562, 0.0
  %v6715 = vmax.f32 %v5564, 0.0
  %v6716 = vmax.f32 %v5726, 0.0
  %v6717 = vmax.f32 %v5728, 0.0
  %v6718 = vmax.f32 %v5890, 0.0
  %v6719 = vmax.f32 %v5892, 0.0
  %v6720 = vmax.f32 %v6054, 0.0
  %v6721 = vmax.f32 %v6056, 0.0
  %v6722 = vmax.f32 %v6218, 0.0
  %v6723 = vmax.f32 %v6220, 0.0
  %v6724 = vmax.f32 %v6382, 0.0
  %v6725 = vmax.f32 %v6384, 0.0
  %v6726 = vmax.f32 %v6546, 0.0
  %v6727 = vmax.f32 %v6548, 0.0
  %v6728 = vmax.f32 %v6707, 0.0
  %v6729 = vpack.c.bf16 %v6712, %v6712
  %v6730 = vpack.c.bf16 %v6713, %v6713
  %v6731 = vpack.c.bf16 %v6714, %v6714
  %v6732 = vpack.c.bf16 %v6715, %v6715
  %v6733 = vpack.c.bf16 %v6716, %v6716
  %v6734 = vpack.c.bf16 %v6717, %v6717
  %v6735 = vpack.c.bf16 %v6718, %v6718
  %v6736 = vpack.c.bf16 %v6719, %v6719
  %v6737 = vpack.c.bf16 %v6720, %v6720
  %v6738 = vpack.c.bf16 %v6721, %v6721
  %v6739 = vpack.c.bf16 %v6722, %v6722
  %v6740 = vpack.c.bf16 %v6723, %v6723
  %v6741 = vpack.c.bf16 %v6724, %v6724
  %v6742 = vpack.c.bf16 %v6725, %v6725
  %v6743 = vpack.c.bf16 %v6726, %v6726
  %v6744 = vpack.c.bf16 %v6727, %v6727
  %v6745 = vpack.c.bf16 %v6728, %v6728
  %v6746 = vld [vmem:[%s3] sm:$0xf]
  %v6747 = vld [vmem:[%s3 + $0x4] sm:$0xf]
  %v6748 = vld [vmem:[%s3 + $0x8] sm:$0xf]
  %v6749 = vld [vmem:[%s3 + $0xc] sm:$0xf]
  %v6750 = vld [vmem:[%s3 + $0x10] sm:$0xf]
  %v6751 = vld [vmem:[%s3 + $0x14] sm:$0xf]
  %v6752 = vld [vmem:[%s3 + $0x18] sm:$0xf]
  %v6753 = vld [vmem:[%s3 + $0x1c] sm:$0xf]
  %v6754 = vld [vmem:[%s3 + $0x20] sm:$0xf]
  %v6755 = vld [vmem:[%s3 + $0x24] sm:$0xf]
  %v6756 = vld [vmem:[%s3 + $0x28] sm:$0xf]
  %v6757 = vld [vmem:[%s3 + $0x2c] sm:$0xf]
  %v6758 = vld [vmem:[%s3 + $0x30] sm:$0xf]
  %v6759 = vld [vmem:[%s3 + $0x34] sm:$0xf]
  %v6760 = vld [vmem:[%s3 + $0x38] sm:$0xf]
  %v6761 = vld [vmem:[%s3 + $0x3c] sm:$0xf]
  %v6762 = vld [vmem:[%s3 + $0x40] sm:$0xf]
  %v6763 = vld [vmem:[%s3 + $0x44] sm:$0xf]
  %v6764 = vld [vmem:[%s3 + $0x48] sm:$0xf]
  %v6765 = vld [vmem:[%s3 + $0x4c] sm:$0xf]
  %v6766 = vld [vmem:[%s3 + $0x50] sm:$0xf]
  %v6767 = vld [vmem:[%s3 + $0x54] sm:$0xf]
  %v6768 = vld [vmem:[%s3 + $0x58] sm:$0xf]
  %v6769 = vld [vmem:[%s3 + $0x5c] sm:$0xf]
  %v6770 = vld [vmem:[%s3 + $0x60] sm:$0xf]
  %v6771 = vld [vmem:[%s3 + $0x64] sm:$0xf]
  %v6772 = vld [vmem:[%s3 + $0x68] sm:$0xf]
  %v6773 = vld [vmem:[%s3 + $0x6c] sm:$0xf]
  %v6774 = vld [vmem:[%s3 + $0x70] sm:$0xf]
  %v6775 = vld [vmem:[%s3 + $0x74] sm:$0xf]
  %v6776 = vld [vmem:[%s3 + $0x78] sm:$0xf]
  %v6777 = vld [vmem:[%s3 + $0x7c] sm:$0xf]
  %v6778 = vld [vmem:[%s3 + $0x80] sm:$0xf]
  %v6779 = vld [vmem:[%s3 + $0x84] sm:$0xf]
  %v6780 = vld [vmem:[%s3 + $0x88] sm:$0xf]
  %v6781 = vld [vmem:[%s3 + $0x8c] sm:$0xf]
  %v6782 = vld [vmem:[%s3 + $0x90] sm:$0xf]
  %v6783 = vld [vmem:[%s3 + $0x94] sm:$0xf]
  %v6784 = vld [vmem:[%s3 + $0x98] sm:$0xf]
  %v6785 = vld [vmem:[%s3 + $0x9c] sm:$0xf]
  %v6786 = vld [vmem:[%s3 + $0xa0] sm:$0xf]
  %v6787 = vld [vmem:[%s3 + $0xa4] sm:$0xf]
  %v6788 = vld [vmem:[%s3 + $0xa8] sm:$0xf]
  %v6789 = vld [vmem:[%s3 + $0xac] sm:$0xf]
  %v6790 = vld [vmem:[%s3 + $0xb0] sm:$0xf]
  %v6791 = vld [vmem:[%s3 + $0xb4] sm:$0xf]
  %v6792 = vld [vmem:[%s3 + $0xb8] sm:$0xf]
  %v6793 = vld [vmem:[%s3 + $0xbc] sm:$0xf]
  %v6794 = vld [vmem:[%s3 + $0xc0] sm:$0xf]
  %v6795 = vld [vmem:[%s3 + $0xc4] sm:$0xf]
  %v6796 = vld [vmem:[%s3 + $0xc8] sm:$0xf]
  %v6797 = vld [vmem:[%s3 + $0xcc] sm:$0xf]
  %v6798 = vld [vmem:[%s3 + $0xd0] sm:$0xf]
  %v6799 = vld [vmem:[%s3 + $0xd4] sm:$0xf]
  %v6800 = vld [vmem:[%s3 + $0xd8] sm:$0xf]
  %v6801 = vld [vmem:[%s3 + $0xdc] sm:$0xf]
  %v6802 = vld [vmem:[%s3 + $0xe0] sm:$0xf]
  %v6803 = vld [vmem:[%s3 + $0xe4] sm:$0xf]
  %v6804 = vld [vmem:[%s3 + $0xe8] sm:$0xf]
  %v6805 = vld [vmem:[%s3 + $0xec] sm:$0xf]
  %v6806 = vld [vmem:[%s3 + $0xf0] sm:$0xf]
  %v6807 = vld [vmem:[%s3 + $0xf4] sm:$0xf]
  %v6808 = vld [vmem:[%s3 + $0xf8] sm:$0xf]
  %v6809 = vld [vmem:[%s3 + $0xfc] sm:$0xf]
  %v6810 = vld [vmem:[%s3 + $0x100] sm:$0xf]
  %v6811 = vld [vmem:[%s3 + $0x104] sm:$0xf]
  %v6812 = vld [vmem:[%s3 + $0x108] sm:$0xf]
  %v6813 = vld [vmem:[%s3 + $0x10c] sm:$0xf]
  %v6814 = vld [vmem:[%s3 + $0x110] sm:$0xf]
  %v6815 = vld [vmem:[%s3 + $0x114] sm:$0xf]
  %v6816 = vld [vmem:[%s3 + $0x118] sm:$0xf]
  %v6817 = vld [vmem:[%s3 + $0x11c] sm:$0xf]
  %v6818 = vld [vmem:[%s3 + $0x120] sm:$0xf]
  %v6819 = vld [vmem:[%s3 + $0x124] sm:$0xf]
  %v6820 = vld [vmem:[%s3 + $0x128] sm:$0xf]
  %v6821 = vld [vmem:[%s3 + $0x12c] sm:$0xf]
  %v6822 = vld [vmem:[%s3 + $0x130] sm:$0xf]
  %v6823 = vld [vmem:[%s3 + $0x134] sm:$0xf]
  %v6824 = vld [vmem:[%s3 + $0x138] sm:$0xf]
  %v6825 = vld [vmem:[%s3 + $0x13c] sm:$0xf]
  %v6826 = vld [vmem:[%s3 + $0x140] sm:$0xf]
  %v6827 = vld [vmem:[%s3 + $0x144] sm:$0xf]
  %v6828 = vld [vmem:[%s3 + $0x148] sm:$0xf]
  %v6829 = vld [vmem:[%s3 + $0x14c] sm:$0xf]
  %v6830 = vld [vmem:[%s3 + $0x150] sm:$0xf]
  %v6831 = vld [vmem:[%s3 + $0x154] sm:$0xf]
  %v6832 = vld [vmem:[%s3 + $0x158] sm:$0xf]
  %v6833 = vld [vmem:[%s3 + $0x15c] sm:$0xf]
  %v6834 = vld [vmem:[%s3 + $0x160] sm:$0xf]
  %v6835 = vld [vmem:[%s3 + $0x164] sm:$0xf]
  %v6836 = vld [vmem:[%s3 + $0x168] sm:$0xf]
  %v6837 = vld [vmem:[%s3 + $0x16c] sm:$0xf]
  %v6838 = vld [vmem:[%s3 + $0x170] sm:$0xf]
  %v6839 = vld [vmem:[%s3 + $0x174] sm:$0xf]
  %v6840 = vld [vmem:[%s3 + $0x178] sm:$0xf]
  %v6841 = vld [vmem:[%s3 + $0x17c] sm:$0xf]
  %v6842 = vld [vmem:[%s3 + $0x180] sm:$0xf]
  %v6843 = vld [vmem:[%s3 + $0x184] sm:$0xf]
  %v6844 = vld [vmem:[%s3 + $0x188] sm:$0xf]
  %v6845 = vld [vmem:[%s3 + $0x18c] sm:$0xf]
  %v6846 = vld [vmem:[%s3 + $0x190] sm:$0xf]
  %v6847 = vld [vmem:[%s3 + $0x194] sm:$0xf]
  %v6848 = vld [vmem:[%s3 + $0x198] sm:$0xf]
  %v6849 = vld [vmem:[%s3 + $0x19c] sm:$0xf]
  %v6850 = vld [vmem:[%s3 + $0x1a0] sm:$0xf]
  %v6851 = vld [vmem:[%s3 + $0x1a4] sm:$0xf]
  %v6852 = vld [vmem:[%s3 + $0x1a8] sm:$0xf]
  %v6853 = vld [vmem:[%s3 + $0x1ac] sm:$0xf]
  %v6854 = vld [vmem:[%s3 + $0x1b0] sm:$0xf]
  %v6855 = vld [vmem:[%s3 + $0x1b4] sm:$0xf]
  %v6856 = vld [vmem:[%s3 + $0x1b8] sm:$0xf]
  %v6857 = vld [vmem:[%s3 + $0x1bc] sm:$0xf]
  %v6858 = vld [vmem:[%s3 + $0x1c0] sm:$0xf]
  %v6859 = vld [vmem:[%s3 + $0x1c4] sm:$0xf]
  %v6860 = vld [vmem:[%s3 + $0x1c8] sm:$0xf]
  %v6861 = vld [vmem:[%s3 + $0x1cc] sm:$0xf]
  %v6862 = vld [vmem:[%s3 + $0x1d0] sm:$0xf]
  %v6863 = vld [vmem:[%s3 + $0x1d4] sm:$0xf]
  %v6864 = vld [vmem:[%s3 + $0x1d8] sm:$0xf]
  %v6865 = vld [vmem:[%s3 + $0x1dc] sm:$0xf]
  %v6866 = vld [vmem:[%s3 + $0x1e0] sm:$0xf]
  %v6867 = vld [vmem:[%s3 + $0x1e4] sm:$0xf]
  %v6868 = vld [vmem:[%s3 + $0x1e8] sm:$0xf]
  %v6869 = vld [vmem:[%s3 + $0x1ec] sm:$0xf]
  %v6870 = vld [vmem:[%s3 + $0x1f0] sm:$0xf]
  %v6871 = vld [vmem:[%s3 + $0x1f4] sm:$0xf]
  %v6872 = vld [vmem:[%s3 + $0x1f8] sm:$0xf]
  %v6873 = vld [vmem:[%s3 + $0x1fc] sm:$0xf]
  %v6874 = vld [vmem:[%s3 + $0x200] sm:$0xf]
  %v6875 = vld [vmem:[%s3 + $0x204] sm:$0xf]
  %v6876 = vld [vmem:[%s3 + $0x208] sm:$0xf]
  %v6877 = vld [vmem:[%s3 + $0x20c] sm:$0xf]
  %v6878 = vld [vmem:[%s3 + $0x210] sm:$0xf]
  %v6879 = vld [vmem:[%s3 + $0x214] sm:$0xf]
  %v6880 = vld [vmem:[%s3 + $0x218] sm:$0xf]
  %v6881 = vld [vmem:[%s3 + $0x21c] sm:$0xf]
  %v6882 = vld [vmem:[%s3 + $0x220] sm:$0xf]
  %v6883 = vld [vmem:[%s3 + $0x224] sm:$0xf]
  %v6884 = vld [vmem:[%s3 + $0x228] sm:$0xf]
  %v6885 = vld [vmem:[%s3 + $0x22c] sm:$0xf]
  %v6886 = vld [vmem:[%s3 + $0x230] sm:$0xf]
  %v6887 = vld [vmem:[%s3 + $0x234] sm:$0xf]
  %v6888 = vld [vmem:[%s3 + $0x238] sm:$0xf]
  %v6889 = vld [vmem:[%s3 + $0x23c] sm:$0xf]
  %v6890 = vld [vmem:[%s3 + $0x240] sm:$0xf]
  %v6891 = vld [vmem:[%s3 + $0x244] sm:$0xf]
  %v6892 = vld [vmem:[%s3 + $0x248] sm:$0xf]
  %v6893 = vld [vmem:[%s3 + $0x24c] sm:$0xf]
  %v6894 = vld [vmem:[%s3 + $0x250] sm:$0xf]
  %v6895 = vld [vmem:[%s3 + $0x254] sm:$0xf]
  %v6896 = vld [vmem:[%s3 + $0x258] sm:$0xf]
  %v6897 = vld [vmem:[%s3 + $0x25c] sm:$0xf]
  %v6898 = vld [vmem:[%s3 + $0x260] sm:$0xf]
  %v6899 = vld [vmem:[%s3 + $0x264] sm:$0xf]
  %v6900 = vld [vmem:[%s3 + $0x268] sm:$0xf]
  %v6901 = vld [vmem:[%s3 + $0x26c] sm:$0xf]
  %v6902 = vld [vmem:[%s3 + $0x270] sm:$0xf]
  %v6903 = vld [vmem:[%s3 + $0x274] sm:$0xf]
  %v6904 = vld [vmem:[%s3 + $0x278] sm:$0xf]
  %v6905 = vld [vmem:[%s3 + $0x27c] sm:$0xf]
  %v6906 = vld [vmem:[%s3 + $0x280] sm:$0xf]
  %v6907 = vld [vmem:[%s3 + $0x284] sm:$0xf]
  %v6908 = vld [vmem:[%s3 + $0x288] sm:$0xf]
  %v6909 = vld [vmem:[%s3 + $0x28c] sm:$0xf]
  %v6910 = vld [vmem:[%s3 + $0x290] sm:$0xf]
  %v6911 = vld [vmem:[%s3 + $0x294] sm:$0xf]
  %v6912 = vld [vmem:[%s3 + $0x298] sm:$0xf]
  %v6913 = vld [vmem:[%s3 + $0x29c] sm:$0xf]
  %v6914 = vld [vmem:[%s3 + $0x2a0] sm:$0xf]
  %v6915 = vld [vmem:[%s3 + $0x2a4] sm:$0xf]
  %v6916 = vld [vmem:[%s3 + $0x2a8] sm:$0xf]
  %v6917 = vld [vmem:[%s3 + $0x2ac] sm:$0xf]
  %v6918 = vld [vmem:[%s3 + $0x2b0] sm:$0xf]
  %v6919 = vld [vmem:[%s3 + $0x2b4] sm:$0xf]
  %v6920 = vld [vmem:[%s3 + $0x2b8] sm:$0xf]
  %v6921 = vld [vmem:[%s3 + $0x2bc] sm:$0xf]
  %v6922 = vld [vmem:[%s3 + $0x2c0] sm:$0xf]
  %v6923 = vld [vmem:[%s3 + $0x2c4] sm:$0xf]
  %v6924 = vld [vmem:[%s3 + $0x2c8] sm:$0xf]
  %v6925 = vld [vmem:[%s3 + $0x2cc] sm:$0xf]
  %v6926 = vld [vmem:[%s3 + $0x2d0] sm:$0xf]
  %v6927 = vld [vmem:[%s3 + $0x2d4] sm:$0xf]
  %v6928 = vld [vmem:[%s3 + $0x2d8] sm:$0xf]
  %v6929 = vld [vmem:[%s3 + $0x2dc] sm:$0xf]
  %v6930 = vld [vmem:[%s3 + $0x2e0] sm:$0xf]
  %v6931 = vld [vmem:[%s3 + $0x2e4] sm:$0xf]
  %v6932 = vld [vmem:[%s3 + $0x2e8] sm:$0xf]
  %v6933 = vld [vmem:[%s3 + $0x2ec] sm:$0xf]
  %v6934 = vld [vmem:[%s3 + $0x2f0] sm:$0xf]
  %v6935 = vld [vmem:[%s3 + $0x2f4] sm:$0xf]
  %v6936 = vld [vmem:[%s3 + $0x2f8] sm:$0xf]
  %v6937 = vld [vmem:[%s3 + $0x2fc] sm:$0xf]
  %v6938 = vld [vmem:[%s3 + $0x300] sm:$0xf]
  %v6939 = vld [vmem:[%s3 + $0x304] sm:$0xf]
  %v6940 = vld [vmem:[%s3 + $0x308] sm:$0xf]
  %v6941 = vld [vmem:[%s3 + $0x30c] sm:$0xf]
  %v6942 = vld [vmem:[%s3 + $0x310] sm:$0xf]
  %v6943 = vld [vmem:[%s3 + $0x314] sm:$0xf]
  %v6944 = vld [vmem:[%s3 + $0x318] sm:$0xf]
  %v6945 = vld [vmem:[%s3 + $0x31c] sm:$0xf]
  %v6946 = vld [vmem:[%s3 + $0x320] sm:$0xf]
  %v6947 = vld [vmem:[%s3 + $0x324] sm:$0xf]
  %v6948 = vld [vmem:[%s3 + $0x328] sm:$0xf]
  %v6949 = vld [vmem:[%s3 + $0x32c] sm:$0xf]
  %v6950 = vld [vmem:[%s3 + $0x330] sm:$0xf]
  %v6951 = vld [vmem:[%s3 + $0x334] sm:$0xf]
  %v6952 = vld [vmem:[%s3 + $0x338] sm:$0xf]
  %v6953 = vld [vmem:[%s3 + $0x33c] sm:$0xf]
  %v6954 = vld [vmem:[%s3 + $0x340] sm:$0xf]
  %v6955 = vld [vmem:[%s3 + $0x344] sm:$0xf]
  %v6956 = vld [vmem:[%s3 + $0x348] sm:$0xf]
  %v6957 = vld [vmem:[%s3 + $0x34c] sm:$0xf]
  %v6958 = vld [vmem:[%s3 + $0x350] sm:$0xf]
  %v6959 = vld [vmem:[%s3 + $0x354] sm:$0xf]
  %v6960 = vld [vmem:[%s3 + $0x358] sm:$0xf]
  %v6961 = vld [vmem:[%s3 + $0x35c] sm:$0xf]
  %v6962 = vld [vmem:[%s3 + $0x360] sm:$0xf]
  %v6963 = vld [vmem:[%s3 + $0x364] sm:$0xf]
  %v6964 = vld [vmem:[%s3 + $0x368] sm:$0xf]
  %v6965 = vld [vmem:[%s3 + $0x36c] sm:$0xf]
  %v6966 = vld [vmem:[%s3 + $0x370] sm:$0xf]
  %v6967 = vld [vmem:[%s3 + $0x374] sm:$0xf]
  %v6968 = vld [vmem:[%s3 + $0x378] sm:$0xf]
  %v6969 = vld [vmem:[%s3 + $0x37c] sm:$0xf]
  %v6970 = vld [vmem:[%s3 + $0x380] sm:$0xf]
  %v6971 = vld [vmem:[%s3 + $0x384] sm:$0xf]
  %v6972 = vld [vmem:[%s3 + $0x388] sm:$0xf]
  %v6973 = vld [vmem:[%s3 + $0x38c] sm:$0xf]
  %v6974 = vld [vmem:[%s3 + $0x390] sm:$0xf]
  %v6975 = vld [vmem:[%s3 + $0x394] sm:$0xf]
  %v6976 = vld [vmem:[%s3 + $0x398] sm:$0xf]
  %v6977 = vld [vmem:[%s3 + $0x39c] sm:$0xf]
  %v6978 = vld [vmem:[%s3 + $0x3a0] sm:$0xf]
  %v6979 = vld [vmem:[%s3 + $0x3a4] sm:$0xf]
  %v6980 = vld [vmem:[%s3 + $0x3a8] sm:$0xf]
  %v6981 = vld [vmem:[%s3 + $0x3ac] sm:$0xf]
  %v6982 = vld [vmem:[%s3 + $0x3b0] sm:$0xf]
  %v6983 = vld [vmem:[%s3 + $0x3b4] sm:$0xf]
  %v6984 = vld [vmem:[%s3 + $0x3b8] sm:$0xf]
  %v6985 = vld [vmem:[%s3 + $0x3bc] sm:$0xf]
  %v6986 = vld [vmem:[%s3 + $0x3c0] sm:$0xf]
  %v6987 = vld [vmem:[%s3 + $0x3c4] sm:$0xf]
  %v6988 = vld [vmem:[%s3 + $0x3c8] sm:$0xf]
  %v6989 = vld [vmem:[%s3 + $0x3cc] sm:$0xf]
  %v6990 = vld [vmem:[%s3 + $0x3d0] sm:$0xf]
  %v6991 = vld [vmem:[%s3 + $0x3d4] sm:$0xf]
  %v6992 = vld [vmem:[%s3 + $0x3d8] sm:$0xf]
  %v6993 = vld [vmem:[%s3 + $0x3dc] sm:$0xf]
  %v6994 = vld [vmem:[%s3 + $0x3e0] sm:$0xf]
  %v6995 = vld [vmem:[%s3 + $0x3e4] sm:$0xf]
  %v6996 = vld [vmem:[%s3 + $0x3e8] sm:$0xf]
  %v6997 = vld [vmem:[%s3 + $0x3ec] sm:$0xf]
  %v6998 = vld [vmem:[%s3 + $0x3f0] sm:$0xf]
  %v6999 = vld [vmem:[%s3 + $0x3f4] sm:$0xf]
  %v7000 = vld [vmem:[%s3 + $0x3f8] sm:$0xf]
  %v7001 = vld [vmem:[%s3 + $0x3fc] sm:$0xf]
  %v7002 = vld [vmem:[%s3 + $0x400] sm:$0xf]
  %v7003 = vld [vmem:[%s4] sm:$0x1]
  %v7005 = vlaneseq
  %v7006 = vshrl.u32 %v7005, 7
  %v7007 = vsub.s32 0, %v7006
  %v7008 = vrot.slane %v7003, %v7007
  %v7267 = vunpack.c.l.b16 %v6746
  %v7268 = vunpack.c.l.b16 %v6747
  %v7269 = vunpack.c.l.b16 %v6748
  %v7270 = vunpack.c.l.b16 %v6749
  %v7271 = vunpack.c.l.b16 %v6750
  %v7272 = vunpack.c.l.b16 %v6751
  %v7273 = vunpack.c.l.b16 %v6752
  %v7274 = vunpack.c.l.b16 %v6753
  %v7275 = vunpack.c.l.b16 %v6754
  %v7276 = vunpack.c.l.b16 %v6755
  %v7277 = vunpack.c.l.b16 %v6756
  %v7278 = vunpack.c.l.b16 %v6757
  %v7279 = vunpack.c.l.b16 %v6758
  %v7280 = vunpack.c.l.b16 %v6759
  %v7281 = vunpack.c.l.b16 %v6760
  %v7282 = vunpack.c.l.b16 %v6761
  %v7283 = vunpack.c.l.b16 %v6762
  %v7284 = vunpack.c.l.b16 %v6763
  %v7285 = vunpack.c.l.b16 %v6764
  %v7286 = vunpack.c.l.b16 %v6765
  %v7287 = vunpack.c.l.b16 %v6766
  %v7288 = vunpack.c.l.b16 %v6767
  %v7289 = vunpack.c.l.b16 %v6768
  %v7290 = vunpack.c.l.b16 %v6769
  %v7291 = vunpack.c.l.b16 %v6770
  %v7292 = vunpack.c.l.b16 %v6771
  %v7293 = vunpack.c.l.b16 %v6772
  %v7294 = vunpack.c.l.b16 %v6773
  %v7295 = vunpack.c.l.b16 %v6774
  %v7296 = vunpack.c.l.b16 %v6775
  %v7297 = vunpack.c.l.b16 %v6776
  %v7298 = vunpack.c.l.b16 %v6777
  %v7299 = vunpack.c.l.b16 %v6778
  %v7300 = vunpack.c.l.b16 %v6779
  %v7301 = vunpack.c.l.b16 %v6780
  %v7302 = vunpack.c.l.b16 %v6781
  %v7303 = vunpack.c.l.b16 %v6782
  %v7304 = vunpack.c.l.b16 %v6783
  %v7305 = vunpack.c.l.b16 %v6784
  %v7306 = vunpack.c.l.b16 %v6785
  %v7307 = vunpack.c.l.b16 %v6786
  %v7308 = vunpack.c.l.b16 %v6787
  %v7309 = vunpack.c.l.b16 %v6788
  %v7310 = vunpack.c.l.b16 %v6789
  %v7311 = vunpack.c.l.b16 %v6790
  %v7312 = vunpack.c.l.b16 %v6791
  %v7313 = vunpack.c.l.b16 %v6792
  %v7314 = vunpack.c.l.b16 %v6793
  %v7315 = vunpack.c.l.b16 %v6794
  %v7316 = vunpack.c.l.b16 %v6795
  %v7317 = vunpack.c.l.b16 %v6796
  %v7318 = vunpack.c.l.b16 %v6797
  %v7319 = vunpack.c.l.b16 %v6798
  %v7320 = vunpack.c.l.b16 %v6799
  %v7321 = vunpack.c.l.b16 %v6800
  %v7322 = vunpack.c.l.b16 %v6801
  %v7323 = vunpack.c.l.b16 %v6802
  %v7324 = vunpack.c.l.b16 %v6803
  %v7325 = vunpack.c.l.b16 %v6804
  %v7326 = vunpack.c.l.b16 %v6805
  %v7327 = vunpack.c.l.b16 %v6806
  %v7328 = vunpack.c.l.b16 %v6807
  %v7329 = vunpack.c.l.b16 %v6808
  %v7330 = vunpack.c.l.b16 %v6809
  %v7331 = vunpack.c.l.b16 %v6810
  %v7332 = vunpack.c.l.b16 %v6811
  %v7333 = vunpack.c.l.b16 %v6812
  %v7334 = vunpack.c.l.b16 %v6813
  %v7335 = vunpack.c.l.b16 %v6814
  %v7336 = vunpack.c.l.b16 %v6815
  %v7337 = vunpack.c.l.b16 %v6816
  %v7338 = vunpack.c.l.b16 %v6817
  %v7339 = vunpack.c.l.b16 %v6818
  %v7340 = vunpack.c.l.b16 %v6819
  %v7341 = vunpack.c.l.b16 %v6820
  %v7342 = vunpack.c.l.b16 %v6821
  %v7343 = vunpack.c.l.b16 %v6822
  %v7344 = vunpack.c.l.b16 %v6823
  %v7345 = vunpack.c.l.b16 %v6824
  %v7346 = vunpack.c.l.b16 %v6825
  %v7347 = vunpack.c.l.b16 %v6826
  %v7348 = vunpack.c.l.b16 %v6827
  %v7349 = vunpack.c.l.b16 %v6828
  %v7350 = vunpack.c.l.b16 %v6829
  %v7351 = vunpack.c.l.b16 %v6830
  %v7352 = vunpack.c.l.b16 %v6831
  %v7353 = vunpack.c.l.b16 %v6832
  %v7354 = vunpack.c.l.b16 %v6833
  %v7355 = vunpack.c.l.b16 %v6834
  %v7356 = vunpack.c.l.b16 %v6835
  %v7357 = vunpack.c.l.b16 %v6836
  %v7358 = vunpack.c.l.b16 %v6837
  %v7359 = vunpack.c.l.b16 %v6838
  %v7360 = vunpack.c.l.b16 %v6839
  %v7361 = vunpack.c.l.b16 %v6840
  %v7362 = vunpack.c.l.b16 %v6841
  %v7363 = vunpack.c.l.b16 %v6842
  %v7364 = vunpack.c.l.b16 %v6843
  %v7365 = vunpack.c.l.b16 %v6844
  %v7366 = vunpack.c.l.b16 %v6845
  %v7367 = vunpack.c.l.b16 %v6846
  %v7368 = vunpack.c.l.b16 %v6847
  %v7369 = vunpack.c.l.b16 %v6848
  %v7370 = vunpack.c.l.b16 %v6849
  %v7371 = vunpack.c.l.b16 %v6850
  %v7372 = vunpack.c.l.b16 %v6851
  %v7373 = vunpack.c.l.b16 %v6852
  %v7374 = vunpack.c.l.b16 %v6853
  %v7375 = vunpack.c.l.b16 %v6854
  %v7376 = vunpack.c.l.b16 %v6855
  %v7377 = vunpack.c.l.b16 %v6856
  %v7378 = vunpack.c.l.b16 %v6857
  %v7379 = vunpack.c.l.b16 %v6858
  %v7380 = vunpack.c.l.b16 %v6859
  %v7381 = vunpack.c.l.b16 %v6860
  %v7382 = vunpack.c.l.b16 %v6861
  %v7383 = vunpack.c.l.b16 %v6862
  %v7384 = vunpack.c.l.b16 %v6863
  %v7385 = vunpack.c.l.b16 %v6864
  %v7386 = vunpack.c.l.b16 %v6865
  %v7387 = vunpack.c.l.b16 %v6866
  %v7388 = vunpack.c.l.b16 %v6867
  %v7389 = vunpack.c.l.b16 %v6868
  %v7390 = vunpack.c.l.b16 %v6869
  %v7391 = vunpack.c.l.b16 %v6870
  %v7392 = vunpack.c.l.b16 %v6871
  %v7393 = vunpack.c.l.b16 %v6872
  %v7394 = vunpack.c.l.b16 %v6873
  %v7395 = vunpack.c.l.b16 %v6874
  %v7396 = vunpack.c.l.b16 %v6875
  %v7397 = vunpack.c.l.b16 %v6876
  %v7398 = vunpack.c.l.b16 %v6877
  %v7399 = vunpack.c.l.b16 %v6878
  %v7400 = vunpack.c.l.b16 %v6879
  %v7401 = vunpack.c.l.b16 %v6880
  %v7402 = vunpack.c.l.b16 %v6881
  %v7403 = vunpack.c.l.b16 %v6882
  %v7404 = vunpack.c.l.b16 %v6883
  %v7405 = vunpack.c.l.b16 %v6884
  %v7406 = vunpack.c.l.b16 %v6885
  %v7407 = vunpack.c.l.b16 %v6886
  %v7408 = vunpack.c.l.b16 %v6887
  %v7409 = vunpack.c.l.b16 %v6888
  %v7410 = vunpack.c.l.b16 %v6889
  %v7411 = vunpack.c.l.b16 %v6890
  %v7412 = vunpack.c.l.b16 %v6891
  %v7413 = vunpack.c.l.b16 %v6892
  %v7414 = vunpack.c.l.b16 %v6893
  %v7415 = vunpack.c.l.b16 %v6894
  %v7416 = vunpack.c.l.b16 %v6895
  %v7417 = vunpack.c.l.b16 %v6896
  %v7418 = vunpack.c.l.b16 %v6897
  %v7419 = vunpack.c.l.b16 %v6898
  %v7420 = vunpack.c.l.b16 %v6899
  %v7421 = vunpack.c.l.b16 %v6900
  %v7422 = vunpack.c.l.b16 %v6901
  %v7423 = vunpack.c.l.b16 %v6902
  %v7424 = vunpack.c.l.b16 %v6903
  %v7425 = vunpack.c.l.b16 %v6904
  %v7426 = vunpack.c.l.b16 %v6905
  %v7427 = vunpack.c.l.b16 %v6906
  %v7428 = vunpack.c.l.b16 %v6907
  %v7429 = vunpack.c.l.b16 %v6908
  %v7430 = vunpack.c.l.b16 %v6909
  %v7431 = vunpack.c.l.b16 %v6910
  %v7432 = vunpack.c.l.b16 %v6911
  %v7433 = vunpack.c.l.b16 %v6912
  %v7434 = vunpack.c.l.b16 %v6913
  %v7435 = vunpack.c.l.b16 %v6914
  %v7436 = vunpack.c.l.b16 %v6915
  %v7437 = vunpack.c.l.b16 %v6916
  %v7438 = vunpack.c.l.b16 %v6917
  %v7439 = vunpack.c.l.b16 %v6918
  %v7440 = vunpack.c.l.b16 %v6919
  %v7441 = vunpack.c.l.b16 %v6920
  %v7442 = vunpack.c.l.b16 %v6921
  %v7443 = vunpack.c.l.b16 %v6922
  %v7444 = vunpack.c.l.b16 %v6923
  %v7445 = vunpack.c.l.b16 %v6924
  %v7446 = vunpack.c.l.b16 %v6925
  %v7447 = vunpack.c.l.b16 %v6926
  %v7448 = vunpack.c.l.b16 %v6927
  %v7449 = vunpack.c.l.b16 %v6928
  %v7450 = vunpack.c.l.b16 %v6929
  %v7451 = vunpack.c.l.b16 %v6930
  %v7452 = vunpack.c.l.b16 %v6931
  %v7453 = vunpack.c.l.b16 %v6932
  %v7454 = vunpack.c.l.b16 %v6933
  %v7455 = vunpack.c.l.b16 %v6934
  %v7456 = vunpack.c.l.b16 %v6935
  %v7457 = vunpack.c.l.b16 %v6936
  %v7458 = vunpack.c.l.b16 %v6937
  %v7459 = vunpack.c.l.b16 %v6938
  %v7460 = vunpack.c.l.b16 %v6939
  %v7461 = vunpack.c.l.b16 %v6940
  %v7462 = vunpack.c.l.b16 %v6941
  %v7463 = vunpack.c.l.b16 %v6942
  %v7464 = vunpack.c.l.b16 %v6943
  %v7465 = vunpack.c.l.b16 %v6944
  %v7466 = vunpack.c.l.b16 %v6945
  %v7467 = vunpack.c.l.b16 %v6946
  %v7468 = vunpack.c.l.b16 %v6947
  %v7469 = vunpack.c.l.b16 %v6948
  %v7470 = vunpack.c.l.b16 %v6949
  %v7471 = vunpack.c.l.b16 %v6950
  %v7472 = vunpack.c.l.b16 %v6951
  %v7473 = vunpack.c.l.b16 %v6952
  %v7474 = vunpack.c.l.b16 %v6953
  %v7475 = vunpack.c.l.b16 %v6954
  %v7476 = vunpack.c.l.b16 %v6955
  %v7477 = vunpack.c.l.b16 %v6956
  %v7478 = vunpack.c.l.b16 %v6957
  %v7479 = vunpack.c.l.b16 %v6958
  %v7480 = vunpack.c.l.b16 %v6959
  %v7481 = vunpack.c.l.b16 %v6960
  %v7482 = vunpack.c.l.b16 %v6961
  %v7483 = vunpack.c.l.b16 %v6962
  %v7484 = vunpack.c.l.b16 %v6963
  %v7485 = vunpack.c.l.b16 %v6964
  %v7486 = vunpack.c.l.b16 %v6965
  %v7487 = vunpack.c.l.b16 %v6966
  %v7488 = vunpack.c.l.b16 %v6967
  %v7489 = vunpack.c.l.b16 %v6968
  %v7490 = vunpack.c.l.b16 %v6969
  %v7491 = vunpack.c.l.b16 %v6970
  %v7492 = vunpack.c.l.b16 %v6971
  %v7493 = vunpack.c.l.b16 %v6972
  %v7494 = vunpack.c.l.b16 %v6973
  %v7495 = vunpack.c.l.b16 %v6974
  %v7496 = vunpack.c.l.b16 %v6975
  %v7497 = vunpack.c.l.b16 %v6976
  %v7498 = vunpack.c.l.b16 %v6977
  %v7499 = vunpack.c.l.b16 %v6978
  %v7500 = vunpack.c.l.b16 %v6979
  %v7501 = vunpack.c.l.b16 %v6980
  %v7502 = vunpack.c.l.b16 %v6981
  %v7503 = vunpack.c.l.b16 %v6982
  %v7504 = vunpack.c.l.b16 %v6983
  %v7505 = vunpack.c.l.b16 %v6984
  %v7506 = vunpack.c.l.b16 %v6985
  %v7507 = vunpack.c.l.b16 %v6986
  %v7508 = vunpack.c.l.b16 %v6987
  %v7509 = vunpack.c.l.b16 %v6988
  %v7510 = vunpack.c.l.b16 %v6989
  %v7511 = vunpack.c.l.b16 %v6990
  %v7512 = vunpack.c.l.b16 %v6991
  %v7513 = vunpack.c.l.b16 %v6992
  %v7514 = vunpack.c.l.b16 %v6993
  %v7515 = vunpack.c.l.b16 %v6994
  %v7516 = vunpack.c.l.b16 %v6995
  %v7517 = vunpack.c.l.b16 %v6996
  %v7518 = vunpack.c.l.b16 %v6997
  %v7519 = vunpack.c.l.b16 %v6998
  %v7520 = vunpack.c.l.b16 %v6999
  %v7521 = vunpack.c.l.b16 %v7000
  %v7522 = vunpack.c.l.b16 %v7001
  %v7523 = vunpack.c.l.b16 %v7002
  %v7524 = vpack.c.b16 %v7268, %v7267
  %v7525 = vpack.c.b16 %v7270, %v7269
  %v7526 = vpack.c.b16 %v7272, %v7271
  %v7527 = vpack.c.b16 %v7274, %v7273
  %v7528 = vpack.c.b16 %v7276, %v7275
  %v7529 = vpack.c.b16 %v7278, %v7277
  %v7530 = vpack.c.b16 %v7280, %v7279
  %v7531 = vpack.c.b16 %v7282, %v7281
  %v7532 = vpack.c.b16 %v7284, %v7283
  %v7533 = vpack.c.b16 %v7286, %v7285
  %v7534 = vpack.c.b16 %v7288, %v7287
  %v7535 = vpack.c.b16 %v7290, %v7289
  %v7536 = vpack.c.b16 %v7292, %v7291
  %v7537 = vpack.c.b16 %v7294, %v7293
  %v7538 = vpack.c.b16 %v7296, %v7295
  %v7539 = vpack.c.b16 %v7298, %v7297
  %v7540 = vpack.c.b16 %v7300, %v7299
  %v7541 = vpack.c.b16 %v7302, %v7301
  %v7542 = vpack.c.b16 %v7304, %v7303
  %v7543 = vpack.c.b16 %v7306, %v7305
  %v7544 = vpack.c.b16 %v7308, %v7307
  %v7545 = vpack.c.b16 %v7310, %v7309
  %v7546 = vpack.c.b16 %v7312, %v7311
  %v7547 = vpack.c.b16 %v7314, %v7313
  %v7548 = vpack.c.b16 %v7316, %v7315
  %v7549 = vpack.c.b16 %v7318, %v7317
  %v7550 = vpack.c.b16 %v7320, %v7319
  %v7551 = vpack.c.b16 %v7322, %v7321
  %v7552 = vpack.c.b16 %v7324, %v7323
  %v7553 = vpack.c.b16 %v7326, %v7325
  %v7554 = vpack.c.b16 %v7328, %v7327
  %v7555 = vpack.c.b16 %v7330, %v7329
  %v7556 = vpack.c.b16 %v7332, %v7331
  %v7557 = vpack.c.b16 %v7334, %v7333
  %v7558 = vpack.c.b16 %v7336, %v7335
  %v7559 = vpack.c.b16 %v7338, %v7337
  %v7560 = vpack.c.b16 %v7340, %v7339
  %v7561 = vpack.c.b16 %v7342, %v7341
  %v7562 = vpack.c.b16 %v7344, %v7343
  %v7563 = vpack.c.b16 %v7346, %v7345
  %v7564 = vpack.c.b16 %v7348, %v7347
  %v7565 = vpack.c.b16 %v7350, %v7349
  %v7566 = vpack.c.b16 %v7352, %v7351
  %v7567 = vpack.c.b16 %v7354, %v7353
  %v7568 = vpack.c.b16 %v7356, %v7355
  %v7569 = vpack.c.b16 %v7358, %v7357
  %v7570 = vpack.c.b16 %v7360, %v7359
  %v7571 = vpack.c.b16 %v7362, %v7361
  %v7572 = vpack.c.b16 %v7364, %v7363
  %v7573 = vpack.c.b16 %v7366, %v7365
  %v7574 = vpack.c.b16 %v7368, %v7367
  %v7575 = vpack.c.b16 %v7370, %v7369
  %v7576 = vpack.c.b16 %v7372, %v7371
  %v7577 = vpack.c.b16 %v7374, %v7373
  %v7578 = vpack.c.b16 %v7376, %v7375
  %v7579 = vpack.c.b16 %v7378, %v7377
  %v7580 = vpack.c.b16 %v7380, %v7379
  %v7581 = vpack.c.b16 %v7382, %v7381
  %v7582 = vpack.c.b16 %v7384, %v7383
  %v7583 = vpack.c.b16 %v7386, %v7385
  %v7584 = vpack.c.b16 %v7388, %v7387
  %v7585 = vpack.c.b16 %v7390, %v7389
  %v7586 = vpack.c.b16 %v7392, %v7391
  %v7587 = vpack.c.b16 %v7394, %v7393
  %v7588 = vpack.c.b16 %v7396, %v7395
  %v7589 = vpack.c.b16 %v7398, %v7397
  %v7590 = vpack.c.b16 %v7400, %v7399
  %v7591 = vpack.c.b16 %v7402, %v7401
  %v7592 = vpack.c.b16 %v7404, %v7403
  %v7593 = vpack.c.b16 %v7406, %v7405
  %v7594 = vpack.c.b16 %v7408, %v7407
  %v7595 = vpack.c.b16 %v7410, %v7409
  %v7596 = vpack.c.b16 %v7412, %v7411
  %v7597 = vpack.c.b16 %v7414, %v7413
  %v7598 = vpack.c.b16 %v7416, %v7415
  %v7599 = vpack.c.b16 %v7418, %v7417
  %v7600 = vpack.c.b16 %v7420, %v7419
  %v7601 = vpack.c.b16 %v7422, %v7421
  %v7602 = vpack.c.b16 %v7424, %v7423
  %v7603 = vpack.c.b16 %v7426, %v7425
  %v7604 = vpack.c.b16 %v7428, %v7427
  %v7605 = vpack.c.b16 %v7430, %v7429
  %v7606 = vpack.c.b16 %v7432, %v7431
  %v7607 = vpack.c.b16 %v7434, %v7433
  %v7608 = vpack.c.b16 %v7436, %v7435
  %v7609 = vpack.c.b16 %v7438, %v7437
  %v7610 = vpack.c.b16 %v7440, %v7439
  %v7611 = vpack.c.b16 %v7442, %v7441
  %v7612 = vpack.c.b16 %v7444, %v7443
  %v7613 = vpack.c.b16 %v7446, %v7445
  %v7614 = vpack.c.b16 %v7448, %v7447
  %v7615 = vpack.c.b16 %v7450, %v7449
  %v7616 = vpack.c.b16 %v7452, %v7451
  %v7617 = vpack.c.b16 %v7454, %v7453
  %v7618 = vpack.c.b16 %v7456, %v7455
  %v7619 = vpack.c.b16 %v7458, %v7457
  %v7620 = vpack.c.b16 %v7460, %v7459
  %v7621 = vpack.c.b16 %v7462, %v7461
  %v7622 = vpack.c.b16 %v7464, %v7463
  %v7623 = vpack.c.b16 %v7466, %v7465
  %v7624 = vpack.c.b16 %v7468, %v7467
  %v7625 = vpack.c.b16 %v7470, %v7469
  %v7626 = vpack.c.b16 %v7472, %v7471
  %v7627 = vpack.c.b16 %v7474, %v7473
  %v7628 = vpack.c.b16 %v7476, %v7475
  %v7629 = vpack.c.b16 %v7478, %v7477
  %v7630 = vpack.c.b16 %v7480, %v7479
  %v7631 = vpack.c.b16 %v7482, %v7481
  %v7632 = vpack.c.b16 %v7484, %v7483
  %v7633 = vpack.c.b16 %v7486, %v7485
  %v7634 = vpack.c.b16 %v7488, %v7487
  %v7635 = vpack.c.b16 %v7490, %v7489
  %v7636 = vpack.c.b16 %v7492, %v7491
  %v7637 = vpack.c.b16 %v7494, %v7493
  %v7638 = vpack.c.b16 %v7496, %v7495
  %v7639 = vpack.c.b16 %v7498, %v7497
  %v7640 = vpack.c.b16 %v7500, %v7499
  %v7641 = vpack.c.b16 %v7502, %v7501
  %v7642 = vpack.c.b16 %v7504, %v7503
  %v7643 = vpack.c.b16 %v7506, %v7505
  %v7644 = vpack.c.b16 %v7508, %v7507
  %v7645 = vpack.c.b16 %v7510, %v7509
  %v7646 = vpack.c.b16 %v7512, %v7511
  %v7647 = vpack.c.b16 %v7514, %v7513
  %v7648 = vpack.c.b16 %v7516, %v7515
  %v7649 = vpack.c.b16 %v7518, %v7517
  %v7650 = vpack.c.b16 %v7520, %v7519
  %v7651 = vpack.c.b16 %v7522, %v7521
  %v7652 = vpack.c.b16 %v7523, %v7523
  %vm7781 = vcmask 64512
  %v7783 = vsel %vm7781, %v6745, 0
  %vm7785 = vcmask 1043456
  %v7787 = vsel %vm7785, %v7652, 0
  %7789 = vmatprep.subr.bf16.mxu0 0
  %7790 = vmatpush1.bf16.msra.mxu0 %v7531
  %7791 = vmatprep.subr.bf16.mxu0 0
  %7792 = vmatpush1.bf16.msra.mxu0 %v7530
  %7793 = vmatprep.subr.bf16.mxu0 0
  %7794 = vmatpush1.bf16.msra.mxu0 %v7529
  %7795 = vmatprep.subr.bf16.mxu0 0
  %7796 = vmatpush1.bf16.msra.mxu0 %v7528
  %7797 = vmatprep.subr.bf16.mxu0 0
  %7798 = vmatpush1.bf16.msra.mxu0 %v7527
  %7799 = vmatprep.subr.bf16.mxu0 0
  %7800 = vmatpush1.bf16.msra.mxu0 %v7526
  %7801 = vmatprep.subr.bf16.mxu0 0
  %7802 = vmatpush1.bf16.msra.mxu0 %v7525
  %7803 = vmatprep.subr.bf16.mxu0 0
  %7804 = vmatpush1.bf16.msra.mxu0 %v7524
  %7805 = vmatprep.subr.bf16.mxu0 0
  %7806 = vmatpush2.bf16.msra.mxu0 %v7539
  %7807 = vmatprep.subr.bf16.mxu0 0
  %7808 = vmatpush2.bf16.msra.mxu0 %v7538
  %7809 = vmatprep.subr.bf16.mxu0 0
  %7810 = vmatpush2.bf16.msra.mxu0 %v7537
  %7811 = vmatprep.subr.bf16.mxu0 0
  %7812 = vmatpush2.bf16.msra.mxu0 %v7536
  %7813 = vmatprep.subr.bf16.mxu0 0
  %7814 = vmatpush2.bf16.msra.mxu0 %v7535
  %7815 = vmatprep.subr.bf16.mxu0 0
  %7816 = vmatpush2.bf16.msra.mxu0 %v7534
  %7817 = vmatprep.subr.bf16.mxu0 0
  %7818 = vmatpush2.bf16.msra.mxu0 %v7533
  %7819 = vmatprep.subr.bf16.mxu0 0
  %7820 = vmatpush2.bf16.msra.mxu0 %v7532
  %7821 = vmatprep.mubr.bf16.mxu0 %v6730
  %7822 = vmatmul.mubr.bf16.gmra.mxu0 %v6729
  %v7823 = vpop.f32.mrf.mxu0
  %v7824 = vadd.f32 %v7008, %v7823
  %v7825 = vpop.f32.mrf.mxu0
  %v7826 = vpop.f32.mrf.mxu0
  %v7827 = vpop.f32.mrf.mxu0
  %7828 = vdwg.mxu0
  %7829 = vmatprep.subr.bf16.mxu0 0
  %7830 = vmatpush1.bf16.msra.mxu0 %v7547
  %7831 = vmatprep.subr.bf16.mxu0 0
  %7832 = vmatpush1.bf16.msra.mxu0 %v7546
  %7833 = vmatprep.subr.bf16.mxu0 0
  %7834 = vmatpush1.bf16.msra.mxu0 %v7545
  %7835 = vmatprep.subr.bf16.mxu0 0
  %7836 = vmatpush1.bf16.msra.mxu0 %v7544
  %7837 = vmatprep.subr.bf16.mxu0 0
  %7838 = vmatpush1.bf16.msra.mxu0 %v7543
  %7839 = vmatprep.subr.bf16.mxu0 0
  %7840 = vmatpush1.bf16.msra.mxu0 %v7542
  %7841 = vmatprep.subr.bf16.mxu0 0
  %7842 = vmatpush1.bf16.msra.mxu0 %v7541
  %7843 = vmatprep.subr.bf16.mxu0 0
  %7844 = vmatpush1.bf16.msra.mxu0 %v7540
  %7845 = vmatprep.subr.bf16.mxu0 0
  %7846 = vmatpush2.bf16.msra.mxu0 %v7555
  %7847 = vmatprep.subr.bf16.mxu0 0
  %7848 = vmatpush2.bf16.msra.mxu0 %v7554
  %7849 = vmatprep.subr.bf16.mxu0 0
  %7850 = vmatpush2.bf16.msra.mxu0 %v7553
  %7851 = vmatprep.subr.bf16.mxu0 0
  %7852 = vmatpush2.bf16.msra.mxu0 %v7552
  %7853 = vmatprep.subr.bf16.mxu0 0
  %7854 = vmatpush2.bf16.msra.mxu0 %v7551
  %7855 = vmatprep.subr.bf16.mxu0 0
  %7856 = vmatpush2.bf16.msra.mxu0 %v7550
  %7857 = vmatprep.subr.bf16.mxu0 0
  %7858 = vmatpush2.bf16.msra.mxu0 %v7549
  %7859 = vmatprep.subr.bf16.mxu0 0
  %7860 = vmatpush2.bf16.msra.mxu0 %v7548
  %7861 = vmatprep.mubr.bf16.mxu0 %v6732
  %7862 = vmatmul.mubr.bf16.gmra.mxu0 %v6731
  %v7863 = vpop.f32.mrf.mxu0
  %v7864 = vadd.f32 %v7824, %v7863
  %v7865 = vpop.f32.mrf.mxu0
  %v7866 = vpop.f32.mrf.mxu0
  %v7867 = vpop.f32.mrf.mxu0
  %7868 = vdwg.mxu0
  %7869 = vmatprep.subr.bf16.mxu0 0
  %7870 = vmatpush1.bf16.msra.mxu0 %v7563
  %7871 = vmatprep.subr.bf16.mxu0 0
  %7872 = vmatpush1.bf16.msra.mxu0 %v7562
  %7873 = vmatprep.subr.bf16.mxu0 0
  %7874 = vmatpush1.bf16.msra.mxu0 %v7561
  %7875 = vmatprep.subr.bf16.mxu0 0
  %7876 = vmatpush1.bf16.msra.mxu0 %v7560
  %7877 = vmatprep.subr.bf16.mxu0 0
  %7878 = vmatpush1.bf16.msra.mxu0 %v7559
  %7879 = vmatprep.subr.bf16.mxu0 0
  %7880 = vmatpush1.bf16.msra.mxu0 %v7558
  %7881 = vmatprep.subr.bf16.mxu0 0
  %7882 = vmatpush1.bf16.msra.mxu0 %v7557
  %7883 = vmatprep.subr.bf16.mxu0 0
  %7884 = vmatpush1.bf16.msra.mxu0 %v7556
  %7885 = vmatprep.subr.bf16.mxu0 0
  %7886 = vmatpush2.bf16.msra.mxu0 %v7571
  %7887 = vmatprep.subr.bf16.mxu0 0
  %7888 = vmatpush2.bf16.msra.mxu0 %v7570
  %7889 = vmatprep.subr.bf16.mxu0 0
  %7890 = vmatpush2.bf16.msra.mxu0 %v7569
  %7891 = vmatprep.subr.bf16.mxu0 0
  %7892 = vmatpush2.bf16.msra.mxu0 %v7568
  %7893 = vmatprep.subr.bf16.mxu0 0
  %7894 = vmatpush2.bf16.msra.mxu0 %v7567
  %7895 = vmatprep.subr.bf16.mxu0 0
  %7896 = vmatpush2.bf16.msra.mxu0 %v7566
  %7897 = vmatprep.subr.bf16.mxu0 0
  %7898 = vmatpush2.bf16.msra.mxu0 %v7565
  %7899 = vmatprep.subr.bf16.mxu0 0
  %7900 = vmatpush2.bf16.msra.mxu0 %v7564
  %7901 = vmatprep.mubr.bf16.mxu0 %v6734
  %7902 = vmatmul.mubr.bf16.gmra.mxu0 %v6733
  %v7903 = vpop.f32.mrf.mxu0
  %v7904 = vadd.f32 %v7864, %v7903
  %v7905 = vpop.f32.mrf.mxu0
  %v7906 = vpop.f32.mrf.mxu0
  %v7907 = vpop.f32.mrf.mxu0
  %7908 = vdwg.mxu0
  %7909 = vmatprep.subr.bf16.mxu0 0
  %7910 = vmatpush1.bf16.msra.mxu0 %v7579
  %7911 = vmatprep.subr.bf16.mxu0 0
  %7912 = vmatpush1.bf16.msra.mxu0 %v7578
  %7913 = vmatprep.subr.bf16.mxu0 0
  %7914 = vmatpush1.bf16.msra.mxu0 %v7577
  %7915 = vmatprep.subr.bf16.mxu0 0
  %7916 = vmatpush1.bf16.msra.mxu0 %v7576
  %7917 = vmatprep.subr.bf16.mxu0 0
  %7918 = vmatpush1.bf16.msra.mxu0 %v7575
  %7919 = vmatprep.subr.bf16.mxu0 0
  %7920 = vmatpush1.bf16.msra.mxu0 %v7574
  %7921 = vmatprep.subr.bf16.mxu0 0
  %7922 = vmatpush1.bf16.msra.mxu0 %v7573
  %7923 = vmatprep.subr.bf16.mxu0 0
  %7924 = vmatpush1.bf16.msra.mxu0 %v7572
  %7925 = vmatprep.subr.bf16.mxu0 0
  %7926 = vmatpush2.bf16.msra.mxu0 %v7587
  %7927 = vmatprep.subr.bf16.mxu0 0
  %7928 = vmatpush2.bf16.msra.mxu0 %v7586
  %7929 = vmatprep.subr.bf16.mxu0 0
  %7930 = vmatpush2.bf16.msra.mxu0 %v7585
  %7931 = vmatprep.subr.bf16.mxu0 0
  %7932 = vmatpush2.bf16.msra.mxu0 %v7584
  %7933 = vmatprep.subr.bf16.mxu0 0
  %7934 = vmatpush2.bf16.msra.mxu0 %v7583
  %7935 = vmatprep.subr.bf16.mxu0 0
  %7936 = vmatpush2.bf16.msra.mxu0 %v7582
  %7937 = vmatprep.subr.bf16.mxu0 0
  %7938 = vmatpush2.bf16.msra.mxu0 %v7581
  %7939 = vmatprep.subr.bf16.mxu0 0
  %7940 = vmatpush2.bf16.msra.mxu0 %v7580
  %7941 = vmatprep.mubr.bf16.mxu0 %v6736
  %7942 = vmatmul.mubr.bf16.gmra.mxu0 %v6735
  %v7943 = vpop.f32.mrf.mxu0
  %v7944 = vadd.f32 %v7904, %v7943
  %v7945 = vpop.f32.mrf.mxu0
  %v7946 = vpop.f32.mrf.mxu0
  %v7947 = vpop.f32.mrf.mxu0
  %7948 = vdwg.mxu0
  %7949 = vmatprep.subr.bf16.mxu0 0
  %7950 = vmatpush1.bf16.msra.mxu0 %v7595
  %7951 = vmatprep.subr.bf16.mxu0 0
  %7952 = vmatpush1.bf16.msra.mxu0 %v7594
  %7953 = vmatprep.subr.bf16.mxu0 0
  %7954 = vmatpush1.bf16.msra.mxu0 %v7593
  %7955 = vmatprep.subr.bf16.mxu0 0
  %7956 = vmatpush1.bf16.msra.mxu0 %v7592
  %7957 = vmatprep.subr.bf16.mxu0 0
  %7958 = vmatpush1.bf16.msra.mxu0 %v7591
  %7959 = vmatprep.subr.bf16.mxu0 0
  %7960 = vmatpush1.bf16.msra.mxu0 %v7590
  %7961 = vmatprep.subr.bf16.mxu0 0
  %7962 = vmatpush1.bf16.msra.mxu0 %v7589
  %7963 = vmatprep.subr.bf16.mxu0 0
  %7964 = vmatpush1.bf16.msra.mxu0 %v7588
  %7965 = vmatprep.subr.bf16.mxu0 0
  %7966 = vmatpush2.bf16.msra.mxu0 %v7603
  %7967 = vmatprep.subr.bf16.mxu0 0
  %7968 = vmatpush2.bf16.msra.mxu0 %v7602
  %7969 = vmatprep.subr.bf16.mxu0 0
  %7970 = vmatpush2.bf16.msra.mxu0 %v7601
  %7971 = vmatprep.subr.bf16.mxu0 0
  %7972 = vmatpush2.bf16.msra.mxu0 %v7600
  %7973 = vmatprep.subr.bf16.mxu0 0
  %7974 = vmatpush2.bf16.msra.mxu0 %v7599
  %7975 = vmatprep.subr.bf16.mxu0 0
  %7976 = vmatpush2.bf16.msra.mxu0 %v7598
  %7977 = vmatprep.subr.bf16.mxu0 0
  %7978 = vmatpush2.bf16.msra.mxu0 %v7597
  %7979 = vmatprep.subr.bf16.mxu0 0
  %7980 = vmatpush2.bf16.msra.mxu0 %v7596
  %7981 = vmatprep.mubr.bf16.mxu0 %v6738
  %7982 = vmatmul.mubr.bf16.gmra.mxu0 %v6737
  %v7983 = vpop.f32.mrf.mxu0
  %v7984 = vadd.f32 %v7944, %v7983
  %v7985 = vpop.f32.mrf.mxu0
  %v7986 = vpop.f32.mrf.mxu0
  %v7987 = vpop.f32.mrf.mxu0
  %7988 = vdwg.mxu0
  %7989 = vmatprep.subr.bf16.mxu0 0
  %7990 = vmatpush1.bf16.msra.mxu0 %v7611
  %7991 = vmatprep.subr.bf16.mxu0 0
  %7992 = vmatpush1.bf16.msra.mxu0 %v7610
  %7993 = vmatprep.subr.bf16.mxu0 0
  %7994 = vmatpush1.bf16.msra.mxu0 %v7609
  %7995 = vmatprep.subr.bf16.mxu0 0
  %7996 = vmatpush1.bf16.msra.mxu0 %v7608
  %7997 = vmatprep.subr.bf16.mxu0 0
  %7998 = vmatpush1.bf16.msra.mxu0 %v7607
  %7999 = vmatprep.subr.bf16.mxu0 0
  %8000 = vmatpush1.bf16.msra.mxu0 %v7606
  %8001 = vmatprep.subr.bf16.mxu0 0
  %8002 = vmatpush1.bf16.msra.mxu0 %v7605
  %8003 = vmatprep.subr.bf16.mxu0 0
  %8004 = vmatpush1.bf16.msra.mxu0 %v7604
  %8005 = vmatprep.subr.bf16.mxu0 0
  %8006 = vmatpush2.bf16.msra.mxu0 %v7619
  %8007 = vmatprep.subr.bf16.mxu0 0
  %8008 = vmatpush2.bf16.msra.mxu0 %v7618
  %8009 = vmatprep.subr.bf16.mxu0 0
  %8010 = vmatpush2.bf16.msra.mxu0 %v7617
  %8011 = vmatprep.subr.bf16.mxu0 0
  %8012 = vmatpush2.bf16.msra.mxu0 %v7616
  %8013 = vmatprep.subr.bf16.mxu0 0
  %8014 = vmatpush2.bf16.msra.mxu0 %v7615
  %8015 = vmatprep.subr.bf16.mxu0 0
  %8016 = vmatpush2.bf16.msra.mxu0 %v7614
  %8017 = vmatprep.subr.bf16.mxu0 0
  %8018 = vmatpush2.bf16.msra.mxu0 %v7613
  %8019 = vmatprep.subr.bf16.mxu0 0
  %8020 = vmatpush2.bf16.msra.mxu0 %v7612
  %8021 = vmatprep.mubr.bf16.mxu0 %v6740
  %8022 = vmatmul.mubr.bf16.gmra.mxu0 %v6739
  %v8023 = vpop.f32.mrf.mxu0
  %v8024 = vadd.f32 %v7984, %v8023
  %v8025 = vpop.f32.mrf.mxu0
  %v8026 = vpop.f32.mrf.mxu0
  %v8027 = vpop.f32.mrf.mxu0
  %8028 = vdwg.mxu0
  %8029 = vmatprep.subr.bf16.mxu0 0
  %8030 = vmatpush1.bf16.msra.mxu0 %v7627
  %8031 = vmatprep.subr.bf16.mxu0 0
  %8032 = vmatpush1.bf16.msra.mxu0 %v7626
  %8033 = vmatprep.subr.bf16.mxu0 0
  %8034 = vmatpush1.bf16.msra.mxu0 %v7625
  %8035 = vmatprep.subr.bf16.mxu0 0
  %8036 = vmatpush1.bf16.msra.mxu0 %v7624
  %8037 = vmatprep.subr.bf16.mxu0 0
  %8038 = vmatpush1.bf16.msra.mxu0 %v7623
  %8039 = vmatprep.subr.bf16.mxu0 0
  %8040 = vmatpush1.bf16.msra.mxu0 %v7622
  %8041 = vmatprep.subr.bf16.mxu0 0
  %8042 = vmatpush1.bf16.msra.mxu0 %v7621
  %8043 = vmatprep.subr.bf16.mxu0 0
  %8044 = vmatpush1.bf16.msra.mxu0 %v7620
  %8045 = vmatprep.subr.bf16.mxu0 0
  %8046 = vmatpush2.bf16.msra.mxu0 %v7635
  %8047 = vmatprep.subr.bf16.mxu0 0
  %8048 = vmatpush2.bf16.msra.mxu0 %v7634
  %8049 = vmatprep.subr.bf16.mxu0 0
  %8050 = vmatpush2.bf16.msra.mxu0 %v7633
  %8051 = vmatprep.subr.bf16.mxu0 0
  %8052 = vmatpush2.bf16.msra.mxu0 %v7632
  %8053 = vmatprep.subr.bf16.mxu0 0
  %8054 = vmatpush2.bf16.msra.mxu0 %v7631
  %8055 = vmatprep.subr.bf16.mxu0 0
  %8056 = vmatpush2.bf16.msra.mxu0 %v7630
  %8057 = vmatprep.subr.bf16.mxu0 0
  %8058 = vmatpush2.bf16.msra.mxu0 %v7629
  %8059 = vmatprep.subr.bf16.mxu0 0
  %8060 = vmatpush2.bf16.msra.mxu0 %v7628
  %8061 = vmatprep.mubr.bf16.mxu0 %v6742
  %8062 = vmatmul.mubr.bf16.gmra.mxu0 %v6741
  %v8063 = vpop.f32.mrf.mxu0
  %v8064 = vadd.f32 %v8024, %v8063
  %v8065 = vpop.f32.mrf.mxu0
  %v8066 = vpop.f32.mrf.mxu0
  %v8067 = vpop.f32.mrf.mxu0
  %8068 = vdwg.mxu0
  %8069 = vmatprep.subr.bf16.mxu0 0
  %8070 = vmatpush1.bf16.msra.mxu0 %v7643
  %8071 = vmatprep.subr.bf16.mxu0 0
  %8072 = vmatpush1.bf16.msra.mxu0 %v7642
  %8073 = vmatprep.subr.bf16.mxu0 0
  %8074 = vmatpush1.bf16.msra.mxu0 %v7641
  %8075 = vmatprep.subr.bf16.mxu0 0
  %8076 = vmatpush1.bf16.msra.mxu0 %v7640
  %8077 = vmatprep.subr.bf16.mxu0 0
  %8078 = vmatpush1.bf16.msra.mxu0 %v7639
  %8079 = vmatprep.subr.bf16.mxu0 0
  %8080 = vmatpush1.bf16.msra.mxu0 %v7638
  %8081 = vmatprep.subr.bf16.mxu0 0
  %8082 = vmatpush1.bf16.msra.mxu0 %v7637
  %8083 = vmatprep.subr.bf16.mxu0 0
  %8084 = vmatpush1.bf16.msra.mxu0 %v7636
  %8085 = vmatprep.subr.bf16.mxu0 0
  %8086 = vmatpush2.bf16.msra.mxu0 %v7651
  %8087 = vmatprep.subr.bf16.mxu0 0
  %8088 = vmatpush2.bf16.msra.mxu0 %v7650
  %8089 = vmatprep.subr.bf16.mxu0 0
  %8090 = vmatpush2.bf16.msra.mxu0 %v7649
  %8091 = vmatprep.subr.bf16.mxu0 0
  %8092 = vmatpush2.bf16.msra.mxu0 %v7648
  %8093 = vmatprep.subr.bf16.mxu0 0
  %8094 = vmatpush2.bf16.msra.mxu0 %v7647
  %8095 = vmatprep.subr.bf16.mxu0 0
  %8096 = vmatpush2.bf16.msra.mxu0 %v7646
  %8097 = vmatprep.subr.bf16.mxu0 0
  %8098 = vmatpush2.bf16.msra.mxu0 %v7645
  %8099 = vmatprep.subr.bf16.mxu0 0
  %8100 = vmatpush2.bf16.msra.mxu0 %v7644
  %8101 = vmatprep.mubr.bf16.mxu0 %v6744
  %8102 = vmatmul.mubr.bf16.gmra.mxu0 %v6743
  %v8103 = vpop.f32.mrf.mxu0
  %v8104 = vadd.f32 %v8064, %v8103
  %v8105 = vpop.f32.mrf.mxu0
  %v8106 = vpop.f32.mrf.mxu0
  %v8107 = vpop.f32.mrf.mxu0
  %8108 = vdwg.mxu0
  %8109 = vmatprep.subr.bf16.mxu0 0
  %8110 = vmatpush1.bf16.msra.mxu0 0
  %8111 = vmatprep.subr.bf16.mxu0 0
  %8112 = vmatpush1.bf16.msra.mxu0 0
  %8113 = vmatprep.subr.bf16.mxu0 0
  %8114 = vmatpush1.bf16.msra.mxu0 0
  %8115 = vmatprep.subr.bf16.mxu0 0
  %8116 = vmatpush1.bf16.msra.mxu0 0
  %8117 = vmatprep.subr.bf16.mxu0 0
  %8118 = vmatpush1.bf16.msra.mxu0 0
  %8119 = vmatprep.subr.bf16.mxu0 0
  %8120 = vmatpush1.bf16.msra.mxu0 0
  %8121 = vmatprep.subr.bf16.mxu0 0
  %8122 = vmatpush1.bf16.msra.mxu0 0
  %8123 = vmatprep.subr.bf16.mxu0 0
  %8124 = vmatpush1.bf16.msra.mxu0 %v7787
  %8125 = vmatprep.subr.bf16.mxu0 0
  %8126 = vmatpush2.bf16.msra.mxu0 0
  %8127 = vmatprep.subr.bf16.mxu0 0
  %8128 = vmatpush2.bf16.msra.mxu0 0
  %8129 = vmatprep.subr.bf16.mxu0 0
  %8130 = vmatpush2.bf16.msra.mxu0 0
  %8131 = vmatprep.subr.bf16.mxu0 0
  %8132 = vmatpush2.bf16.msra.mxu0 0
  %8133 = vmatprep.subr.bf16.mxu0 0
  %8134 = vmatpush2.bf16.msra.mxu0 0
  %8135 = vmatprep.subr.bf16.mxu0 0
  %8136 = vmatpush2.bf16.msra.mxu0 0
  %8137 = vmatprep.subr.bf16.mxu0 0
  %8138 = vmatpush2.bf16.msra.mxu0 0
  %8139 = vmatprep.subr.bf16.mxu0 0
  %8140 = vmatpush2.bf16.msra.mxu0 0
  %8141 = vmatprep.mubr.bf16.mxu0 0
  %8142 = vmatmul.mubr.bf16.gmra.mxu0 %v7783
  %v8143 = vpop.f32.mrf.mxu0
  %v8144 = vadd.f32 %v8104, %v8143
  %v8145 = vpop.f32.mrf.mxu0
  %v8146 = vpop.f32.mrf.mxu0
  %v8147 = vpop.f32.mrf.mxu0
  %8148 = vdwg.mxu0
  %8149 = vst [vmem:[%s5] sm:$0xff] %v8144
  // Predicated region
  $region22: #{mlp_forward.1} parent=0 // pred_check
    _
  $region23: #{mlp_forward.1} parent=0 // pred_check_branch
    %8151 = sbr.rel (0) target = $region25
  $region24: #{mlp_forward.1} parent=0 // pred_region
    _
  $region25: #{mlp_forward.1} parent=0 // pred_fallthru
    _
  // Predicated region
  $region26: #{mlp_forward.1} parent=0 // pred_check
    _
  $region27: #{mlp_forward.1} parent=0 // pred_check_branch
    %8153 = sbr.rel (0) target = $region29
  $region28: #{mlp_forward.1} parent=0 // pred_region
    _
  $region29: #{mlp_forward.1} parent=0 // pred_fallthru
    _

</llo_original>
